<compile_context>
chip_gen: v7x
topology: tpu7x:2x2x1
jax: 0.10.0
libtpu: 0.0.40
codegen_flags: <defaults>
</compile_context>

<pallas_src>
import functools

import jax
import jax.numpy as jnp
from jax.experimental import pallas as pl
from jax.experimental.pallas import tpu as pltpu


NEG_SLOPE = 0.01  # PyTorch nn.LeakyReLU default negative_slope


def _full_spec(shape):
    """Full-array VMEM block for a grid of size (1,)."""
    nd = len(shape)
    return pl.BlockSpec(shape, lambda *_: (0,) * nd)


# ----------------------------------------------------------------------------
# Fully fused Generator forward kernel.
# ----------------------------------------------------------------------------
def _generator_kernel(labels_ref, semt_ref, x_ref, eps_ref,
                      w1x_ref, w1v_ref, b1_ref,
                      w2_ref, b2_ref,
                      w2122_ref, b2122_ref,
                      w3z_ref, w3v_ref, b3_ref,
                      w4_ref, b4_ref,
                      recon_ref, mu_ref, logvar_ref,
                      *, z_dim):
    f32 = jnp.float32
    cdt = w1x_ref.dtype  # bf16 compute dtype for MXU operands

    # vec = labels @ semantics.T  (tiny K=num_classes contraction, folded in)
    vec = jnp.dot(labels_ref[...], semt_ref[...], preferred_element_type=f32)
    vec_c = vec.astype(cdt)

    # ---- encode -------------------------------------------------------------
    # fc1[0] on concat([x, vec]):  x @ W1[:Dx] + vec @ W1[Dx:] + b1, LeakyReLU
    h0 = jnp.dot(x_ref[...], w1x_ref[...], preferred_element_type=f32)
    h0 = h0 + jnp.dot(vec_c, w1v_ref[...], preferred_element_type=f32)
    h0 = h0 + b1_ref[...]
    h0 = jnp.where(h0 >= 0.0, h0, NEG_SLOPE * h0)

    # fc1[2], then F.relu from encode()
    h1 = jnp.dot(h0.astype(cdt), w2_ref[...], preferred_element_type=f32)
    h1 = jnp.maximum(h1 + b2_ref[...], 0.0)

    # fc21 / fc22 fused along N:  [mu | logvar] = h1 @ [W21 | W22] + [b21 | b22]
    ml = jnp.dot(h1.astype(cdt), w2122_ref[...], preferred_element_type=f32)
    ml = ml + b2122_ref[...]
    mu = ml[:, :z_dim]
    logvar = ml[:, z_dim:]
    mu_ref[...] = mu
    logvar_ref[...] = logvar

    # ---- reparameterize (fused epilogue) ------------------------------------
    z = mu + eps_ref[...] * jnp.exp(0.5 * logvar)

    # ---- decode -------------------------------------------------------------
    # fc3[0] on concat([z, vec]):  z @ W3[:Z] + vec @ W3[Z:] + b3, LeakyReLU
    h2 = jnp.dot(z.astype(cdt), w3z_ref[...], preferred_element_type=f32)
    h2 = h2 + jnp.dot(vec_c, w3v_ref[...], preferred_element_type=f32)
    h2 = h2 + b3_ref[...]
    h2 = jnp.where(h2 >= 0.0, h2, NEG_SLOPE * h2)

    # fc3[2] + ReLU
    recon = jnp.dot(h2.astype(cdt), w4_ref[...], preferred_element_type=f32)
    recon_ref[...] = jnp.maximum(recon + b4_ref[...], 0.0)


# ----------------------------------------------------------------------------
# Wrapper: single pallas_call, everything resident in VMEM.
# ----------------------------------------------------------------------------
def generator_forward(prep, x, labels, semantics, eps):
    B = x.shape[0]
    z_dim = eps.shape[1]
    hidden = prep["b1"].shape[1]
    cdt = prep["w1x"].dtype

    sem_t = jnp.transpose(semantics).astype(jnp.float32)  # (num_classes, z_dim)

    inputs = (
        labels.astype(jnp.float32), sem_t, x.astype(cdt), eps.astype(jnp.float32),
        prep["w1x"], prep["w1v"], prep["b1"],
        prep["w2"], prep["b2"],
        prep["w2122"], prep["b2122"],
        prep["w3z"], prep["w3v"], prep["b3"],
        prep["w4"], prep["b4"],
    )

    out_shapes = (
        jax.ShapeDtypeStruct((B, hidden), jnp.float32),   # recon
        jax.ShapeDtypeStruct((B, z_dim), jnp.float32),    # mu
        jax.ShapeDtypeStruct((B, z_dim), jnp.float32),    # logvar
    )

    kernel = functools.partial(_generator_kernel, z_dim=z_dim)

    recon, mu, logvar = pl.pallas_call(
        kernel,
        out_shape=out_shapes,
        grid=(1,),
        in_specs=[_full_spec(a.shape) for a in inputs],
        out_specs=[_full_spec(s.shape) for s in out_shapes],
        compiler_params=pltpu.CompilerParams(
            dimension_semantics=("arbitrary",)),
    )(*inputs)
    return recon, mu, logvar


# ----------------------------------------------------------------------------
# Parameters: PyTorch (out, in) -> stored (in, out); prepared (split / fused /
# bf16-cast) for the fused kernel.
# ----------------------------------------------------------------------------
def init_params(key, d_x, z_dim, hidden):
    def lin(k, n_in, n_out, scale=0.02):
        kw, kb = jax.random.split(k)
        w = jax.random.normal(kw, (n_in, n_out), jnp.float32) * scale
        b = jax.random.normal(kb, (n_out,), jnp.float32) * scale
        return w, b

    keys = jax.random.split(key, 6)
    p = {}
    p["w1"], p["b1"] = lin(keys[0], d_x + z_dim, hidden)      # fc1[0]
    p["w2"], p["b2"] = lin(keys[1], hidden, hidden)           # fc1[2]
    p["w21"], p["b21"] = lin(keys[2], hidden, z_dim)          # fc21
    p["w22"], p["b22"] = lin(keys[3], hidden, z_dim)          # fc22
    p["w3"], p["b3"] = lin(keys[4], z_dim + z_dim, hidden)    # fc3[0]
    p["w4"], p["b4"] = lin(keys[5], hidden, hidden)           # fc3[2]
    return p


def prepare_params(params, d_x, z_dim, compute_dtype=jnp.bfloat16):
    wc = lambda w: w.astype(compute_dtype)
    bc = lambda b: b.reshape(1, -1).astype(jnp.float32)
    return {
        "w1x": wc(params["w1"][:d_x]),        # rows of W1 hitting x
        "w1v": wc(params["w1"][d_x:]),        # rows of W1 hitting vec
        "b1": bc(params["b1"]),
        "w2": wc(params["w2"]), "b2": bc(params["b2"]),
        "w2122": wc(jnp.concatenate([params["w21"], params["w22"]], axis=1)),
        "b2122": bc(jnp.concatenate([params["b21"], params["b22"]], axis=0)),
        "w3z": wc(params["w3"][:z_dim]),      # rows of W3 hitting z
        "w3v": wc(params["w3"][z_dim:]),      # rows of W3 hitting vec
        "b3": bc(params["b3"]),
        "w4": wc(params["w4"]), "b4": bc(params["b4"]),
    }


# ----------------------------------------------------------------------------
# Pure-JAX reference (mirrors the kernel's bf16-operand / f32-accumulate math)
# ----------------------------------------------------------------------------
def reference_forward(prep, x, labels, semantics, eps, z_dim):
    f32 = jnp.float32
    cdt = prep["w1x"].dtype
    dot = lambda a, b: jnp.dot(a, b, preferred_element_type=f32)

    sem_t = jnp.transpose(semantics).astype(f32)
    vec = dot(labels.astype(f32), sem_t)
    vec_c = vec.astype(cdt)

    h0 = dot(x.astype(cdt), prep["w1x"]) + dot(vec_c, prep["w1v"]) + prep["b1"]
    h0 = jnp.where(h0 >= 0.0, h0, NEG_SLOPE * h0)
    h1 = jnp.maximum(dot(h0.astype(cdt), prep["w2"]) + prep["b2"], 0.0)
    ml = dot(h1.astype(cdt), prep["w2122"]) + prep["b2122"]
    mu, logvar = ml[:, :z_dim], ml[:, z_dim:]
    z = mu + eps.astype(f32) * jnp.exp(0.5 * logvar)
    h2 = dot(z.astype(cdt), prep["w3z"]) + dot(vec_c, prep["w3v"]) + prep["b3"]
    h2 = jnp.where(h2 >= 0.0, h2, NEG_SLOPE * h2)
    recon = jnp.maximum(dot(h2.astype(cdt), prep["w4"]) + prep["b4"], 0.0)
    return recon, mu, logvar


if __name__ == "__main__":
    # Small, TPU-lane-friendly shapes consistent with the module structure.
    B = 8            # batch
    D_X = 512        # stands in for the 4096-dim visual features
    Z_DIM = 128      # stands in for z_dim = 300 (padded to lane multiple)
    HIDDEN = 512     # stands in for 4096 hidden
    NUM_CLASSES = 16

    root = jax.random.PRNGKey(0)
    k_par, k_x, k_lab, k_sem, k_eps = jax.random.split(root, 5)

    params = init_params(k_par, D_X, Z_DIM, HIDDEN)
    prep = prepare_params(params, D_X, Z_DIM)

    x = jax.random.normal(k_x, (B, D_X), jnp.float32)
    labels = jax.random.normal(k_lab, (B, NUM_CLASSES), jnp.float32)
    semantics = jax.random.normal(k_sem, (Z_DIM, NUM_CLASSES), jnp.float32)
    # torch.randn_like(std) inside reparameterize -> explicit eps input here.
    eps = jax.random.normal(k_eps, (B, Z_DIM), jnp.float32)

    fwd = jax.jit(generator_forward)
    recon, mu, logvar = fwd(prep, x, labels, semantics, eps)
    jax.block_until_ready((recon, mu, logvar))

    assert recon.shape == (B, HIDDEN)
    assert mu.shape == (B, Z_DIM)
    assert logvar.shape == (B, Z_DIM)

    # Correctness check against a pure-JAX reference of the same math.
    r_ref, m_ref, lv_ref = reference_forward(prep, x, labels, semantics, eps, Z_DIM)
    assert bool(jnp.allclose(recon, r_ref, rtol=2e-2, atol=2e-2))
    assert bool(jnp.allclose(mu, m_ref, rtol=2e-2, atol=2e-2))
    assert bool(jnp.allclose(logvar, lv_ref, rtol=2e-2, atol=2e-2))

    print("KERNEL_OK")
</pallas_src>

<mosaic_0001>
module attributes {stable_mosaic.version = 11 : i64} {
  func.func @_generator_kernel(%arg0: i32, %arg1: memref<8x16xf32, #tpu.memory_space<vmem>>, %arg2: memref<16x128xf32, #tpu.memory_space<vmem>>, %arg3: memref<8x512xbf16, #tpu.memory_space<vmem>>, %arg4: memref<8x128xf32, #tpu.memory_space<vmem>>, %arg5: memref<512x512xbf16, #tpu.memory_space<vmem>>, %arg6: memref<128x512xbf16, #tpu.memory_space<vmem>>, %arg7: memref<1x512xf32, #tpu.memory_space<vmem>>, %arg8: memref<512x512xbf16, #tpu.memory_space<vmem>>, %arg9: memref<1x512xf32, #tpu.memory_space<vmem>>, %arg10: memref<512x256xbf16, #tpu.memory_space<vmem>>, %arg11: memref<1x256xf32, #tpu.memory_space<vmem>>, %arg12: memref<128x512xbf16, #tpu.memory_space<vmem>>, %arg13: memref<128x512xbf16, #tpu.memory_space<vmem>>, %arg14: memref<1x512xf32, #tpu.memory_space<vmem>>, %arg15: memref<512x512xbf16, #tpu.memory_space<vmem>>, %arg16: memref<1x512xf32, #tpu.memory_space<vmem>>, %arg17: memref<8x512xf32, #tpu.memory_space<vmem>>, %arg18: memref<8x128xf32, #tpu.memory_space<vmem>>, %arg19: memref<8x128xf32, #tpu.memory_space<vmem>>) attributes {dimension_semantics = [#tpu.dimension_semantics<arbitrary>], iteration_bounds = array<i64: 1>, scalar_prefetch = 0 : i64, scratch_operands = 0 : i64, tpu.core_type = #tpu.core_type<tc>, window_params = [{pipeline_mode = #tpu.pipeline_mode<synchronous>, transform_indices = @transform_0, window_bounds = array<i64: 8, 16>}, {pipeline_mode = #tpu.pipeline_mode<synchronous>, transform_indices = @transform_1, window_bounds = array<i64: 16, 128>}, {pipeline_mode = #tpu.pipeline_mode<synchronous>, transform_indices = @transform_2, window_bounds = array<i64: 8, 512>}, {pipeline_mode = #tpu.pipeline_mode<synchronous>, transform_indices = @transform_3, window_bounds = array<i64: 8, 128>}, {pipeline_mode = #tpu.pipeline_mode<synchronous>, transform_indices = @transform_4, window_bounds = array<i64: 512, 512>}, {pipeline_mode = #tpu.pipeline_mode<synchronous>, transform_indices = @transform_5, window_bounds = array<i64: 128, 512>}, {pipeline_mode = #tpu.pipeline_mode<synchronous>, transform_indices = @transform_6, window_bounds = array<i64: 1, 512>}, {pipeline_mode = #tpu.pipeline_mode<synchronous>, transform_indices = @transform_7, window_bounds = array<i64: 512, 512>}, {pipeline_mode = #tpu.pipeline_mode<synchronous>, transform_indices = @transform_8, window_bounds = array<i64: 1, 512>}, {pipeline_mode = #tpu.pipeline_mode<synchronous>, transform_indices = @transform_9, window_bounds = array<i64: 512, 256>}, {pipeline_mode = #tpu.pipeline_mode<synchronous>, transform_indices = @transform_10, window_bounds = array<i64: 1, 256>}, {pipeline_mode = #tpu.pipeline_mode<synchronous>, transform_indices = @transform_11, window_bounds = array<i64: 128, 512>}, {pipeline_mode = #tpu.pipeline_mode<synchronous>, transform_indices = @transform_12, window_bounds = array<i64: 128, 512>}, {pipeline_mode = #tpu.pipeline_mode<synchronous>, transform_indices = @transform_13, window_bounds = array<i64: 1, 512>}, {pipeline_mode = #tpu.pipeline_mode<synchronous>, transform_indices = @transform_14, window_bounds = array<i64: 512, 512>}, {pipeline_mode = #tpu.pipeline_mode<synchronous>, transform_indices = @transform_15, window_bounds = array<i64: 1, 512>}, {pipeline_mode = #tpu.pipeline_mode<synchronous>, transform_indices = @transform_16, window_bounds = array<i64: 8, 512>}, {pipeline_mode = #tpu.pipeline_mode<synchronous>, transform_indices = @transform_17, window_bounds = array<i64: 8, 128>}, {pipeline_mode = #tpu.pipeline_mode<synchronous>, transform_indices = @transform_18, window_bounds = array<i64: 8, 128>}]} {
    %c0 = arith.constant 0 : index
    %c0_0 = arith.constant 0 : index
    %0 = vector.load %arg1[%c0, %c0_0] : memref<8x16xf32, #tpu.memory_space<vmem>>, vector<8x16xf32>
    %c0_1 = arith.constant 0 : index
    %c0_2 = arith.constant 0 : index
    %1 = vector.load %arg2[%c0_1, %c0_2] : memref<16x128xf32, #tpu.memory_space<vmem>>, vector<16x128xf32>
    %cst = arith.constant dense<0.000000e+00> : vector<8x128xf32>
    %2 = tpu.matmul %0, %1, %cst {dimension_numbers = #tpu.dot_dimension_numbers<[1], [0], [0], [1], [0, 0, 1, 1], [], []>} : vector<8x16xf32>, vector<16x128xf32>, vector<8x128xf32> -> vector<8x128xf32>
    %3 = arith.truncf %2 : vector<8x128xf32> to vector<8x128xbf16>
    %c0_3 = arith.constant 0 : index
    %c0_4 = arith.constant 0 : index
    %4 = vector.load %arg3[%c0_3, %c0_4] : memref<8x512xbf16, #tpu.memory_space<vmem>>, vector<8x512xbf16>
    %c0_5 = arith.constant 0 : index
    %c0_6 = arith.constant 0 : index
    %5 = vector.load %arg5[%c0_5, %c0_6] : memref<512x512xbf16, #tpu.memory_space<vmem>>, vector<512x512xbf16>
    %cst_7 = arith.constant dense<0.000000e+00> : vector<8x512xf32>
    %6 = tpu.matmul %4, %5, %cst_7 {dimension_numbers = #tpu.dot_dimension_numbers<[1], [0], [0], [1], [0, 0, 1, 1], [], []>} : vector<8x512xbf16>, vector<512x512xbf16>, vector<8x512xf32> -> vector<8x512xf32>
    %c0_8 = arith.constant 0 : index
    %c0_9 = arith.constant 0 : index
    %7 = vector.load %arg6[%c0_8, %c0_9] : memref<128x512xbf16, #tpu.memory_space<vmem>>, vector<128x512xbf16>
    %cst_10 = arith.constant dense<0.000000e+00> : vector<8x512xf32>
    %8 = tpu.matmul %3, %7, %cst_10 {dimension_numbers = #tpu.dot_dimension_numbers<[1], [0], [0], [1], [0, 0, 1, 1], [], []>} : vector<8x128xbf16>, vector<128x512xbf16>, vector<8x512xf32> -> vector<8x512xf32>
    %9 = arith.addf %6, %8 : vector<8x512xf32>
    %c0_11 = arith.constant 0 : index
    %c0_12 = arith.constant 0 : index
    %10 = vector.load %arg7[%c0_11, %c0_12] : memref<1x512xf32, #tpu.memory_space<vmem>>, vector<1x512xf32>
    %11 = vector.broadcast %10 : vector<1x512xf32> to vector<8x512xf32>
    %12 = arith.addf %9, %11 : vector<8x512xf32>
    %cst_13 = arith.constant 0.000000e+00 : f32
    %13 = vector.broadcast %cst_13 : f32 to vector<8x512xf32>
    %14 = arith.cmpf oge, %12, %13 : vector<8x512xf32>
    %cst_14 = arith.constant 0.00999999977 : f32
    %15 = vector.broadcast %cst_14 : f32 to vector<8x512xf32>
    %16 = arith.mulf %15, %12 : vector<8x512xf32>
    %17 = arith.select %14, %12, %16 : vector<8x512xi1>, vector<8x512xf32>
    %18 = arith.truncf %17 : vector<8x512xf32> to vector<8x512xbf16>
    %c0_15 = arith.constant 0 : index
    %c0_16 = arith.constant 0 : index
    %19 = vector.load %arg8[%c0_15, %c0_16] : memref<512x512xbf16, #tpu.memory_space<vmem>>, vector<512x512xbf16>
    %cst_17 = arith.constant dense<0.000000e+00> : vector<8x512xf32>
    %20 = tpu.matmul %18, %19, %cst_17 {dimension_numbers = #tpu.dot_dimension_numbers<[1], [0], [0], [1], [0, 0, 1, 1], [], []>} : vector<8x512xbf16>, vector<512x512xbf16>, vector<8x512xf32> -> vector<8x512xf32>
    %c0_18 = arith.constant 0 : index
    %c0_19 = arith.constant 0 : index
    %21 = vector.load %arg9[%c0_18, %c0_19] : memref<1x512xf32, #tpu.memory_space<vmem>>, vector<1x512xf32>
    %22 = vector.broadcast %21 : vector<1x512xf32> to vector<8x512xf32>
    %23 = arith.addf %20, %22 : vector<8x512xf32>
    %cst_20 = arith.constant 0.000000e+00 : f32
    %24 = vector.broadcast %cst_20 : f32 to vector<8x512xf32>
    %25 = arith.maximumf %23, %24 : vector<8x512xf32>
    %26 = arith.truncf %25 : vector<8x512xf32> to vector<8x512xbf16>
    %c0_21 = arith.constant 0 : index
    %c0_22 = arith.constant 0 : index
    %27 = vector.load %arg10[%c0_21, %c0_22] : memref<512x256xbf16, #tpu.memory_space<vmem>>, vector<512x256xbf16>
    %cst_23 = arith.constant dense<0.000000e+00> : vector<8x256xf32>
    %28 = tpu.matmul %26, %27, %cst_23 {dimension_numbers = #tpu.dot_dimension_numbers<[1], [0], [0], [1], [0, 0, 1, 1], [], []>} : vector<8x512xbf16>, vector<512x256xbf16>, vector<8x256xf32> -> vector<8x256xf32>
    %c0_24 = arith.constant 0 : index
    %c0_25 = arith.constant 0 : index
    %29 = vector.load %arg11[%c0_24, %c0_25] : memref<1x256xf32, #tpu.memory_space<vmem>>, vector<1x256xf32>
    %30 = vector.broadcast %29 : vector<1x256xf32> to vector<8x256xf32>
    %31 = arith.addf %28, %30 : vector<8x256xf32>
    %32 = vector.extract_strided_slice %31 {offsets = [0, 0], sizes = [8, 128], strides = [1, 1]} : vector<8x256xf32> to vector<8x128xf32>
    %33 = vector.extract_strided_slice %31 {offsets = [0, 128], sizes = [8, 128], strides = [1, 1]} : vector<8x256xf32> to vector<8x128xf32>
    %c0_26 = arith.constant 0 : index
    %c0_27 = arith.constant 0 : index
    %34 = vector.load %arg18[%c0_26, %c0_27] : memref<8x128xf32, #tpu.memory_space<vmem>>, vector<8x128xf32>
    tpu.vector_store %arg18[%c0_26, %c0_27], %32 {strides = array<i32>} : memref<8x128xf32, #tpu.memory_space<vmem>>, vector<8x128xf32>,
    %c0_28 = arith.constant 0 : index
    %c0_29 = arith.constant 0 : index
    %35 = vector.load %arg19[%c0_28, %c0_29] : memref<8x128xf32, #tpu.memory_space<vmem>>, vector<8x128xf32>
    tpu.vector_store %arg19[%c0_28, %c0_29], %33 {strides = array<i32>} : memref<8x128xf32, #tpu.memory_space<vmem>>, vector<8x128xf32>,
    %c0_30 = arith.constant 0 : index
    %c0_31 = arith.constant 0 : index
    %36 = vector.load %arg4[%c0_30, %c0_31] : memref<8x128xf32, #tpu.memory_space<vmem>>, vector<8x128xf32>
    %cst_32 = arith.constant 5.000000e-01 : f32
    %37 = vector.broadcast %cst_32 : f32 to vector<8x128xf32>
    %38 = arith.mulf %37, %33 : vector<8x128xf32>
    %39 = math.exp %38 : vector<8x128xf32>
    %40 = arith.mulf %36, %39 : vector<8x128xf32>
    %41 = arith.addf %32, %40 : vector<8x128xf32>
    %42 = arith.truncf %41 : vector<8x128xf32> to vector<8x128xbf16>
    %c0_33 = arith.constant 0 : index
    %c0_34 = arith.constant 0 : index
    %43 = vector.load %arg12[%c0_33, %c0_34] : memref<128x512xbf16, #tpu.memory_space<vmem>>, vector<128x512xbf16>
    %cst_35 = arith.constant dense<0.000000e+00> : vector<8x512xf32>
    %44 = tpu.matmul %42, %43, %cst_35 {dimension_numbers = #tpu.dot_dimension_numbers<[1], [0], [0], [1], [0, 0, 1, 1], [], []>} : vector<8x128xbf16>, vector<128x512xbf16>, vector<8x512xf32> -> vector<8x512xf32>
    %c0_36 = arith.constant 0 : index
    %c0_37 = arith.constant 0 : index
    %45 = vector.load %arg13[%c0_36, %c0_37] : memref<128x512xbf16, #tpu.memory_space<vmem>>, vector<128x512xbf16>
    %cst_38 = arith.constant dense<0.000000e+00> : vector<8x512xf32>
    %46 = tpu.matmul %3, %45, %cst_38 {dimension_numbers = #tpu.dot_dimension_numbers<[1], [0], [0], [1], [0, 0, 1, 1], [], []>} : vector<8x128xbf16>, vector<128x512xbf16>, vector<8x512xf32> -> vector<8x512xf32>
    %47 = arith.addf %44, %46 : vector<8x512xf32>
    %c0_39 = arith.constant 0 : index
    %c0_40 = arith.constant 0 : index
    %48 = vector.load %arg14[%c0_39, %c0_40] : memref<1x512xf32, #tpu.memory_space<vmem>>, vector<1x512xf32>
    %49 = vector.broadcast %48 : vector<1x512xf32> to vector<8x512xf32>
    %50 = arith.addf %47, %49 : vector<8x512xf32>
    %cst_41 = arith.constant 0.000000e+00 : f32
    %51 = vector.broadcast %cst_41 : f32 to vector<8x512xf32>
    %52 = arith.cmpf oge, %50, %51 : vector<8x512xf32>
    %cst_42 = arith.constant 0.00999999977 : f32
    %53 = vector.broadcast %cst_42 : f32 to vector<8x512xf32>
    %54 = arith.mulf %53, %50 : vector<8x512xf32>
    %55 = arith.select %52, %50, %54 : vector<8x512xi1>, vector<8x512xf32>
    %56 = arith.truncf %55 : vector<8x512xf32> to vector<8x512xbf16>
    %c0_43 = arith.constant 0 : index
    %c0_44 = arith.constant 0 : index
    %57 = vector.load %arg15[%c0_43, %c0_44] : memref<512x512xbf16, #tpu.memory_space<vmem>>, vector<512x512xbf16>
    %cst_45 = arith.constant dense<0.000000e+00> : vector<8x512xf32>
    %58 = tpu.matmul %56, %57, %cst_45 {dimension_numbers = #tpu.dot_dimension_numbers<[1], [0], [0], [1], [0, 0, 1, 1], [], []>} : vector<8x512xbf16>, vector<512x512xbf16>, vector<8x512xf32> -> vector<8x512xf32>
    %c0_46 = arith.constant 0 : index
    %c0_47 = arith.constant 0 : index
    %59 = vector.load %arg16[%c0_46, %c0_47] : memref<1x512xf32, #tpu.memory_space<vmem>>, vector<1x512xf32>
    %60 = vector.broadcast %59 : vector<1x512xf32> to vector<8x512xf32>
    %61 = arith.addf %58, %60 : vector<8x512xf32>
    %cst_48 = arith.constant 0.000000e+00 : f32
    %62 = vector.broadcast %cst_48 : f32 to vector<8x512xf32>
    %63 = arith.maximumf %61, %62 : vector<8x512xf32>
    %c0_49 = arith.constant 0 : index
    %c0_50 = arith.constant 0 : index
    %64 = vector.load %arg17[%c0_49, %c0_50] : memref<8x512xf32, #tpu.memory_space<vmem>>, vector<8x512xf32>
    tpu.vector_store %arg17[%c0_49, %c0_50], %63 {strides = array<i32>} : memref<8x512xf32, #tpu.memory_space<vmem>>, vector<8x512xf32>,
    return
  }
  func.func @transform_0(%arg0: i32) -> (i32, i32) {
    %c0_i32 = arith.constant 0 : i32
    %c0_i32_0 = arith.constant 0 : i32
    %c0_i32_1 = arith.constant 0 : i32
    return %c0_i32, %c0_i32_0 : i32, i32
  }
  func.func @transform_1(%arg0: i32) -> (i32, i32) {
    %c0_i32 = arith.constant 0 : i32
    %c0_i32_0 = arith.constant 0 : i32
    %c0_i32_1 = arith.constant 0 : i32
    return %c0_i32, %c0_i32_0 : i32, i32
  }
  func.func @transform_2(%arg0: i32) -> (i32, i32) {
    %c0_i32 = arith.constant 0 : i32
    %c0_i32_0 = arith.constant 0 : i32
    %c0_i32_1 = arith.constant 0 : i32
    return %c0_i32, %c0_i32_0 : i32, i32
  }
  func.func @transform_3(%arg0: i32) -> (i32, i32) {
    %c0_i32 = arith.constant 0 : i32
    %c0_i32_0 = arith.constant 0 : i32
    %c0_i32_1 = arith.constant 0 : i32
    return %c0_i32, %c0_i32_0 : i32, i32
  }
  func.func @transform_4(%arg0: i32) -> (i32, i32) {
    %c0_i32 = arith.constant 0 : i32
    %c0_i32_0 = arith.constant 0 : i32
    %c0_i32_1 = arith.constant 0 : i32
    return %c0_i32, %c0_i32_0 : i32, i32
  }
  func.func @transform_5(%arg0: i32) -> (i32, i32) {
    %c0_i32 = arith.constant 0 : i32
    %c0_i32_0 = arith.constant 0 : i32
    %c0_i32_1 = arith.constant 0 : i32
    return %c0_i32, %c0_i32_0 : i32, i32
  }
  func.func @transform_6(%arg0: i32) -> (i32, i32) {
    %c0_i32 = arith.constant 0 : i32
    %c0_i32_0 = arith.constant 0 : i32
    %c0_i32_1 = arith.constant 0 : i32
    return %c0_i32, %c0_i32_0 : i32, i32
  }
  func.func @transform_7(%arg0: i32) -> (i32, i32) {
    %c0_i32 = arith.constant 0 : i32
    %c0_i32_0 = arith.constant 0 : i32
    %c0_i32_1 = arith.constant 0 : i32
    return %c0_i32, %c0_i32_0 : i32, i32
  }
  func.func @transform_8(%arg0: i32) -> (i32, i32) {
    %c0_i32 = arith.constant 0 : i32
    %c0_i32_0 = arith.constant 0 : i32
    %c0_i32_1 = arith.constant 0 : i32
    return %c0_i32, %c0_i32_0 : i32, i32
  }
  func.func @transform_9(%arg0: i32) -> (i32, i32) {
    %c0_i32 = arith.constant 0 : i32
    %c0_i32_0 = arith.constant 0 : i32
    %c0_i32_1 = arith.constant 0 : i32
    return %c0_i32, %c0_i32_0 : i32, i32
  }
  func.func @transform_10(%arg0: i32) -> (i32, i32) {
    %c0_i32 = arith.constant 0 : i32
    %c0_i32_0 = arith.constant 0 : i32
    %c0_i32_1 = arith.constant 0 : i32
    return %c0_i32, %c0_i32_0 : i32, i32
  }
  func.func @transform_11(%arg0: i32) -> (i32, i32) {
    %c0_i32 = arith.constant 0 : i32
    %c0_i32_0 = arith.constant 0 : i32
    %c0_i32_1 = arith.constant 0 : i32
    return %c0_i32, %c0_i32_0 : i32, i32
  }
  func.func @transform_12(%arg0: i32) -> (i32, i32) {
    %c0_i32 = arith.constant 0 : i32
    %c0_i32_0 = arith.constant 0 : i32
    %c0_i32_1 = arith.constant 0 : i32
    return %c0_i32, %c0_i32_0 : i32, i32
  }
  func.func @transform_13(%arg0: i32) -> (i32, i32) {
    %c0_i32 = arith.constant 0 : i32
    %c0_i32_0 = arith.constant 0 : i32
    %c0_i32_1 = arith.constant 0 : i32
    return %c0_i32, %c0_i32_0 : i32, i32
  }
  func.func @transform_14(%arg0: i32) -> (i32, i32) {
    %c0_i32 = arith.constant 0 : i32
    %c0_i32_0 = arith.constant 0 : i32
    %c0_i32_1 = arith.constant 0 : i32
    return %c0_i32, %c0_i32_0 : i32, i32
  }
  func.func @transform_15(%arg0: i32) -> (i32, i32) {
    %c0_i32 = arith.constant 0 : i32
    %c0_i32_0 = arith.constant 0 : i32
    %c0_i32_1 = arith.constant 0 : i32
    return %c0_i32, %c0_i32_0 : i32, i32
  }
  func.func @transform_16(%arg0: i32) -> (i32, i32) {
    %c0_i32 = arith.constant 0 : i32
    %c0_i32_0 = arith.constant 0 : i32
    %c0_i32_1 = arith.constant 0 : i32
    return %c0_i32, %c0_i32_0 : i32, i32
  }
  func.func @transform_17(%arg0: i32) -> (i32, i32) {
    %c0_i32 = arith.constant 0 : i32
    %c0_i32_0 = arith.constant 0 : i32
    %c0_i32_1 = arith.constant 0 : i32
    return %c0_i32, %c0_i32_0 : i32, i32
  }
  func.func @transform_18(%arg0: i32) -> (i32, i32) {
    %c0_i32 = arith.constant 0 : i32
    %c0_i32_0 = arith.constant 0 : i32
    %c0_i32_1 = arith.constant 0 : i32
    return %c0_i32, %c0_i32_0 : i32, i32
  }
}

</mosaic_0001>

<llo_original>
// kernel: generator_forward.1
$region0: #{generator_forward.1}
  #allocation0 [shape = 'u32[]', space=smem, size = 0x4, offset = 0x4, fixed_abs, tag = 'smem constant byte address 0x4 - core index']
  #allocation1 [shape = 'u32[144,128]{1,0:T(1,128)}', space=vmem, size = 0x12000, scoped, tag = 'internal scratch']
  %s0 = inlined_call_operand.vmem [shape: f32[8,16], index: 0, kind: input, shape index: {}]
  %s1 = inlined_call_operand.vmem [shape: f32[16,128], index: 1, kind: input, shape index: {}]
  %s2 = inlined_call_operand.vmem [shape: bf16[8,512], index: 2, kind: input, shape index: {}]
  %s3 = inlined_call_operand.vmem [shape: f32[8,128], index: 3, kind: input, shape index: {}]
  %s4 = inlined_call_operand.hbm [shape: bf16[512,512], index: 4, kind: input, shape index: {}]
  %s5 = inlined_call_operand.hbm [shape: bf16[128,512], index: 5, kind: input, shape index: {}]
  %s6 = inlined_call_operand.vmem [shape: f32[1,512], index: 6, kind: input, shape index: {}]
  %s7 = inlined_call_operand.hbm [shape: bf16[512,512], index: 7, kind: input, shape index: {}]
  %s8 = inlined_call_operand.vmem [shape: f32[1,512], index: 8, kind: input, shape index: {}]
  %s9 = inlined_call_operand.hbm [shape: bf16[512,256], index: 9, kind: input, shape index: {}]
  %s10 = inlined_call_operand.vmem [shape: f32[1,256], index: 10, kind: input, shape index: {}]
  %s11 = inlined_call_operand.hbm [shape: bf16[128,512], index: 11, kind: input, shape index: {}]
  %s12 = inlined_call_operand.hbm [shape: bf16[128,512], index: 12, kind: input, shape index: {}]
  %s13 = inlined_call_operand.vmem [shape: f32[1,512], index: 13, kind: input, shape index: {}]
  %s14 = inlined_call_operand.hbm [shape: bf16[512,512], index: 14, kind: input, shape index: {}]
  %s15 = inlined_call_operand.vmem [shape: f32[1,512], index: 15, kind: input, shape index: {}]
  %s16 = inlined_call_operand.hbm [shape: f32[8,512], index: 16, kind: output, shape index: {0}]
  %s17 = inlined_call_operand.hbm [shape: f32[8,128], index: 17, kind: output, shape index: {1}]
  %s18 = inlined_call_operand.hbm [shape: f32[8,128], index: 18, kind: output, shape index: {2}]
  %19 = xla_tuple %s16, %s17, %s18
  %s20 = sld [smem:[#allocation0]]
  $region118: #{generator_forward.1} parent=0
    _
  %s22 = ssub.s32 1, %s20
  %s23 = scalar_select 0, %s22, %s20
  $region1: #{generator_forward.1} parent=0
    #allocation2 [shape = 'u8[524288]{0}', space=vmem, size = 0x80000, scoped, tag = 'input window, operand 4, single buffered']
    #allocation3 [shape = 's32[1]{0}', space=sflag, size = 0x4, scoped, tag = 'scoped memory for generator_forward.1']
    #allocation4 [shape = 's32[1]{0}', space=sflag, size = 0x4, scoped, tag = 'scoped memory for generator_forward.1']
    #allocation5 [shape = 'u8[131072]{0}', space=vmem, size = 0x20000, scoped, tag = 'input window, operand 5, single buffered']
    #allocation6 [shape = 's32[1]{0}', space=sflag, size = 0x4, scoped, tag = 'scoped memory for generator_forward.1']
    #allocation7 [shape = 'u8[524288]{0}', space=vmem, size = 0x80000, scoped, tag = 'input window, operand 7, single buffered']
    #allocation8 [shape = 'u8[262144]{0}', space=vmem, size = 0x40000, scoped, tag = 'input window, operand 9, single buffered']
    #allocation9 [shape = 's32[1]{0}', space=sflag, size = 0x4, scoped, tag = 'scoped memory for generator_forward.1']
    #allocation10 [shape = 'u8[131072]{0}', space=vmem, size = 0x20000, scoped, tag = 'input window, operand 11, single buffered']
    #allocation11 [shape = 'u8[131072]{0}', space=vmem, size = 0x20000, scoped, tag = 'input window, operand 12, single buffered']
    #allocation12 [shape = 's32[1]{0}', space=sflag, size = 0x4, scoped, tag = 'scoped memory for generator_forward.1']
    #allocation13 [shape = 'u8[524288]{0}', space=vmem, size = 0x80000, scoped, tag = 'input window, operand 14, single buffered']
    #allocation14 [shape = 'u8[16384]{0}', space=vmem, size = 0x4000, scoped, tag = 'output window, operand 0, single buffered']
    #allocation15 [shape = 'u8[4096]{0}', space=vmem, size = 0x1000, scoped, tag = 'output window, operand 1, single buffered']
    #allocation16 [shape = 's32[1]{0}', space=sflag, size = 0x4, scoped, tag = 'scoped memory for generator_forward.1']
    #allocation17 [shape = 'u8[4096]{0}', space=vmem, size = 0x1000, scoped, tag = 'output window, operand 2, single buffered']
    %24 = vsyncpa [#allocation3], 0
    %25 = vsyncpa [#allocation6], 0
    %26 = vsyncpa [#allocation9], 0
    %27 = vsyncpa [#allocation12], 0
    %28 = vsyncpa [#allocation4], 0
    %29 = vsyncpa [#allocation16], 0
    // Predicated region
    $region2: #{generator_forward.1} parent=1 // pred_check
      _
    $region3: #{generator_forward.1} parent=1 // pred_check_branch
      %31 = sbr.rel (0) target = $region5
    $region4: #{generator_forward.1} parent=1 // pred_region
      _
    $region5: #{generator_forward.1} parent=1 // pred_fallthru
      _
    // Predicated region
    $region6: #{generator_forward.1} parent=1 // pred_check
      _
    $region7: #{generator_forward.1} parent=1 // pred_check_branch
      %33 = sbr.rel (0) target = $region9
    $region8: #{generator_forward.1} parent=1 // pred_region
      _
    $region9: #{generator_forward.1} parent=1 // pred_fallthru
      _
    // Predicated region
    $region10: #{generator_forward.1} parent=1 // pred_check
      _
    $region11: #{generator_forward.1} parent=1 // pred_check_branch
      %35 = sbr.rel (0) target = $region13
    $region12: #{generator_forward.1} parent=1 // pred_region
      _
    $region13: #{generator_forward.1} parent=1 // pred_fallthru
      _
    // Predicated region
    $region14: #{generator_forward.1} parent=1 // pred_check
      _
    $region15: #{generator_forward.1} parent=1 // pred_check_branch
      %37 = sbr.rel (0) target = $region17
    $region16: #{generator_forward.1} parent=1 // pred_region
      _
    $region17: #{generator_forward.1} parent=1 // pred_fallthru
      _
    // Predicated region
    $region18: #{generator_forward.1} parent=1 // pred_check
      _
    $region19: #{generator_forward.1} parent=1 // pred_check_branch
      %39 = sbr.rel (0) target = $region21
    $region20: #{generator_forward.1} parent=1 // pred_region
      %s41 = ssub.s32 16384, 16384
      %42 = vsyncadd [#allocation3], %s41
      %s43 = sshll.u32 [#allocation2], 4
      %s44 = int_to_ptr.vmem [resolvable:$true] %s43
      %49 = dma.hbm_to_vmem [thread:$0]  %s4, 16384, %s44, [#allocation3], 256, 256, 16
    $region21: #{generator_forward.1} parent=1 // pred_fallthru
      _
    // Predicated region
    $region22: #{generator_forward.1} parent=1 // pred_check
      _
    $region23: #{generator_forward.1} parent=1 // pred_check_branch
      %51 = sbr.rel (0) target = $region25
    $region24: #{generator_forward.1} parent=1 // pred_region
      %s53 = ssub.s32 4096, 4096
      %54 = vsyncadd [#allocation6], %s53
      %s55 = sshll.u32 [#allocation5], 4
      %s56 = int_to_ptr.vmem [resolvable:$true] %s55
      %61 = dma.hbm_to_vmem [thread:$0]  %s5, 4096, %s56, [#allocation6], 256, 256, 16
    $region25: #{generator_forward.1} parent=1 // pred_fallthru
      _
    // Predicated region
    $region26: #{generator_forward.1} parent=1 // pred_check
      _
    $region27: #{generator_forward.1} parent=1 // pred_check_branch
      %63 = sbr.rel (0) target = $region29
    $region28: #{generator_forward.1} parent=1 // pred_region
      _
    $region29: #{generator_forward.1} parent=1 // pred_fallthru
      _
    // Predicated region
    $region30: #{generator_forward.1} parent=1 // pred_check
      _
    $region31: #{generator_forward.1} parent=1 // pred_check_branch
      %65 = sbr.rel (0) target = $region33
    $region32: #{generator_forward.1} parent=1 // pred_region
      %s67 = ssub.s32 16384, 16384
      %68 = vsyncadd [#allocation6], %s67
      %s69 = sshll.u32 [#allocation7], 4
      %s70 = int_to_ptr.vmem [resolvable:$true] %s69
      %75 = dma.hbm_to_vmem [thread:$0]  %s7, 16384, %s70, [#allocation6], 256, 256, 16
    $region33: #{generator_forward.1} parent=1 // pred_fallthru
      _
    // Predicated region
    $region34: #{generator_forward.1} parent=1 // pred_check
      _
    $region35: #{generator_forward.1} parent=1 // pred_check_branch
      %77 = sbr.rel (0) target = $region37
    $region36: #{generator_forward.1} parent=1 // pred_region
      _
    $region37: #{generator_forward.1} parent=1 // pred_fallthru
      _
    // Predicated region
    $region38: #{generator_forward.1} parent=1 // pred_check
      _
    $region39: #{generator_forward.1} parent=1 // pred_check_branch
      %79 = sbr.rel (0) target = $region41
    $region40: #{generator_forward.1} parent=1 // pred_region
      %s81 = ssub.s32 8192, 8192
      %82 = vsyncadd [#allocation9], %s81
      %s83 = sshll.u32 [#allocation8], 4
      %s84 = int_to_ptr.vmem [resolvable:$true] %s83
      %89 = dma.hbm_to_vmem [thread:$0]  %s9, 8192, %s84, [#allocation9], 128, 128, 8
    $region41: #{generator_forward.1} parent=1 // pred_fallthru
      _
    // Predicated region
    $region42: #{generator_forward.1} parent=1 // pred_check
      _
    $region43: #{generator_forward.1} parent=1 // pred_check_branch
      %91 = sbr.rel (0) target = $region45
    $region44: #{generator_forward.1} parent=1 // pred_region
      _
    $region45: #{generator_forward.1} parent=1 // pred_fallthru
      _
    // Predicated region
    $region46: #{generator_forward.1} parent=1 // pred_check
      _
    $region47: #{generator_forward.1} parent=1 // pred_check_branch
      %93 = sbr.rel (0) target = $region49
    $region48: #{generator_forward.1} parent=1 // pred_region
      %s95 = ssub.s32 4096, 4096
      %96 = vsyncadd [#allocation9], %s95
      %s97 = sshll.u32 [#allocation10], 4
      %s98 = int_to_ptr.vmem [resolvable:$true] %s97
      %103 = dma.hbm_to_vmem [thread:$0]  %s11, 4096, %s98, [#allocation9], 256, 256, 16
    $region49: #{generator_forward.1} parent=1 // pred_fallthru
      _
    // Predicated region
    $region50: #{generator_forward.1} parent=1 // pred_check
      _
    $region51: #{generator_forward.1} parent=1 // pred_check_branch
      %105 = sbr.rel (0) target = $region53
    $region52: #{generator_forward.1} parent=1 // pred_region
      %s107 = ssub.s32 4096, 4096
      %108 = vsyncadd [#allocation12], %s107
      %s109 = sshll.u32 [#allocation11], 4
      %s110 = int_to_ptr.vmem [resolvable:$true] %s109
      %115 = dma.hbm_to_vmem [thread:$0]  %s12, 4096, %s110, [#allocation12], 256, 256, 16
    $region53: #{generator_forward.1} parent=1 // pred_fallthru
      _
    // Predicated region
    $region54: #{generator_forward.1} parent=1 // pred_check
      _
    $region55: #{generator_forward.1} parent=1 // pred_check_branch
      %117 = sbr.rel (0) target = $region57
    $region56: #{generator_forward.1} parent=1 // pred_region
      _
    $region57: #{generator_forward.1} parent=1 // pred_fallthru
      _
    // Predicated region
    $region58: #{generator_forward.1} parent=1 // pred_check
      _
    $region59: #{generator_forward.1} parent=1 // pred_check_branch
      %119 = sbr.rel (0) target = $region61
    $region60: #{generator_forward.1} parent=1 // pred_region
      %s121 = ssub.s32 16384, 16384
      %122 = vsyncadd [#allocation12], %s121
      %s123 = sshll.u32 [#allocation13], 4
      %s124 = int_to_ptr.vmem [resolvable:$true] %s123
      %129 = dma.hbm_to_vmem [thread:$0]  %s14, 16384, %s124, [#allocation12], 256, 256, 16
    $region61: #{generator_forward.1} parent=1 // pred_fallthru
      _
    // Predicated region
    $region62: #{generator_forward.1} parent=1 // pred_check
      _
    $region63: #{generator_forward.1} parent=1 // pred_check_branch
      %131 = sbr.rel (0) target = $region65
    $region64: #{generator_forward.1} parent=1 // pred_region
      _
    $region65: #{generator_forward.1} parent=1 // pred_fallthru
      _
    // Predicated region
    $region66: #{generator_forward.1} parent=1 // pred_check
      _
    $region67: #{generator_forward.1} parent=1 // pred_check_branch
      %133 = sbr.rel (0) target = $region69
    $region68: #{generator_forward.1} parent=1 // pred_region
      %134 = dma.done [#allocation3], 16384
    $region69: #{generator_forward.1} parent=1 // pred_fallthru
      _
    // Predicated region
    $region70: #{generator_forward.1} parent=1 // pred_check
      _
    $region71: #{generator_forward.1} parent=1 // pred_check_branch
      %136 = sbr.rel (0) target = $region73
    $region72: #{generator_forward.1} parent=1 // pred_region
      %137 = dma.done [#allocation6], 4096
    $region73: #{generator_forward.1} parent=1 // pred_fallthru
      _
    // Predicated region
    $region74: #{generator_forward.1} parent=1 // pred_check
      _
    $region75: #{generator_forward.1} parent=1 // pred_check_branch
      %139 = sbr.rel (0) target = $region77
    $region76: #{generator_forward.1} parent=1 // pred_region
      %140 = dma.done [#allocation6], 16384
    $region77: #{generator_forward.1} parent=1 // pred_fallthru
      _
    // Predicated region
    $region78: #{generator_forward.1} parent=1 // pred_check
      _
    $region79: #{generator_forward.1} parent=1 // pred_check_branch
      %142 = sbr.rel (0) target = $region81
    $region80: #{generator_forward.1} parent=1 // pred_region
      %143 = dma.done [#allocation9], 8192
    $region81: #{generator_forward.1} parent=1 // pred_fallthru
      _
    // Predicated region
    $region82: #{generator_forward.1} parent=1 // pred_check
      _
    $region83: #{generator_forward.1} parent=1 // pred_check_branch
      %145 = sbr.rel (0) target = $region85
    $region84: #{generator_forward.1} parent=1 // pred_region
      %146 = dma.done [#allocation9], 4096
    $region85: #{generator_forward.1} parent=1 // pred_fallthru
      _
    // Predicated region
    $region86: #{generator_forward.1} parent=1 // pred_check
      _
    $region87: #{generator_forward.1} parent=1 // pred_check_branch
      %148 = sbr.rel (0) target = $region89
    $region88: #{generator_forward.1} parent=1 // pred_region
      %149 = dma.done [#allocation12], 4096
    $region89: #{generator_forward.1} parent=1 // pred_fallthru
      _
    // Predicated region
    $region90: #{generator_forward.1} parent=1 // pred_check
      _
    $region91: #{generator_forward.1} parent=1 // pred_check_branch
      %151 = sbr.rel (0) target = $region93
    $region92: #{generator_forward.1} parent=1 // pred_region
      %152 = dma.done [#allocation12], 16384
    $region93: #{generator_forward.1} parent=1 // pred_fallthru
      _
    %v154 = vld [vmem:[%s0] sm:$0xff]
    %v155 = vld [vmem:[%s1] sm:$0xff]
    %v156 = vld [vmem:[%s1 + $0x8] sm:$0xff]
    %vm157 = vcmask 130048
    %v159 = vsel %vm157, %v154, 0
    %161 = vmatprep.subr.mxu0 0.0
    %162 = vmatpush1.msra.mxu0 %v155
    %163 = vmatprep.subr.mxu0 0.0
    %164 = vmatpush1.msra.mxu0 %v156
    %165 = vmatprep.subr.mxu0 0.0
    %166 = vmatpush1.msra.mxu0 0.0
    %167 = vmatprep.subr.mxu0 0.0
    %168 = vmatpush1.msra.mxu0 0.0
    %169 = vmatprep.subr.mxu0 0.0
    %170 = vmatpush1.msra.mxu0 0.0
    %171 = vmatprep.subr.mxu0 0.0
    %172 = vmatpush1.msra.mxu0 0.0
    %173 = vmatprep.subr.mxu0 0.0
    %174 = vmatpush1.msra.mxu0 0.0
    %175 = vmatprep.subr.mxu0 0.0
    %176 = vmatpush1.msra.mxu0 0.0
    %177 = vmatprep.subr.mxu0 0.0
    %178 = vmatpush1.msra.mxu0 0.0
    %179 = vmatprep.subr.mxu0 0.0
    %180 = vmatpush1.msra.mxu0 0.0
    %181 = vmatprep.subr.mxu0 0.0
    %182 = vmatpush1.msra.mxu0 0.0
    %183 = vmatprep.subr.mxu0 0.0
    %184 = vmatpush1.msra.mxu0 0.0
    %185 = vmatprep.subr.mxu0 0.0
    %186 = vmatpush1.msra.mxu0 0.0
    %187 = vmatprep.subr.mxu0 0.0
    %188 = vmatpush1.msra.mxu0 0.0
    %189 = vmatprep.subr.mxu0 0.0
    %190 = vmatpush1.msra.mxu0 0.0
    %191 = vmatprep.subr.mxu0 0.0
    %192 = vmatpush1.msra.mxu0 0.0
    %193 = vmatprep.subr.mxu0 0.0
    %194 = vmatpush1.msra.mxu0 0.0
    %195 = vmatprep.subr.mxu0 0.0
    %196 = vmatpush1.msra.mxu0 0.0
    %197 = vmatprep.subr.mxu0 0.0
    %198 = vmatpush1.msra.mxu0 0.0
    %199 = vmatprep.subr.mxu0 0.0
    %200 = vmatpush1.msra.mxu0 0.0
    %201 = vmatprep.subr.mxu0 0.0
    %202 = vmatpush1.msra.mxu0 0.0
    %203 = vmatprep.subr.mxu0 0.0
    %204 = vmatpush1.msra.mxu0 0.0
    %205 = vmatprep.subr.mxu0 0.0
    %206 = vmatpush1.msra.mxu0 0.0
    %207 = vmatprep.subr.mxu0 0.0
    %208 = vmatpush1.msra.mxu0 0.0
    %209 = vmatprep.subr.mxu0 0.0
    %210 = vmatpush1.msra.mxu0 0.0
    %211 = vmatprep.subr.mxu0 0.0
    %212 = vmatpush1.msra.mxu0 0.0
    %213 = vmatprep.subr.mxu0 0.0
    %214 = vmatpush1.msra.mxu0 0.0
    %215 = vmatprep.subr.mxu0 0.0
    %216 = vmatpush1.msra.mxu0 0.0
    %217 = vmatprep.subr.mxu0 0.0
    %218 = vmatpush1.msra.mxu0 0.0
    %219 = vmatprep.subr.mxu0 0.0
    %220 = vmatpush1.msra.mxu0 0.0
    %221 = vmatprep.subr.mxu0 0.0
    %222 = vmatpush1.msra.mxu0 0.0
    %223 = vmatprep.subr.mxu0 0.0
    %224 = vmatpush1.msra.mxu0 0.0
    %225 = vmatprep.mubr.f32.mxu0 0.0
    %226 = vmatmul.mubr.f32.gmra.mrb[0].mxu0 %v159
    %v227 = vpop.f32.mrb[0].mxu0
    %v228 = vadd.f32 0.0, %v227
    %v229 = vpop.f32.mrb[0].mxu0
    %230 = vdwg.mxu0
    %v231 = vpack.c.bf16 %v228, %v228
    %v232 = vld [vmem:[%s2] sm:$0xff]
    %v233 = vld [vmem:[%s2 + $0x8] sm:$0xff]
    %v234 = vld [vmem:[#allocation2] sm:$0xff]
    %v235 = vld [vmem:[#allocation2 + $0x8] sm:$0xff]
    %v236 = vld [vmem:[#allocation2 + $0x10] sm:$0xff]
    %v237 = vld [vmem:[#allocation2 + $0x18] sm:$0xff]
    %v238 = vld [vmem:[#allocation2 + $0x20] sm:$0xff]
    %v239 = vld [vmem:[#allocation2 + $0x28] sm:$0xff]
    %v240 = vld [vmem:[#allocation2 + $0x30] sm:$0xff]
    %v241 = vld [vmem:[#allocation2 + $0x38] sm:$0xff]
    %v242 = vld [vmem:[#allocation2 + $0x40] sm:$0xff]
    %v243 = vld [vmem:[#allocation2 + $0x48] sm:$0xff]
    %v244 = vld [vmem:[#allocation2 + $0x50] sm:$0xff]
    %v245 = vld [vmem:[#allocation2 + $0x58] sm:$0xff]
    %v246 = vld [vmem:[#allocation2 + $0x60] sm:$0xff]
    %v247 = vld [vmem:[#allocation2 + $0x68] sm:$0xff]
    %v248 = vld [vmem:[#allocation2 + $0x70] sm:$0xff]
    %v249 = vld [vmem:[#allocation2 + $0x78] sm:$0xff]
    %v250 = vld [vmem:[#allocation2 + $0x80] sm:$0xff]
    %v251 = vld [vmem:[#allocation2 + $0x88] sm:$0xff]
    %v252 = vld [vmem:[#allocation2 + $0x90] sm:$0xff]
    %v253 = vld [vmem:[#allocation2 + $0x98] sm:$0xff]
    %v254 = vld [vmem:[#allocation2 + $0xa0] sm:$0xff]
    %v255 = vld [vmem:[#allocation2 + $0xa8] sm:$0xff]
    %v256 = vld [vmem:[#allocation2 + $0xb0] sm:$0xff]
    %v257 = vld [vmem:[#allocation2 + $0xb8] sm:$0xff]
    %v258 = vld [vmem:[#allocation2 + $0xc0] sm:$0xff]
    %v259 = vld [vmem:[#allocation2 + $0xc8] sm:$0xff]
    %v260 = vld [vmem:[#allocation2 + $0xd0] sm:$0xff]
    %v261 = vld [vmem:[#allocation2 + $0xd8] sm:$0xff]
    %v262 = vld [vmem:[#allocation2 + $0xe0] sm:$0xff]
    %v263 = vld [vmem:[#allocation2 + $0xe8] sm:$0xff]
    %v264 = vld [vmem:[#allocation2 + $0xf0] sm:$0xff]
    %v265 = vld [vmem:[#allocation2 + $0xf8] sm:$0xff]
    %v266 = vld [vmem:[#allocation2 + $0x100] sm:$0xff]
    %v267 = vld [vmem:[#allocation2 + $0x108] sm:$0xff]
    %v268 = vld [vmem:[#allocation2 + $0x110] sm:$0xff]
    %v269 = vld [vmem:[#allocation2 + $0x118] sm:$0xff]
    %v270 = vld [vmem:[#allocation2 + $0x120] sm:$0xff]
    %v271 = vld [vmem:[#allocation2 + $0x128] sm:$0xff]
    %v272 = vld [vmem:[#allocation2 + $0x130] sm:$0xff]
    %v273 = vld [vmem:[#allocation2 + $0x138] sm:$0xff]
    %v274 = vld [vmem:[#allocation2 + $0x140] sm:$0xff]
    %v275 = vld [vmem:[#allocation2 + $0x148] sm:$0xff]
    %v276 = vld [vmem:[#allocation2 + $0x150] sm:$0xff]
    %v277 = vld [vmem:[#allocation2 + $0x158] sm:$0xff]
    %v278 = vld [vmem:[#allocation2 + $0x160] sm:$0xff]
    %v279 = vld [vmem:[#allocation2 + $0x168] sm:$0xff]
    %v280 = vld [vmem:[#allocation2 + $0x170] sm:$0xff]
    %v281 = vld [vmem:[#allocation2 + $0x178] sm:$0xff]
    %v282 = vld [vmem:[#allocation2 + $0x180] sm:$0xff]
    %v283 = vld [vmem:[#allocation2 + $0x188] sm:$0xff]
    %v284 = vld [vmem:[#allocation2 + $0x190] sm:$0xff]
    %v285 = vld [vmem:[#allocation2 + $0x198] sm:$0xff]
    %v286 = vld [vmem:[#allocation2 + $0x1a0] sm:$0xff]
    %v287 = vld [vmem:[#allocation2 + $0x1a8] sm:$0xff]
    %v288 = vld [vmem:[#allocation2 + $0x1b0] sm:$0xff]
    %v289 = vld [vmem:[#allocation2 + $0x1b8] sm:$0xff]
    %v290 = vld [vmem:[#allocation2 + $0x1c0] sm:$0xff]
    %v291 = vld [vmem:[#allocation2 + $0x1c8] sm:$0xff]
    %v292 = vld [vmem:[#allocation2 + $0x1d0] sm:$0xff]
    %v293 = vld [vmem:[#allocation2 + $0x1d8] sm:$0xff]
    %v294 = vld [vmem:[#allocation2 + $0x1e0] sm:$0xff]
    %v295 = vld [vmem:[#allocation2 + $0x1e8] sm:$0xff]
    %v296 = vld [vmem:[#allocation2 + $0x1f0] sm:$0xff]
    %v297 = vld [vmem:[#allocation2 + $0x1f8] sm:$0xff]
    %v298 = vld [vmem:[#allocation2 + $0x200] sm:$0xff]
    %v299 = vld [vmem:[#allocation2 + $0x208] sm:$0xff]
    %v300 = vld [vmem:[#allocation2 + $0x210] sm:$0xff]
    %v301 = vld [vmem:[#allocation2 + $0x218] sm:$0xff]
    %v302 = vld [vmem:[#allocation2 + $0x220] sm:$0xff]
    %v303 = vld [vmem:[#allocation2 + $0x228] sm:$0xff]
    %v304 = vld [vmem:[#allocation2 + $0x230] sm:$0xff]
    %v305 = vld [vmem:[#allocation2 + $0x238] sm:$0xff]
    %v306 = vld [vmem:[#allocation2 + $0x240] sm:$0xff]
    %v307 = vld [vmem:[#allocation2 + $0x248] sm:$0xff]
    %v308 = vld [vmem:[#allocation2 + $0x250] sm:$0xff]
    %v309 = vld [vmem:[#allocation2 + $0x258] sm:$0xff]
    %v310 = vld [vmem:[#allocation2 + $0x260] sm:$0xff]
    %v311 = vld [vmem:[#allocation2 + $0x268] sm:$0xff]
    %v312 = vld [vmem:[#allocation2 + $0x270] sm:$0xff]
    %v313 = vld [vmem:[#allocation2 + $0x278] sm:$0xff]
    %v314 = vld [vmem:[#allocation2 + $0x280] sm:$0xff]
    %v315 = vld [vmem:[#allocation2 + $0x288] sm:$0xff]
    %v316 = vld [vmem:[#allocation2 + $0x290] sm:$0xff]
    %v317 = vld [vmem:[#allocation2 + $0x298] sm:$0xff]
    %v318 = vld [vmem:[#allocation2 + $0x2a0] sm:$0xff]
    %v319 = vld [vmem:[#allocation2 + $0x2a8] sm:$0xff]
    %v320 = vld [vmem:[#allocation2 + $0x2b0] sm:$0xff]
    %v321 = vld [vmem:[#allocation2 + $0x2b8] sm:$0xff]
    %v322 = vld [vmem:[#allocation2 + $0x2c0] sm:$0xff]
    %v323 = vld [vmem:[#allocation2 + $0x2c8] sm:$0xff]
    %v324 = vld [vmem:[#allocation2 + $0x2d0] sm:$0xff]
    %v325 = vld [vmem:[#allocation2 + $0x2d8] sm:$0xff]
    %v326 = vld [vmem:[#allocation2 + $0x2e0] sm:$0xff]
    %v327 = vld [vmem:[#allocation2 + $0x2e8] sm:$0xff]
    %v328 = vld [vmem:[#allocation2 + $0x2f0] sm:$0xff]
    %v329 = vld [vmem:[#allocation2 + $0x2f8] sm:$0xff]
    %v330 = vld [vmem:[#allocation2 + $0x300] sm:$0xff]
    %v331 = vld [vmem:[#allocation2 + $0x308] sm:$0xff]
    %v332 = vld [vmem:[#allocation2 + $0x310] sm:$0xff]
    %v333 = vld [vmem:[#allocation2 + $0x318] sm:$0xff]
    %v334 = vld [vmem:[#allocation2 + $0x320] sm:$0xff]
    %v335 = vld [vmem:[#allocation2 + $0x328] sm:$0xff]
    %v336 = vld [vmem:[#allocation2 + $0x330] sm:$0xff]
    %v337 = vld [vmem:[#allocation2 + $0x338] sm:$0xff]
    %v338 = vld [vmem:[#allocation2 + $0x340] sm:$0xff]
    %v339 = vld [vmem:[#allocation2 + $0x348] sm:$0xff]
    %v340 = vld [vmem:[#allocation2 + $0x350] sm:$0xff]
    %v341 = vld [vmem:[#allocation2 + $0x358] sm:$0xff]
    %v342 = vld [vmem:[#allocation2 + $0x360] sm:$0xff]
    %v343 = vld [vmem:[#allocation2 + $0x368] sm:$0xff]
    %v344 = vld [vmem:[#allocation2 + $0x370] sm:$0xff]
    %v345 = vld [vmem:[#allocation2 + $0x378] sm:$0xff]
    %v346 = vld [vmem:[#allocation2 + $0x380] sm:$0xff]
    %v347 = vld [vmem:[#allocation2 + $0x388] sm:$0xff]
    %v348 = vld [vmem:[#allocation2 + $0x390] sm:$0xff]
    %v349 = vld [vmem:[#allocation2 + $0x398] sm:$0xff]
    %v350 = vld [vmem:[#allocation2 + $0x3a0] sm:$0xff]
    %v351 = vld [vmem:[#allocation2 + $0x3a8] sm:$0xff]
    %v352 = vld [vmem:[#allocation2 + $0x3b0] sm:$0xff]
    %v353 = vld [vmem:[#allocation2 + $0x3b8] sm:$0xff]
    %v354 = vld [vmem:[#allocation2 + $0x3c0] sm:$0xff]
    %v355 = vld [vmem:[#allocation2 + $0x3c8] sm:$0xff]
    %v356 = vld [vmem:[#allocation2 + $0x3d0] sm:$0xff]
    %v357 = vld [vmem:[#allocation2 + $0x3d8] sm:$0xff]
    %v358 = vld [vmem:[#allocation2 + $0x3e0] sm:$0xff]
    %v359 = vld [vmem:[#allocation2 + $0x3e8] sm:$0xff]
    %v360 = vld [vmem:[#allocation2 + $0x3f0] sm:$0xff]
    %v361 = vld [vmem:[#allocation2 + $0x3f8] sm:$0xff]
    %v362 = vld [vmem:[#allocation5] sm:$0xff]
    %v363 = vld [vmem:[#allocation5 + $0x8] sm:$0xff]
    %v364 = vld [vmem:[#allocation5 + $0x10] sm:$0xff]
    %v365 = vld [vmem:[#allocation5 + $0x18] sm:$0xff]
    %v366 = vld [vmem:[#allocation5 + $0x20] sm:$0xff]
    %v367 = vld [vmem:[#allocation5 + $0x28] sm:$0xff]
    %v368 = vld [vmem:[#allocation5 + $0x30] sm:$0xff]
    %v369 = vld [vmem:[#allocation5 + $0x38] sm:$0xff]
    %v370 = vld [vmem:[#allocation5 + $0x40] sm:$0xff]
    %v371 = vld [vmem:[#allocation5 + $0x48] sm:$0xff]
    %v372 = vld [vmem:[#allocation5 + $0x50] sm:$0xff]
    %v373 = vld [vmem:[#allocation5 + $0x58] sm:$0xff]
    %v374 = vld [vmem:[#allocation5 + $0x60] sm:$0xff]
    %v375 = vld [vmem:[#allocation5 + $0x68] sm:$0xff]
    %v376 = vld [vmem:[#allocation5 + $0x70] sm:$0xff]
    %v377 = vld [vmem:[#allocation5 + $0x78] sm:$0xff]
    %v378 = vld [vmem:[#allocation5 + $0x80] sm:$0xff]
    %v379 = vld [vmem:[#allocation5 + $0x88] sm:$0xff]
    %v380 = vld [vmem:[#allocation5 + $0x90] sm:$0xff]
    %v381 = vld [vmem:[#allocation5 + $0x98] sm:$0xff]
    %v382 = vld [vmem:[#allocation5 + $0xa0] sm:$0xff]
    %v383 = vld [vmem:[#allocation5 + $0xa8] sm:$0xff]
    %v384 = vld [vmem:[#allocation5 + $0xb0] sm:$0xff]
    %v385 = vld [vmem:[#allocation5 + $0xb8] sm:$0xff]
    %v386 = vld [vmem:[#allocation5 + $0xc0] sm:$0xff]
    %v387 = vld [vmem:[#allocation5 + $0xc8] sm:$0xff]
    %v388 = vld [vmem:[#allocation5 + $0xd0] sm:$0xff]
    %v389 = vld [vmem:[#allocation5 + $0xd8] sm:$0xff]
    %v390 = vld [vmem:[#allocation5 + $0xe0] sm:$0xff]
    %v391 = vld [vmem:[#allocation5 + $0xe8] sm:$0xff]
    %v392 = vld [vmem:[#allocation5 + $0xf0] sm:$0xff]
    %v393 = vld [vmem:[#allocation5 + $0xf8] sm:$0xff]
    %v426 = vunpack.c.l.b16 %v362
    %v427 = vunpack.c.h.b16 %v362
    %v428 = vunpack.c.l.b16 %v363
    %v429 = vunpack.c.h.b16 %v363
    %v430 = vunpack.c.l.b16 %v364
    %v431 = vunpack.c.h.b16 %v364
    %v432 = vunpack.c.l.b16 %v365
    %v433 = vunpack.c.h.b16 %v365
    %v434 = vunpack.c.l.b16 %v366
    %v435 = vunpack.c.h.b16 %v366
    %v436 = vunpack.c.l.b16 %v367
    %v437 = vunpack.c.h.b16 %v367
    %v438 = vunpack.c.l.b16 %v368
    %v439 = vunpack.c.h.b16 %v368
    %v440 = vunpack.c.l.b16 %v369
    %v441 = vunpack.c.h.b16 %v369
    %v442 = vunpack.c.l.b16 %v370
    %v443 = vunpack.c.h.b16 %v370
    %v444 = vunpack.c.l.b16 %v371
    %v445 = vunpack.c.h.b16 %v371
    %v446 = vunpack.c.l.b16 %v372
    %v447 = vunpack.c.h.b16 %v372
    %v448 = vunpack.c.l.b16 %v373
    %v449 = vunpack.c.h.b16 %v373
    %v450 = vunpack.c.l.b16 %v374
    %v451 = vunpack.c.h.b16 %v374
    %v452 = vunpack.c.l.b16 %v375
    %v453 = vunpack.c.h.b16 %v375
    %v454 = vunpack.c.l.b16 %v376
    %v455 = vunpack.c.h.b16 %v376
    %v456 = vunpack.c.l.b16 %v377
    %v457 = vunpack.c.h.b16 %v377
    %v458 = vunpack.c.l.b16 %v378
    %v459 = vunpack.c.h.b16 %v378
    %v460 = vunpack.c.l.b16 %v379
    %v461 = vunpack.c.h.b16 %v379
    %v462 = vunpack.c.l.b16 %v380
    %v463 = vunpack.c.h.b16 %v380
    %v464 = vunpack.c.l.b16 %v381
    %v465 = vunpack.c.h.b16 %v381
    %v466 = vunpack.c.l.b16 %v382
    %v467 = vunpack.c.h.b16 %v382
    %v468 = vunpack.c.l.b16 %v383
    %v469 = vunpack.c.h.b16 %v383
    %v470 = vunpack.c.l.b16 %v384
    %v471 = vunpack.c.h.b16 %v384
    %v472 = vunpack.c.l.b16 %v385
    %v473 = vunpack.c.h.b16 %v385
    %v474 = vunpack.c.l.b16 %v386
    %v475 = vunpack.c.h.b16 %v386
    %v476 = vunpack.c.l.b16 %v387
    %v477 = vunpack.c.h.b16 %v387
    %v478 = vunpack.c.l.b16 %v388
    %v479 = vunpack.c.h.b16 %v388
    %v480 = vunpack.c.l.b16 %v389
    %v481 = vunpack.c.h.b16 %v389
    %v482 = vunpack.c.l.b16 %v390
    %v483 = vunpack.c.h.b16 %v390
    %v484 = vunpack.c.l.b16 %v391
    %v485 = vunpack.c.h.b16 %v391
    %v486 = vunpack.c.l.b16 %v392
    %v487 = vunpack.c.h.b16 %v392
    %v488 = vunpack.c.l.b16 %v393
    %v489 = vunpack.c.h.b16 %v393
    %v490 = vpack.c.b16 %v430, %v426
    %v491 = vpack.c.b16 %v431, %v427
    %v492 = vpack.c.b16 %v432, %v428
    %v493 = vpack.c.b16 %v433, %v429
    %v494 = vpack.c.b16 %v438, %v434
    %v495 = vpack.c.b16 %v439, %v435
    %v496 = vpack.c.b16 %v440, %v436
    %v497 = vpack.c.b16 %v441, %v437
    %v498 = vpack.c.b16 %v446, %v442
    %v499 = vpack.c.b16 %v447, %v443
    %v500 = vpack.c.b16 %v448, %v444
    %v501 = vpack.c.b16 %v449, %v445
    %v502 = vpack.c.b16 %v454, %v450
    %v503 = vpack.c.b16 %v455, %v451
    %v504 = vpack.c.b16 %v456, %v452
    %v505 = vpack.c.b16 %v457, %v453
    %v506 = vpack.c.b16 %v462, %v458
    %v507 = vpack.c.b16 %v463, %v459
    %v508 = vpack.c.b16 %v464, %v460
    %v509 = vpack.c.b16 %v465, %v461
    %v510 = vpack.c.b16 %v470, %v466
    %v511 = vpack.c.b16 %v471, %v467
    %v512 = vpack.c.b16 %v472, %v468
    %v513 = vpack.c.b16 %v473, %v469
    %v514 = vpack.c.b16 %v478, %v474
    %v515 = vpack.c.b16 %v479, %v475
    %v516 = vpack.c.b16 %v480, %v476
    %v517 = vpack.c.b16 %v481, %v477
    %v518 = vpack.c.b16 %v486, %v482
    %v519 = vpack.c.b16 %v487, %v483
    %v520 = vpack.c.b16 %v488, %v484
    %v521 = vpack.c.b16 %v489, %v485
    %554 = vmatprep.subr.bf16.mxu0 %v491
    %555 = vmatpush1.bf16.msra.mxu0 %v490
    %556 = vmatprep.subr.bf16.mxu0 %v495
    %557 = vmatpush1.bf16.msra.mxu0 %v494
    %558 = vmatprep.subr.bf16.mxu0 %v499
    %559 = vmatpush1.bf16.msra.mxu0 %v498
    %560 = vmatprep.subr.bf16.mxu0 %v503
    %561 = vmatpush1.bf16.msra.mxu0 %v502
    %562 = vmatprep.subr.bf16.mxu0 %v507
    %563 = vmatpush1.bf16.msra.mxu0 %v506
    %564 = vmatprep.subr.bf16.mxu0 %v511
    %565 = vmatpush1.bf16.msra.mxu0 %v510
    %566 = vmatprep.subr.bf16.mxu0 %v515
    %567 = vmatpush1.bf16.msra.mxu0 %v514
    %568 = vmatprep.subr.bf16.mxu0 %v519
    %569 = vmatpush1.bf16.msra.mxu0 %v518
    %570 = vmatprep.subr.bf16.mxu0 0
    %571 = vmatpush1.bf16.msra.mxu0 0
    %572 = vmatprep.subr.bf16.mxu0 0
    %573 = vmatpush1.bf16.msra.mxu0 0
    %574 = vmatprep.subr.bf16.mxu0 0
    %575 = vmatpush1.bf16.msra.mxu0 0
    %576 = vmatprep.subr.bf16.mxu0 0
    %577 = vmatpush1.bf16.msra.mxu0 0
    %578 = vmatprep.subr.bf16.mxu0 0
    %579 = vmatpush1.bf16.msra.mxu0 0
    %580 = vmatprep.subr.bf16.mxu0 0
    %581 = vmatpush1.bf16.msra.mxu0 0
    %582 = vmatprep.subr.bf16.mxu0 0
    %583 = vmatpush1.bf16.msra.mxu0 0
    %584 = vmatprep.subr.bf16.mxu0 0
    %585 = vmatpush1.bf16.msra.mxu0 0
    %586 = vmatprep.mubr.bf16.mxu0 0
    %587 = vmatmul.mubr.bf16.gmra.mrb[0].mxu0 %v231
    %v588 = vpop.f32.mrb[0].mxu0
    %v589 = vadd.f32 0.0, %v588
    %v590 = vpop.f32.mrb[0].mxu0
    %v591 = vadd.f32 0.0, %v590
    %v592 = vpop.f32.mrb[0].mxu0
    %v593 = vpop.f32.mrb[0].mxu0
    %594 = vdwg.mxu0
    %595 = vmatprep.subr.bf16.mxu0 %v493
    %596 = vmatpush1.bf16.msra.mxu0 %v492
    %597 = vmatprep.subr.bf16.mxu0 %v497
    %598 = vmatpush1.bf16.msra.mxu0 %v496
    %599 = vmatprep.subr.bf16.mxu0 %v501
    %600 = vmatpush1.bf16.msra.mxu0 %v500
    %601 = vmatprep.subr.bf16.mxu0 %v505
    %602 = vmatpush1.bf16.msra.mxu0 %v504
    %603 = vmatprep.subr.bf16.mxu0 %v509
    %604 = vmatpush1.bf16.msra.mxu0 %v508
    %605 = vmatprep.subr.bf16.mxu0 %v513
    %606 = vmatpush1.bf16.msra.mxu0 %v512
    %607 = vmatprep.subr.bf16.mxu0 %v517
    %608 = vmatpush1.bf16.msra.mxu0 %v516
    %609 = vmatprep.subr.bf16.mxu0 %v521
    %610 = vmatpush1.bf16.msra.mxu0 %v520
    %611 = vmatprep.subr.bf16.mxu0 0
    %612 = vmatpush1.bf16.msra.mxu0 0
    %613 = vmatprep.subr.bf16.mxu0 0
    %614 = vmatpush1.bf16.msra.mxu0 0
    %615 = vmatprep.subr.bf16.mxu0 0
    %616 = vmatpush1.bf16.msra.mxu0 0
    %617 = vmatprep.subr.bf16.mxu0 0
    %618 = vmatpush1.bf16.msra.mxu0 0
    %619 = vmatprep.subr.bf16.mxu0 0
    %620 = vmatpush1.bf16.msra.mxu0 0
    %621 = vmatprep.subr.bf16.mxu0 0
    %622 = vmatpush1.bf16.msra.mxu0 0
    %623 = vmatprep.subr.bf16.mxu0 0
    %624 = vmatpush1.bf16.msra.mxu0 0
    %625 = vmatprep.subr.bf16.mxu0 0
    %626 = vmatpush1.bf16.msra.mxu0 0
    %627 = vmatprep.mubr.bf16.mxu0 0
    %628 = vmatmul.mubr.bf16.gmra.mrb[0].mxu0 %v231
    %v629 = vpop.f32.mrb[0].mxu0
    %v630 = vadd.f32 0.0, %v629
    %v631 = vpop.f32.mrb[0].mxu0
    %v632 = vadd.f32 0.0, %v631
    %v633 = vpop.f32.mrb[0].mxu0
    %v634 = vpop.f32.mrb[0].mxu0
    %635 = vdwg.mxu0
    %v638 = vunpack.c.l.b16 %v232
    %v639 = vunpack.c.h.b16 %v232
    %v640 = vunpack.c.l.b16 %v233
    %v641 = vunpack.c.h.b16 %v233
    %v642 = vpack.c.b16 %v638, %v638
    %v643 = vpack.c.b16 %v639, %v639
    %v644 = vpack.c.b16 %v640, %v640
    %v645 = vpack.c.b16 %v641, %v641
    %v778 = vunpack.c.l.b16 %v234
    %v779 = vunpack.c.h.b16 %v234
    %v780 = vunpack.c.l.b16 %v235
    %v781 = vunpack.c.h.b16 %v235
    %v782 = vunpack.c.l.b16 %v236
    %v783 = vunpack.c.h.b16 %v236
    %v784 = vunpack.c.l.b16 %v237
    %v785 = vunpack.c.h.b16 %v237
    %v786 = vunpack.c.l.b16 %v238
    %v787 = vunpack.c.h.b16 %v238
    %v788 = vunpack.c.l.b16 %v239
    %v789 = vunpack.c.h.b16 %v239
    %v790 = vunpack.c.l.b16 %v240
    %v791 = vunpack.c.h.b16 %v240
    %v792 = vunpack.c.l.b16 %v241
    %v793 = vunpack.c.h.b16 %v241
    %v794 = vunpack.c.l.b16 %v242
    %v795 = vunpack.c.h.b16 %v242
    %v796 = vunpack.c.l.b16 %v243
    %v797 = vunpack.c.h.b16 %v243
    %v798 = vunpack.c.l.b16 %v244
    %v799 = vunpack.c.h.b16 %v244
    %v800 = vunpack.c.l.b16 %v245
    %v801 = vunpack.c.h.b16 %v245
    %v802 = vunpack.c.l.b16 %v246
    %v803 = vunpack.c.h.b16 %v246
    %v804 = vunpack.c.l.b16 %v247
    %v805 = vunpack.c.h.b16 %v247
    %v806 = vunpack.c.l.b16 %v248
    %v807 = vunpack.c.h.b16 %v248
    %v808 = vunpack.c.l.b16 %v249
    %v809 = vunpack.c.h.b16 %v249
    %v810 = vunpack.c.l.b16 %v250
    %v811 = vunpack.c.h.b16 %v250
    %v812 = vunpack.c.l.b16 %v251
    %v813 = vunpack.c.h.b16 %v251
    %v814 = vunpack.c.l.b16 %v252
    %v815 = vunpack.c.h.b16 %v252
    %v816 = vunpack.c.l.b16 %v253
    %v817 = vunpack.c.h.b16 %v253
    %v818 = vunpack.c.l.b16 %v254
    %v819 = vunpack.c.h.b16 %v254
    %v820 = vunpack.c.l.b16 %v255
    %v821 = vunpack.c.h.b16 %v255
    %v822 = vunpack.c.l.b16 %v256
    %v823 = vunpack.c.h.b16 %v256
    %v824 = vunpack.c.l.b16 %v257
    %v825 = vunpack.c.h.b16 %v257
    %v826 = vunpack.c.l.b16 %v258
    %v827 = vunpack.c.h.b16 %v258
    %v828 = vunpack.c.l.b16 %v259
    %v829 = vunpack.c.h.b16 %v259
    %v830 = vunpack.c.l.b16 %v260
    %v831 = vunpack.c.h.b16 %v260
    %v832 = vunpack.c.l.b16 %v261
    %v833 = vunpack.c.h.b16 %v261
    %v834 = vunpack.c.l.b16 %v262
    %v835 = vunpack.c.h.b16 %v262
    %v836 = vunpack.c.l.b16 %v263
    %v837 = vunpack.c.h.b16 %v263
    %v838 = vunpack.c.l.b16 %v264
    %v839 = vunpack.c.h.b16 %v264
    %v840 = vunpack.c.l.b16 %v265
    %v841 = vunpack.c.h.b16 %v265
    %v842 = vunpack.c.l.b16 %v266
    %v843 = vunpack.c.h.b16 %v266
    %v844 = vunpack.c.l.b16 %v267
    %v845 = vunpack.c.h.b16 %v267
    %v846 = vunpack.c.l.b16 %v268
    %v847 = vunpack.c.h.b16 %v268
    %v848 = vunpack.c.l.b16 %v269
    %v849 = vunpack.c.h.b16 %v269
    %v850 = vunpack.c.l.b16 %v270
    %v851 = vunpack.c.h.b16 %v270
    %v852 = vunpack.c.l.b16 %v271
    %v853 = vunpack.c.h.b16 %v271
    %v854 = vunpack.c.l.b16 %v272
    %v855 = vunpack.c.h.b16 %v272
    %v856 = vunpack.c.l.b16 %v273
    %v857 = vunpack.c.h.b16 %v273
    %v858 = vunpack.c.l.b16 %v274
    %v859 = vunpack.c.h.b16 %v274
    %v860 = vunpack.c.l.b16 %v275
    %v861 = vunpack.c.h.b16 %v275
    %v862 = vunpack.c.l.b16 %v276
    %v863 = vunpack.c.h.b16 %v276
    %v864 = vunpack.c.l.b16 %v277
    %v865 = vunpack.c.h.b16 %v277
    %v866 = vunpack.c.l.b16 %v278
    %v867 = vunpack.c.h.b16 %v278
    %v868 = vunpack.c.l.b16 %v279
    %v869 = vunpack.c.h.b16 %v279
    %v870 = vunpack.c.l.b16 %v280
    %v871 = vunpack.c.h.b16 %v280
    %v872 = vunpack.c.l.b16 %v281
    %v873 = vunpack.c.h.b16 %v281
    %v874 = vunpack.c.l.b16 %v282
    %v875 = vunpack.c.h.b16 %v282
    %v876 = vunpack.c.l.b16 %v283
    %v877 = vunpack.c.h.b16 %v283
    %v878 = vunpack.c.l.b16 %v284
    %v879 = vunpack.c.h.b16 %v284
    %v880 = vunpack.c.l.b16 %v285
    %v881 = vunpack.c.h.b16 %v285
    %v882 = vunpack.c.l.b16 %v286
    %v883 = vunpack.c.h.b16 %v286
    %v884 = vunpack.c.l.b16 %v287
    %v885 = vunpack.c.h.b16 %v287
    %v886 = vunpack.c.l.b16 %v288
    %v887 = vunpack.c.h.b16 %v288
    %v888 = vunpack.c.l.b16 %v289
    %v889 = vunpack.c.h.b16 %v289
    %v890 = vunpack.c.l.b16 %v290
    %v891 = vunpack.c.h.b16 %v290
    %v892 = vunpack.c.l.b16 %v291
    %v893 = vunpack.c.h.b16 %v291
    %v894 = vunpack.c.l.b16 %v292
    %v895 = vunpack.c.h.b16 %v292
    %v896 = vunpack.c.l.b16 %v293
    %v897 = vunpack.c.h.b16 %v293
    %v898 = vunpack.c.l.b16 %v294
    %v899 = vunpack.c.h.b16 %v294
    %v900 = vunpack.c.l.b16 %v295
    %v901 = vunpack.c.h.b16 %v295
    %v902 = vunpack.c.l.b16 %v296
    %v903 = vunpack.c.h.b16 %v296
    %v904 = vunpack.c.l.b16 %v297
    %v905 = vunpack.c.h.b16 %v297
    %v906 = vunpack.c.l.b16 %v298
    %v907 = vunpack.c.h.b16 %v298
    %v908 = vunpack.c.l.b16 %v299
    %v909 = vunpack.c.h.b16 %v299
    %v910 = vunpack.c.l.b16 %v300
    %v911 = vunpack.c.h.b16 %v300
    %v912 = vunpack.c.l.b16 %v301
    %v913 = vunpack.c.h.b16 %v301
    %v914 = vunpack.c.l.b16 %v302
    %v915 = vunpack.c.h.b16 %v302
    %v916 = vunpack.c.l.b16 %v303
    %v917 = vunpack.c.h.b16 %v303
    %v918 = vunpack.c.l.b16 %v304
    %v919 = vunpack.c.h.b16 %v304
    %v920 = vunpack.c.l.b16 %v305
    %v921 = vunpack.c.h.b16 %v305
    %v922 = vunpack.c.l.b16 %v306
    %v923 = vunpack.c.h.b16 %v306
    %v924 = vunpack.c.l.b16 %v307
    %v925 = vunpack.c.h.b16 %v307
    %v926 = vunpack.c.l.b16 %v308
    %v927 = vunpack.c.h.b16 %v308
    %v928 = vunpack.c.l.b16 %v309
    %v929 = vunpack.c.h.b16 %v309
    %v930 = vunpack.c.l.b16 %v310
    %v931 = vunpack.c.h.b16 %v310
    %v932 = vunpack.c.l.b16 %v311
    %v933 = vunpack.c.h.b16 %v311
    %v934 = vunpack.c.l.b16 %v312
    %v935 = vunpack.c.h.b16 %v312
    %v936 = vunpack.c.l.b16 %v313
    %v937 = vunpack.c.h.b16 %v313
    %v938 = vunpack.c.l.b16 %v314
    %v939 = vunpack.c.h.b16 %v314
    %v940 = vunpack.c.l.b16 %v315
    %v941 = vunpack.c.h.b16 %v315
    %v942 = vunpack.c.l.b16 %v316
    %v943 = vunpack.c.h.b16 %v316
    %v944 = vunpack.c.l.b16 %v317
    %v945 = vunpack.c.h.b16 %v317
    %v946 = vunpack.c.l.b16 %v318
    %v947 = vunpack.c.h.b16 %v318
    %v948 = vunpack.c.l.b16 %v319
    %v949 = vunpack.c.h.b16 %v319
    %v950 = vunpack.c.l.b16 %v320
    %v951 = vunpack.c.h.b16 %v320
    %v952 = vunpack.c.l.b16 %v321
    %v953 = vunpack.c.h.b16 %v321
    %v954 = vunpack.c.l.b16 %v322
    %v955 = vunpack.c.h.b16 %v322
    %v956 = vunpack.c.l.b16 %v323
    %v957 = vunpack.c.h.b16 %v323
    %v958 = vunpack.c.l.b16 %v324
    %v959 = vunpack.c.h.b16 %v324
    %v960 = vunpack.c.l.b16 %v325
    %v961 = vunpack.c.h.b16 %v325
    %v962 = vunpack.c.l.b16 %v326
    %v963 = vunpack.c.h.b16 %v326
    %v964 = vunpack.c.l.b16 %v327
    %v965 = vunpack.c.h.b16 %v327
    %v966 = vunpack.c.l.b16 %v328
    %v967 = vunpack.c.h.b16 %v328
    %v968 = vunpack.c.l.b16 %v329
    %v969 = vunpack.c.h.b16 %v329
    %v970 = vunpack.c.l.b16 %v330
    %v971 = vunpack.c.h.b16 %v330
    %v972 = vunpack.c.l.b16 %v331
    %v973 = vunpack.c.h.b16 %v331
    %v974 = vunpack.c.l.b16 %v332
    %v975 = vunpack.c.h.b16 %v332
    %v976 = vunpack.c.l.b16 %v333
    %v977 = vunpack.c.h.b16 %v333
    %v978 = vunpack.c.l.b16 %v334
    %v979 = vunpack.c.h.b16 %v334
    %v980 = vunpack.c.l.b16 %v335
    %v981 = vunpack.c.h.b16 %v335
    %v982 = vunpack.c.l.b16 %v336
    %v983 = vunpack.c.h.b16 %v336
    %v984 = vunpack.c.l.b16 %v337
    %v985 = vunpack.c.h.b16 %v337
    %v986 = vunpack.c.l.b16 %v338
    %v987 = vunpack.c.h.b16 %v338
    %v988 = vunpack.c.l.b16 %v339
    %v989 = vunpack.c.h.b16 %v339
    %v990 = vunpack.c.l.b16 %v340
    %v991 = vunpack.c.h.b16 %v340
    %v992 = vunpack.c.l.b16 %v341
    %v993 = vunpack.c.h.b16 %v341
    %v994 = vunpack.c.l.b16 %v342
    %v995 = vunpack.c.h.b16 %v342
    %v996 = vunpack.c.l.b16 %v343
    %v997 = vunpack.c.h.b16 %v343
    %v998 = vunpack.c.l.b16 %v344
    %v999 = vunpack.c.h.b16 %v344
    %v1000 = vunpack.c.l.b16 %v345
    %v1001 = vunpack.c.h.b16 %v345
    %v1002 = vunpack.c.l.b16 %v346
    %v1003 = vunpack.c.h.b16 %v346
    %v1004 = vunpack.c.l.b16 %v347
    %v1005 = vunpack.c.h.b16 %v347
    %v1006 = vunpack.c.l.b16 %v348
    %v1007 = vunpack.c.h.b16 %v348
    %v1008 = vunpack.c.l.b16 %v349
    %v1009 = vunpack.c.h.b16 %v349
    %v1010 = vunpack.c.l.b16 %v350
    %v1011 = vunpack.c.h.b16 %v350
    %v1012 = vunpack.c.l.b16 %v351
    %v1013 = vunpack.c.h.b16 %v351
    %v1014 = vunpack.c.l.b16 %v352
    %v1015 = vunpack.c.h.b16 %v352
    %v1016 = vunpack.c.l.b16 %v353
    %v1017 = vunpack.c.h.b16 %v353
    %v1018 = vunpack.c.l.b16 %v354
    %v1019 = vunpack.c.h.b16 %v354
    %v1020 = vunpack.c.l.b16 %v355
    %v1021 = vunpack.c.h.b16 %v355
    %v1022 = vunpack.c.l.b16 %v356
    %v1023 = vunpack.c.h.b16 %v356
    %v1024 = vunpack.c.l.b16 %v357
    %v1025 = vunpack.c.h.b16 %v357
    %v1026 = vunpack.c.l.b16 %v358
    %v1027 = vunpack.c.h.b16 %v358
    %v1028 = vunpack.c.l.b16 %v359
    %v1029 = vunpack.c.h.b16 %v359
    %v1030 = vunpack.c.l.b16 %v360
    %v1031 = vunpack.c.h.b16 %v360
    %v1032 = vunpack.c.l.b16 %v361
    %v1033 = vunpack.c.h.b16 %v361
    %v1034 = vpack.c.b16 %v782, %v778
    %v1035 = vpack.c.b16 %v783, %v779
    %v1036 = vpack.c.b16 %v784, %v780
    %v1037 = vpack.c.b16 %v785, %v781
    %v1038 = vpack.c.b16 %v790, %v786
    %v1039 = vpack.c.b16 %v791, %v787
    %v1040 = vpack.c.b16 %v792, %v788
    %v1041 = vpack.c.b16 %v793, %v789
    %v1042 = vpack.c.b16 %v798, %v794
    %v1043 = vpack.c.b16 %v799, %v795
    %v1044 = vpack.c.b16 %v800, %v796
    %v1045 = vpack.c.b16 %v801, %v797
    %v1046 = vpack.c.b16 %v806, %v802
    %v1047 = vpack.c.b16 %v807, %v803
    %v1048 = vpack.c.b16 %v808, %v804
    %v1049 = vpack.c.b16 %v809, %v805
    %v1050 = vpack.c.b16 %v814, %v810
    %v1051 = vpack.c.b16 %v815, %v811
    %v1052 = vpack.c.b16 %v816, %v812
    %v1053 = vpack.c.b16 %v817, %v813
    %v1054 = vpack.c.b16 %v822, %v818
    %v1055 = vpack.c.b16 %v823, %v819
    %v1056 = vpack.c.b16 %v824, %v820
    %v1057 = vpack.c.b16 %v825, %v821
    %v1058 = vpack.c.b16 %v830, %v826
    %v1059 = vpack.c.b16 %v831, %v827
    %v1060 = vpack.c.b16 %v832, %v828
    %v1061 = vpack.c.b16 %v833, %v829
    %v1062 = vpack.c.b16 %v838, %v834
    %v1063 = vpack.c.b16 %v839, %v835
    %v1064 = vpack.c.b16 %v840, %v836
    %v1065 = vpack.c.b16 %v841, %v837
    %v1066 = vpack.c.b16 %v846, %v842
    %v1067 = vpack.c.b16 %v847, %v843
    %v1068 = vpack.c.b16 %v848, %v844
    %v1069 = vpack.c.b16 %v849, %v845
    %v1070 = vpack.c.b16 %v854, %v850
    %v1071 = vpack.c.b16 %v855, %v851
    %v1072 = vpack.c.b16 %v856, %v852
    %v1073 = vpack.c.b16 %v857, %v853
    %v1074 = vpack.c.b16 %v862, %v858
    %v1075 = vpack.c.b16 %v863, %v859
    %v1076 = vpack.c.b16 %v864, %v860
    %v1077 = vpack.c.b16 %v865, %v861
    %v1078 = vpack.c.b16 %v870, %v866
    %v1079 = vpack.c.b16 %v871, %v867
    %v1080 = vpack.c.b16 %v872, %v868
    %v1081 = vpack.c.b16 %v873, %v869
    %v1082 = vpack.c.b16 %v878, %v874
    %v1083 = vpack.c.b16 %v879, %v875
    %v1084 = vpack.c.b16 %v880, %v876
    %v1085 = vpack.c.b16 %v881, %v877
    %v1086 = vpack.c.b16 %v886, %v882
    %v1087 = vpack.c.b16 %v887, %v883
    %v1088 = vpack.c.b16 %v888, %v884
    %v1089 = vpack.c.b16 %v889, %v885
    %v1090 = vpack.c.b16 %v894, %v890
    %v1091 = vpack.c.b16 %v895, %v891
    %v1092 = vpack.c.b16 %v896, %v892
    %v1093 = vpack.c.b16 %v897, %v893
    %v1094 = vpack.c.b16 %v902, %v898
    %v1095 = vpack.c.b16 %v903, %v899
    %v1096 = vpack.c.b16 %v904, %v900
    %v1097 = vpack.c.b16 %v905, %v901
    %v1098 = vpack.c.b16 %v910, %v906
    %v1099 = vpack.c.b16 %v911, %v907
    %v1100 = vpack.c.b16 %v912, %v908
    %v1101 = vpack.c.b16 %v913, %v909
    %v1102 = vpack.c.b16 %v918, %v914
    %v1103 = vpack.c.b16 %v919, %v915
    %v1104 = vpack.c.b16 %v920, %v916
    %v1105 = vpack.c.b16 %v921, %v917
    %v1106 = vpack.c.b16 %v926, %v922
    %v1107 = vpack.c.b16 %v927, %v923
    %v1108 = vpack.c.b16 %v928, %v924
    %v1109 = vpack.c.b16 %v929, %v925
    %v1110 = vpack.c.b16 %v934, %v930
    %v1111 = vpack.c.b16 %v935, %v931
    %v1112 = vpack.c.b16 %v936, %v932
    %v1113 = vpack.c.b16 %v937, %v933
    %v1114 = vpack.c.b16 %v942, %v938
    %v1115 = vpack.c.b16 %v943, %v939
    %v1116 = vpack.c.b16 %v944, %v940
    %v1117 = vpack.c.b16 %v945, %v941
    %v1118 = vpack.c.b16 %v950, %v946
    %v1119 = vpack.c.b16 %v951, %v947
    %v1120 = vpack.c.b16 %v952, %v948
    %v1121 = vpack.c.b16 %v953, %v949
    %v1122 = vpack.c.b16 %v958, %v954
    %v1123 = vpack.c.b16 %v959, %v955
    %v1124 = vpack.c.b16 %v960, %v956
    %v1125 = vpack.c.b16 %v961, %v957
    %v1126 = vpack.c.b16 %v966, %v962
    %v1127 = vpack.c.b16 %v967, %v963
    %v1128 = vpack.c.b16 %v968, %v964
    %v1129 = vpack.c.b16 %v969, %v965
    %v1130 = vpack.c.b16 %v974, %v970
    %v1131 = vpack.c.b16 %v975, %v971
    %v1132 = vpack.c.b16 %v976, %v972
    %v1133 = vpack.c.b16 %v977, %v973
    %v1134 = vpack.c.b16 %v982, %v978
    %v1135 = vpack.c.b16 %v983, %v979
    %v1136 = vpack.c.b16 %v984, %v980
    %v1137 = vpack.c.b16 %v985, %v981
    %v1138 = vpack.c.b16 %v990, %v986
    %v1139 = vpack.c.b16 %v991, %v987
    %v1140 = vpack.c.b16 %v992, %v988
    %v1141 = vpack.c.b16 %v993, %v989
    %v1142 = vpack.c.b16 %v998, %v994
    %v1143 = vpack.c.b16 %v999, %v995
    %v1144 = vpack.c.b16 %v1000, %v996
    %v1145 = vpack.c.b16 %v1001, %v997
    %v1146 = vpack.c.b16 %v1006, %v1002
    %v1147 = vpack.c.b16 %v1007, %v1003
    %v1148 = vpack.c.b16 %v1008, %v1004
    %v1149 = vpack.c.b16 %v1009, %v1005
    %v1150 = vpack.c.b16 %v1014, %v1010
    %v1151 = vpack.c.b16 %v1015, %v1011
    %v1152 = vpack.c.b16 %v1016, %v1012
    %v1153 = vpack.c.b16 %v1017, %v1013
    %v1154 = vpack.c.b16 %v1022, %v1018
    %v1155 = vpack.c.b16 %v1023, %v1019
    %v1156 = vpack.c.b16 %v1024, %v1020
    %v1157 = vpack.c.b16 %v1025, %v1021
    %v1158 = vpack.c.b16 %v1030, %v1026
    %v1159 = vpack.c.b16 %v1031, %v1027
    %v1160 = vpack.c.b16 %v1032, %v1028
    %v1161 = vpack.c.b16 %v1033, %v1029
    %1290 = vmatprep.subr.bf16.mxu0 %v1035
    %1291 = vmatpush1.bf16.msra.mxu0 %v1034
    %1292 = vmatprep.subr.bf16.mxu0 %v1039
    %1293 = vmatpush1.bf16.msra.mxu0 %v1038
    %1294 = vmatprep.subr.bf16.mxu0 %v1043
    %1295 = vmatpush1.bf16.msra.mxu0 %v1042
    %1296 = vmatprep.subr.bf16.mxu0 %v1047
    %1297 = vmatpush1.bf16.msra.mxu0 %v1046
    %1298 = vmatprep.subr.bf16.mxu0 %v1051
    %1299 = vmatpush1.bf16.msra.mxu0 %v1050
    %1300 = vmatprep.subr.bf16.mxu0 %v1055
    %1301 = vmatpush1.bf16.msra.mxu0 %v1054
    %1302 = vmatprep.subr.bf16.mxu0 %v1059
    %1303 = vmatpush1.bf16.msra.mxu0 %v1058
    %1304 = vmatprep.subr.bf16.mxu0 %v1063
    %1305 = vmatpush1.bf16.msra.mxu0 %v1062
    %1306 = vmatprep.subr.bf16.mxu0 %v1067
    %1307 = vmatpush1.bf16.msra.mxu0 %v1066
    %1308 = vmatprep.subr.bf16.mxu0 %v1071
    %1309 = vmatpush1.bf16.msra.mxu0 %v1070
    %1310 = vmatprep.subr.bf16.mxu0 %v1075
    %1311 = vmatpush1.bf16.msra.mxu0 %v1074
    %1312 = vmatprep.subr.bf16.mxu0 %v1079
    %1313 = vmatpush1.bf16.msra.mxu0 %v1078
    %1314 = vmatprep.subr.bf16.mxu0 %v1083
    %1315 = vmatpush1.bf16.msra.mxu0 %v1082
    %1316 = vmatprep.subr.bf16.mxu0 %v1087
    %1317 = vmatpush1.bf16.msra.mxu0 %v1086
    %1318 = vmatprep.subr.bf16.mxu0 %v1091
    %1319 = vmatpush1.bf16.msra.mxu0 %v1090
    %1320 = vmatprep.subr.bf16.mxu0 %v1095
    %1321 = vmatpush1.bf16.msra.mxu0 %v1094
    %1322 = vmatprep.mubr.bf16.mxu0 %v643
    %1323 = vmatmul.mubr.bf16.gmra.mrb[0].mxu0 %v642
    %v1324 = vpop.f32.mrb[0].mxu0
    %v1325 = vadd.f32 %v589, %v1324
    %v1326 = vpop.f32.mrb[0].mxu0
    %v1327 = vadd.f32 %v591, %v1326
    %v1328 = vpop.f32.mrb[0].mxu0
    %v1329 = vpop.f32.mrb[0].mxu0
    %1330 = vdwg.mxu0
    %1331 = vmatprep.subr.bf16.mxu0 %v1099
    %1332 = vmatpush1.bf16.msra.mxu0 %v1098
    %1333 = vmatprep.subr.bf16.mxu0 %v1103
    %1334 = vmatpush1.bf16.msra.mxu0 %v1102
    %1335 = vmatprep.subr.bf16.mxu0 %v1107
    %1336 = vmatpush1.bf16.msra.mxu0 %v1106
    %1337 = vmatprep.subr.bf16.mxu0 %v1111
    %1338 = vmatpush1.bf16.msra.mxu0 %v1110
    %1339 = vmatprep.subr.bf16.mxu0 %v1115
    %1340 = vmatpush1.bf16.msra.mxu0 %v1114
    %1341 = vmatprep.subr.bf16.mxu0 %v1119
    %1342 = vmatpush1.bf16.msra.mxu0 %v1118
    %1343 = vmatprep.subr.bf16.mxu0 %v1123
    %1344 = vmatpush1.bf16.msra.mxu0 %v1122
    %1345 = vmatprep.subr.bf16.mxu0 %v1127
    %1346 = vmatpush1.bf16.msra.mxu0 %v1126
    %1347 = vmatprep.subr.bf16.mxu0 %v1131
    %1348 = vmatpush1.bf16.msra.mxu0 %v1130
    %1349 = vmatprep.subr.bf16.mxu0 %v1135
    %1350 = vmatpush1.bf16.msra.mxu0 %v1134
    %1351 = vmatprep.subr.bf16.mxu0 %v1139
    %1352 = vmatpush1.bf16.msra.mxu0 %v1138
    %1353 = vmatprep.subr.bf16.mxu0 %v1143
    %1354 = vmatpush1.bf16.msra.mxu0 %v1142
    %1355 = vmatprep.subr.bf16.mxu0 %v1147
    %1356 = vmatpush1.bf16.msra.mxu0 %v1146
    %1357 = vmatprep.subr.bf16.mxu0 %v1151
    %1358 = vmatpush1.bf16.msra.mxu0 %v1150
    %1359 = vmatprep.subr.bf16.mxu0 %v1155
    %1360 = vmatpush1.bf16.msra.mxu0 %v1154
    %1361 = vmatprep.subr.bf16.mxu0 %v1159
    %1362 = vmatpush1.bf16.msra.mxu0 %v1158
    %1363 = vmatprep.mubr.bf16.mxu0 %v645
    %1364 = vmatmul.mubr.bf16.gmra.mrb[0].mxu0 %v644
    %v1365 = vpop.f32.mrb[0].mxu0
    %v1366 = vadd.f32 %v1325, %v1365
    %v1367 = vpop.f32.mrb[0].mxu0
    %v1368 = vadd.f32 %v1327, %v1367
    %v1369 = vpop.f32.mrb[0].mxu0
    %v1370 = vpop.f32.mrb[0].mxu0
    %1371 = vdwg.mxu0
    %1372 = vmatprep.subr.bf16.mxu0 %v1037
    %1373 = vmatpush1.bf16.msra.mxu0 %v1036
    %1374 = vmatprep.subr.bf16.mxu0 %v1041
    %1375 = vmatpush1.bf16.msra.mxu0 %v1040
    %1376 = vmatprep.subr.bf16.mxu0 %v1045
    %1377 = vmatpush1.bf16.msra.mxu0 %v1044
    %1378 = vmatprep.subr.bf16.mxu0 %v1049
    %1379 = vmatpush1.bf16.msra.mxu0 %v1048
    %1380 = vmatprep.subr.bf16.mxu0 %v1053
    %1381 = vmatpush1.bf16.msra.mxu0 %v1052
    %1382 = vmatprep.subr.bf16.mxu0 %v1057
    %1383 = vmatpush1.bf16.msra.mxu0 %v1056
    %1384 = vmatprep.subr.bf16.mxu0 %v1061
    %1385 = vmatpush1.bf16.msra.mxu0 %v1060
    %1386 = vmatprep.subr.bf16.mxu0 %v1065
    %1387 = vmatpush1.bf16.msra.mxu0 %v1064
    %1388 = vmatprep.subr.bf16.mxu0 %v1069
    %1389 = vmatpush1.bf16.msra.mxu0 %v1068
    %1390 = vmatprep.subr.bf16.mxu0 %v1073
    %1391 = vmatpush1.bf16.msra.mxu0 %v1072
    %1392 = vmatprep.subr.bf16.mxu0 %v1077
    %1393 = vmatpush1.bf16.msra.mxu0 %v1076
    %1394 = vmatprep.subr.bf16.mxu0 %v1081
    %1395 = vmatpush1.bf16.msra.mxu0 %v1080
    %1396 = vmatprep.subr.bf16.mxu0 %v1085
    %1397 = vmatpush1.bf16.msra.mxu0 %v1084
    %1398 = vmatprep.subr.bf16.mxu0 %v1089
    %1399 = vmatpush1.bf16.msra.mxu0 %v1088
    %1400 = vmatprep.subr.bf16.mxu0 %v1093
    %1401 = vmatpush1.bf16.msra.mxu0 %v1092
    %1402 = vmatprep.subr.bf16.mxu0 %v1097
    %1403 = vmatpush1.bf16.msra.mxu0 %v1096
    %1404 = vmatprep.mubr.bf16.mxu0 %v643
    %1405 = vmatmul.mubr.bf16.gmra.mrb[0].mxu0 %v642
    %v1406 = vpop.f32.mrb[0].mxu0
    %v1407 = vadd.f32 %v630, %v1406
    %v1408 = vpop.f32.mrb[0].mxu0
    %v1409 = vadd.f32 %v632, %v1408
    %v1410 = vpop.f32.mrb[0].mxu0
    %v1411 = vpop.f32.mrb[0].mxu0
    %1412 = vdwg.mxu0
    %1413 = vmatprep.subr.bf16.mxu0 %v1101
    %1414 = vmatpush1.bf16.msra.mxu0 %v1100
    %1415 = vmatprep.subr.bf16.mxu0 %v1105
    %1416 = vmatpush1.bf16.msra.mxu0 %v1104
    %1417 = vmatprep.subr.bf16.mxu0 %v1109
    %1418 = vmatpush1.bf16.msra.mxu0 %v1108
    %1419 = vmatprep.subr.bf16.mxu0 %v1113
    %1420 = vmatpush1.bf16.msra.mxu0 %v1112
    %1421 = vmatprep.subr.bf16.mxu0 %v1117
    %1422 = vmatpush1.bf16.msra.mxu0 %v1116
    %1423 = vmatprep.subr.bf16.mxu0 %v1121
    %1424 = vmatpush1.bf16.msra.mxu0 %v1120
    %1425 = vmatprep.subr.bf16.mxu0 %v1125
    %1426 = vmatpush1.bf16.msra.mxu0 %v1124
    %1427 = vmatprep.subr.bf16.mxu0 %v1129
    %1428 = vmatpush1.bf16.msra.mxu0 %v1128
    %1429 = vmatprep.subr.bf16.mxu0 %v1133
    %1430 = vmatpush1.bf16.msra.mxu0 %v1132
    %1431 = vmatprep.subr.bf16.mxu0 %v1137
    %1432 = vmatpush1.bf16.msra.mxu0 %v1136
    %1433 = vmatprep.subr.bf16.mxu0 %v1141
    %1434 = vmatpush1.bf16.msra.mxu0 %v1140
    %1435 = vmatprep.subr.bf16.mxu0 %v1145
    %1436 = vmatpush1.bf16.msra.mxu0 %v1144
    %1437 = vmatprep.subr.bf16.mxu0 %v1149
    %1438 = vmatpush1.bf16.msra.mxu0 %v1148
    %1439 = vmatprep.subr.bf16.mxu0 %v1153
    %1440 = vmatpush1.bf16.msra.mxu0 %v1152
    %1441 = vmatprep.subr.bf16.mxu0 %v1157
    %1442 = vmatpush1.bf16.msra.mxu0 %v1156
    %1443 = vmatprep.subr.bf16.mxu0 %v1161
    %1444 = vmatpush1.bf16.msra.mxu0 %v1160
    %1445 = vmatprep.mubr.bf16.mxu0 %v645
    %1446 = vmatmul.mubr.bf16.gmra.mrb[0].mxu0 %v644
    %v1447 = vpop.f32.mrb[0].mxu0
    %v1448 = vadd.f32 %v1407, %v1447
    %v1449 = vpop.f32.mrb[0].mxu0
    %v1450 = vadd.f32 %v1409, %v1449
    %v1451 = vpop.f32.mrb[0].mxu0
    %v1452 = vpop.f32.mrb[0].mxu0
    %1453 = vdwg.mxu0
    %v1454 = vld [vmem:[%s6] sm:$0xf]
    %v1456 = vlaneseq
    %v1457 = vshrl.u32 %v1456, 7
    %v1458 = vsub.s32 0, %v1457
    %v1459 = vrot.slane %v1454, %v1458
    %v1460 = vlaneseq
    %v1461 = vshrl.u32 %v1460, 7
    %v1462 = vsub.s32 1, %v1461
    %v1463 = vrot.slane %v1454, %v1462
    %v1464 = vlaneseq
    %v1465 = vshrl.u32 %v1464, 7
    %v1466 = vsub.s32 2, %v1465
    %v1467 = vrot.slane %v1454, %v1466
    %v1468 = vlaneseq
    %v1469 = vshrl.u32 %v1468, 7
    %v1470 = vsub.s32 3, %v1469
    %v1471 = vrot.slane %v1454, %v1470
    %v1476 = vadd.f32 %v1366, %v1459
    %v1477 = vadd.f32 %v1368, %v1463
    %v1478 = vadd.f32 %v1448, %v1467
    %v1479 = vadd.f32 %v1450, %v1471
    %vm1480 = vcmp.ge.f32.partialorder %v1476, 0.0
    %vm1481 = vcmp.ge.f32.partialorder %v1477, 0.0
    %vm1482 = vcmp.ge.f32.partialorder %v1478, 0.0
    %vm1483 = vcmp.ge.f32.partialorder %v1479, 0.0
    %v1484 = vmul.f32 %v1476, 0.01
    %v1485 = vmul.f32 %v1477, 0.01
    %v1486 = vmul.f32 %v1478, 0.01
    %v1487 = vmul.f32 %v1479, 0.01
    %v1488 = vsel %vm1480, %v1476, %v1484
    %v1489 = vsel %vm1481, %v1477, %v1485
    %v1490 = vsel %vm1482, %v1478, %v1486
    %v1491 = vsel %vm1483, %v1479, %v1487
    %v1492 = vpack.c.bf16 %v1488, %v1488
    %v1493 = vpack.c.bf16 %v1489, %v1489
    %v1494 = vpack.c.bf16 %v1490, %v1490
    %v1495 = vpack.c.bf16 %v1491, %v1491
    %v1496 = vld [vmem:[#allocation7] sm:$0xff]
    %v1497 = vld [vmem:[#allocation7 + $0x8] sm:$0xff]
    %v1498 = vld [vmem:[#allocation7 + $0x10] sm:$0xff]
    %v1499 = vld [vmem:[#allocation7 + $0x18] sm:$0xff]
    %v1500 = vld [vmem:[#allocation7 + $0x20] sm:$0xff]
    %v1501 = vld [vmem:[#allocation7 + $0x28] sm:$0xff]
    %v1502 = vld [vmem:[#allocation7 + $0x30] sm:$0xff]
    %v1503 = vld [vmem:[#allocation7 + $0x38] sm:$0xff]
    %v1504 = vld [vmem:[#allocation7 + $0x40] sm:$0xff]
    %v1505 = vld [vmem:[#allocation7 + $0x48] sm:$0xff]
    %v1506 = vld [vmem:[#allocation7 + $0x50] sm:$0xff]
    %v1507 = vld [vmem:[#allocation7 + $0x58] sm:$0xff]
    %v1508 = vld [vmem:[#allocation7 + $0x60] sm:$0xff]
    %v1509 = vld [vmem:[#allocation7 + $0x68] sm:$0xff]
    %v1510 = vld [vmem:[#allocation7 + $0x70] sm:$0xff]
    %v1511 = vld [vmem:[#allocation7 + $0x78] sm:$0xff]
    %v1512 = vld [vmem:[#allocation7 + $0x80] sm:$0xff]
    %v1513 = vld [vmem:[#allocation7 + $0x88] sm:$0xff]
    %v1514 = vld [vmem:[#allocation7 + $0x90] sm:$0xff]
    %v1515 = vld [vmem:[#allocation7 + $0x98] sm:$0xff]
    %v1516 = vld [vmem:[#allocation7 + $0xa0] sm:$0xff]
    %v1517 = vld [vmem:[#allocation7 + $0xa8] sm:$0xff]
    %v1518 = vld [vmem:[#allocation7 + $0xb0] sm:$0xff]
    %v1519 = vld [vmem:[#allocation7 + $0xb8] sm:$0xff]
    %v1520 = vld [vmem:[#allocation7 + $0xc0] sm:$0xff]
    %v1521 = vld [vmem:[#allocation7 + $0xc8] sm:$0xff]
    %v1522 = vld [vmem:[#allocation7 + $0xd0] sm:$0xff]
    %v1523 = vld [vmem:[#allocation7 + $0xd8] sm:$0xff]
    %v1524 = vld [vmem:[#allocation7 + $0xe0] sm:$0xff]
    %v1525 = vld [vmem:[#allocation7 + $0xe8] sm:$0xff]
    %v1526 = vld [vmem:[#allocation7 + $0xf0] sm:$0xff]
    %v1527 = vld [vmem:[#allocation7 + $0xf8] sm:$0xff]
    %v1528 = vld [vmem:[#allocation7 + $0x100] sm:$0xff]
    %v1529 = vld [vmem:[#allocation7 + $0x108] sm:$0xff]
    %v1530 = vld [vmem:[#allocation7 + $0x110] sm:$0xff]
    %v1531 = vld [vmem:[#allocation7 + $0x118] sm:$0xff]
    %v1532 = vld [vmem:[#allocation7 + $0x120] sm:$0xff]
    %v1533 = vld [vmem:[#allocation7 + $0x128] sm:$0xff]
    %v1534 = vld [vmem:[#allocation7 + $0x130] sm:$0xff]
    %v1535 = vld [vmem:[#allocation7 + $0x138] sm:$0xff]
    %v1536 = vld [vmem:[#allocation7 + $0x140] sm:$0xff]
    %v1537 = vld [vmem:[#allocation7 + $0x148] sm:$0xff]
    %v1538 = vld [vmem:[#allocation7 + $0x150] sm:$0xff]
    %v1539 = vld [vmem:[#allocation7 + $0x158] sm:$0xff]
    %v1540 = vld [vmem:[#allocation7 + $0x160] sm:$0xff]
    %v1541 = vld [vmem:[#allocation7 + $0x168] sm:$0xff]
    %v1542 = vld [vmem:[#allocation7 + $0x170] sm:$0xff]
    %v1543 = vld [vmem:[#allocation7 + $0x178] sm:$0xff]
    %v1544 = vld [vmem:[#allocation7 + $0x180] sm:$0xff]
    %v1545 = vld [vmem:[#allocation7 + $0x188] sm:$0xff]
    %v1546 = vld [vmem:[#allocation7 + $0x190] sm:$0xff]
    %v1547 = vld [vmem:[#allocation7 + $0x198] sm:$0xff]
    %v1548 = vld [vmem:[#allocation7 + $0x1a0] sm:$0xff]
    %v1549 = vld [vmem:[#allocation7 + $0x1a8] sm:$0xff]
    %v1550 = vld [vmem:[#allocation7 + $0x1b0] sm:$0xff]
    %v1551 = vld [vmem:[#allocation7 + $0x1b8] sm:$0xff]
    %v1552 = vld [vmem:[#allocation7 + $0x1c0] sm:$0xff]
    %v1553 = vld [vmem:[#allocation7 + $0x1c8] sm:$0xff]
    %v1554 = vld [vmem:[#allocation7 + $0x1d0] sm:$0xff]
    %v1555 = vld [vmem:[#allocation7 + $0x1d8] sm:$0xff]
    %v1556 = vld [vmem:[#allocation7 + $0x1e0] sm:$0xff]
    %v1557 = vld [vmem:[#allocation7 + $0x1e8] sm:$0xff]
    %v1558 = vld [vmem:[#allocation7 + $0x1f0] sm:$0xff]
    %v1559 = vld [vmem:[#allocation7 + $0x1f8] sm:$0xff]
    %v1560 = vld [vmem:[#allocation7 + $0x200] sm:$0xff]
    %v1561 = vld [vmem:[#allocation7 + $0x208] sm:$0xff]
    %v1562 = vld [vmem:[#allocation7 + $0x210] sm:$0xff]
    %v1563 = vld [vmem:[#allocation7 + $0x218] sm:$0xff]
    %v1564 = vld [vmem:[#allocation7 + $0x220] sm:$0xff]
    %v1565 = vld [vmem:[#allocation7 + $0x228] sm:$0xff]
    %v1566 = vld [vmem:[#allocation7 + $0x230] sm:$0xff]
    %v1567 = vld [vmem:[#allocation7 + $0x238] sm:$0xff]
    %v1568 = vld [vmem:[#allocation7 + $0x240] sm:$0xff]
    %v1569 = vld [vmem:[#allocation7 + $0x248] sm:$0xff]
    %v1570 = vld [vmem:[#allocation7 + $0x250] sm:$0xff]
    %v1571 = vld [vmem:[#allocation7 + $0x258] sm:$0xff]
    %v1572 = vld [vmem:[#allocation7 + $0x260] sm:$0xff]
    %v1573 = vld [vmem:[#allocation7 + $0x268] sm:$0xff]
    %v1574 = vld [vmem:[#allocation7 + $0x270] sm:$0xff]
    %v1575 = vld [vmem:[#allocation7 + $0x278] sm:$0xff]
    %v1576 = vld [vmem:[#allocation7 + $0x280] sm:$0xff]
    %v1577 = vld [vmem:[#allocation7 + $0x288] sm:$0xff]
    %v1578 = vld [vmem:[#allocation7 + $0x290] sm:$0xff]
    %v1579 = vld [vmem:[#allocation7 + $0x298] sm:$0xff]
    %v1580 = vld [vmem:[#allocation7 + $0x2a0] sm:$0xff]
    %v1581 = vld [vmem:[#allocation7 + $0x2a8] sm:$0xff]
    %v1582 = vld [vmem:[#allocation7 + $0x2b0] sm:$0xff]
    %v1583 = vld [vmem:[#allocation7 + $0x2b8] sm:$0xff]
    %v1584 = vld [vmem:[#allocation7 + $0x2c0] sm:$0xff]
    %v1585 = vld [vmem:[#allocation7 + $0x2c8] sm:$0xff]
    %v1586 = vld [vmem:[#allocation7 + $0x2d0] sm:$0xff]
    %v1587 = vld [vmem:[#allocation7 + $0x2d8] sm:$0xff]
    %v1588 = vld [vmem:[#allocation7 + $0x2e0] sm:$0xff]
    %v1589 = vld [vmem:[#allocation7 + $0x2e8] sm:$0xff]
    %v1590 = vld [vmem:[#allocation7 + $0x2f0] sm:$0xff]
    %v1591 = vld [vmem:[#allocation7 + $0x2f8] sm:$0xff]
    %v1592 = vld [vmem:[#allocation7 + $0x300] sm:$0xff]
    %v1593 = vld [vmem:[#allocation7 + $0x308] sm:$0xff]
    %v1594 = vld [vmem:[#allocation7 + $0x310] sm:$0xff]
    %v1595 = vld [vmem:[#allocation7 + $0x318] sm:$0xff]
    %v1596 = vld [vmem:[#allocation7 + $0x320] sm:$0xff]
    %v1597 = vld [vmem:[#allocation7 + $0x328] sm:$0xff]
    %v1598 = vld [vmem:[#allocation7 + $0x330] sm:$0xff]
    %v1599 = vld [vmem:[#allocation7 + $0x338] sm:$0xff]
    %v1600 = vld [vmem:[#allocation7 + $0x340] sm:$0xff]
    %v1601 = vld [vmem:[#allocation7 + $0x348] sm:$0xff]
    %v1602 = vld [vmem:[#allocation7 + $0x350] sm:$0xff]
    %v1603 = vld [vmem:[#allocation7 + $0x358] sm:$0xff]
    %v1604 = vld [vmem:[#allocation7 + $0x360] sm:$0xff]
    %v1605 = vld [vmem:[#allocation7 + $0x368] sm:$0xff]
    %v1606 = vld [vmem:[#allocation7 + $0x370] sm:$0xff]
    %v1607 = vld [vmem:[#allocation7 + $0x378] sm:$0xff]
    %v1608 = vld [vmem:[#allocation7 + $0x380] sm:$0xff]
    %v1609 = vld [vmem:[#allocation7 + $0x388] sm:$0xff]
    %v1610 = vld [vmem:[#allocation7 + $0x390] sm:$0xff]
    %v1611 = vld [vmem:[#allocation7 + $0x398] sm:$0xff]
    %v1612 = vld [vmem:[#allocation7 + $0x3a0] sm:$0xff]
    %v1613 = vld [vmem:[#allocation7 + $0x3a8] sm:$0xff]
    %v1614 = vld [vmem:[#allocation7 + $0x3b0] sm:$0xff]
    %v1615 = vld [vmem:[#allocation7 + $0x3b8] sm:$0xff]
    %v1616 = vld [vmem:[#allocation7 + $0x3c0] sm:$0xff]
    %v1617 = vld [vmem:[#allocation7 + $0x3c8] sm:$0xff]
    %v1618 = vld [vmem:[#allocation7 + $0x3d0] sm:$0xff]
    %v1619 = vld [vmem:[#allocation7 + $0x3d8] sm:$0xff]
    %v1620 = vld [vmem:[#allocation7 + $0x3e0] sm:$0xff]
    %v1621 = vld [vmem:[#allocation7 + $0x3e8] sm:$0xff]
    %v1622 = vld [vmem:[#allocation7 + $0x3f0] sm:$0xff]
    %v1623 = vld [vmem:[#allocation7 + $0x3f8] sm:$0xff]
    %v1624 = vld [vmem:[%s8] sm:$0xf]
    %v1626 = vlaneseq
    %v1627 = vshrl.u32 %v1626, 7
    %v1628 = vsub.s32 0, %v1627
    %v1629 = vrot.slane %v1624, %v1628
    %v1630 = vlaneseq
    %v1631 = vshrl.u32 %v1630, 7
    %v1632 = vsub.s32 1, %v1631
    %v1633 = vrot.slane %v1624, %v1632
    %v1634 = vlaneseq
    %v1635 = vshrl.u32 %v1634, 7
    %v1636 = vsub.s32 2, %v1635
    %v1637 = vrot.slane %v1624, %v1636
    %v1638 = vlaneseq
    %v1639 = vshrl.u32 %v1638, 7
    %v1640 = vsub.s32 3, %v1639
    %v1641 = vrot.slane %v1624, %v1640
    %v1774 = vunpack.c.l.b16 %v1496
    %v1775 = vunpack.c.h.b16 %v1496
    %v1776 = vunpack.c.l.b16 %v1497
    %v1777 = vunpack.c.h.b16 %v1497
    %v1778 = vunpack.c.l.b16 %v1498
    %v1779 = vunpack.c.h.b16 %v1498
    %v1780 = vunpack.c.l.b16 %v1499
    %v1781 = vunpack.c.h.b16 %v1499
    %v1782 = vunpack.c.l.b16 %v1500
    %v1783 = vunpack.c.h.b16 %v1500
    %v1784 = vunpack.c.l.b16 %v1501
    %v1785 = vunpack.c.h.b16 %v1501
    %v1786 = vunpack.c.l.b16 %v1502
    %v1787 = vunpack.c.h.b16 %v1502
    %v1788 = vunpack.c.l.b16 %v1503
    %v1789 = vunpack.c.h.b16 %v1503
    %v1790 = vunpack.c.l.b16 %v1504
    %v1791 = vunpack.c.h.b16 %v1504
    %v1792 = vunpack.c.l.b16 %v1505
    %v1793 = vunpack.c.h.b16 %v1505
    %v1794 = vunpack.c.l.b16 %v1506
    %v1795 = vunpack.c.h.b16 %v1506
    %v1796 = vunpack.c.l.b16 %v1507
    %v1797 = vunpack.c.h.b16 %v1507
    %v1798 = vunpack.c.l.b16 %v1508
    %v1799 = vunpack.c.h.b16 %v1508
    %v1800 = vunpack.c.l.b16 %v1509
    %v1801 = vunpack.c.h.b16 %v1509
    %v1802 = vunpack.c.l.b16 %v1510
    %v1803 = vunpack.c.h.b16 %v1510
    %v1804 = vunpack.c.l.b16 %v1511
    %v1805 = vunpack.c.h.b16 %v1511
    %v1806 = vunpack.c.l.b16 %v1512
    %v1807 = vunpack.c.h.b16 %v1512
    %v1808 = vunpack.c.l.b16 %v1513
    %v1809 = vunpack.c.h.b16 %v1513
    %v1810 = vunpack.c.l.b16 %v1514
    %v1811 = vunpack.c.h.b16 %v1514
    %v1812 = vunpack.c.l.b16 %v1515
    %v1813 = vunpack.c.h.b16 %v1515
    %v1814 = vunpack.c.l.b16 %v1516
    %v1815 = vunpack.c.h.b16 %v1516
    %v1816 = vunpack.c.l.b16 %v1517
    %v1817 = vunpack.c.h.b16 %v1517
    %v1818 = vunpack.c.l.b16 %v1518
    %v1819 = vunpack.c.h.b16 %v1518
    %v1820 = vunpack.c.l.b16 %v1519
    %v1821 = vunpack.c.h.b16 %v1519
    %v1822 = vunpack.c.l.b16 %v1520
    %v1823 = vunpack.c.h.b16 %v1520
    %v1824 = vunpack.c.l.b16 %v1521
    %v1825 = vunpack.c.h.b16 %v1521
    %v1826 = vunpack.c.l.b16 %v1522
    %v1827 = vunpack.c.h.b16 %v1522
    %v1828 = vunpack.c.l.b16 %v1523
    %v1829 = vunpack.c.h.b16 %v1523
    %v1830 = vunpack.c.l.b16 %v1524
    %v1831 = vunpack.c.h.b16 %v1524
    %v1832 = vunpack.c.l.b16 %v1525
    %v1833 = vunpack.c.h.b16 %v1525
    %v1834 = vunpack.c.l.b16 %v1526
    %v1835 = vunpack.c.h.b16 %v1526
    %v1836 = vunpack.c.l.b16 %v1527
    %v1837 = vunpack.c.h.b16 %v1527
    %v1838 = vunpack.c.l.b16 %v1528
    %v1839 = vunpack.c.h.b16 %v1528
    %v1840 = vunpack.c.l.b16 %v1529
    %v1841 = vunpack.c.h.b16 %v1529
    %v1842 = vunpack.c.l.b16 %v1530
    %v1843 = vunpack.c.h.b16 %v1530
    %v1844 = vunpack.c.l.b16 %v1531
    %v1845 = vunpack.c.h.b16 %v1531
    %v1846 = vunpack.c.l.b16 %v1532
    %v1847 = vunpack.c.h.b16 %v1532
    %v1848 = vunpack.c.l.b16 %v1533
    %v1849 = vunpack.c.h.b16 %v1533
    %v1850 = vunpack.c.l.b16 %v1534
    %v1851 = vunpack.c.h.b16 %v1534
    %v1852 = vunpack.c.l.b16 %v1535
    %v1853 = vunpack.c.h.b16 %v1535
    %v1854 = vunpack.c.l.b16 %v1536
    %v1855 = vunpack.c.h.b16 %v1536
    %v1856 = vunpack.c.l.b16 %v1537
    %v1857 = vunpack.c.h.b16 %v1537
    %v1858 = vunpack.c.l.b16 %v1538
    %v1859 = vunpack.c.h.b16 %v1538
    %v1860 = vunpack.c.l.b16 %v1539
    %v1861 = vunpack.c.h.b16 %v1539
    %v1862 = vunpack.c.l.b16 %v1540
    %v1863 = vunpack.c.h.b16 %v1540
    %v1864 = vunpack.c.l.b16 %v1541
    %v1865 = vunpack.c.h.b16 %v1541
    %v1866 = vunpack.c.l.b16 %v1542
    %v1867 = vunpack.c.h.b16 %v1542
    %v1868 = vunpack.c.l.b16 %v1543
    %v1869 = vunpack.c.h.b16 %v1543
    %v1870 = vunpack.c.l.b16 %v1544
    %v1871 = vunpack.c.h.b16 %v1544
    %v1872 = vunpack.c.l.b16 %v1545
    %v1873 = vunpack.c.h.b16 %v1545
    %v1874 = vunpack.c.l.b16 %v1546
    %v1875 = vunpack.c.h.b16 %v1546
    %v1876 = vunpack.c.l.b16 %v1547
    %v1877 = vunpack.c.h.b16 %v1547
    %v1878 = vunpack.c.l.b16 %v1548
    %v1879 = vunpack.c.h.b16 %v1548
    %v1880 = vunpack.c.l.b16 %v1549
    %v1881 = vunpack.c.h.b16 %v1549
    %v1882 = vunpack.c.l.b16 %v1550
    %v1883 = vunpack.c.h.b16 %v1550
    %v1884 = vunpack.c.l.b16 %v1551
    %v1885 = vunpack.c.h.b16 %v1551
    %v1886 = vunpack.c.l.b16 %v1552
    %v1887 = vunpack.c.h.b16 %v1552
    %v1888 = vunpack.c.l.b16 %v1553
    %v1889 = vunpack.c.h.b16 %v1553
    %v1890 = vunpack.c.l.b16 %v1554
    %v1891 = vunpack.c.h.b16 %v1554
    %v1892 = vunpack.c.l.b16 %v1555
    %v1893 = vunpack.c.h.b16 %v1555
    %v1894 = vunpack.c.l.b16 %v1556
    %v1895 = vunpack.c.h.b16 %v1556
    %v1896 = vunpack.c.l.b16 %v1557
    %v1897 = vunpack.c.h.b16 %v1557
    %v1898 = vunpack.c.l.b16 %v1558
    %v1899 = vunpack.c.h.b16 %v1558
    %v1900 = vunpack.c.l.b16 %v1559
    %v1901 = vunpack.c.h.b16 %v1559
    %v1902 = vunpack.c.l.b16 %v1560
    %v1903 = vunpack.c.h.b16 %v1560
    %v1904 = vunpack.c.l.b16 %v1561
    %v1905 = vunpack.c.h.b16 %v1561
    %v1906 = vunpack.c.l.b16 %v1562
    %v1907 = vunpack.c.h.b16 %v1562
    %v1908 = vunpack.c.l.b16 %v1563
    %v1909 = vunpack.c.h.b16 %v1563
    %v1910 = vunpack.c.l.b16 %v1564
    %v1911 = vunpack.c.h.b16 %v1564
    %v1912 = vunpack.c.l.b16 %v1565
    %v1913 = vunpack.c.h.b16 %v1565
    %v1914 = vunpack.c.l.b16 %v1566
    %v1915 = vunpack.c.h.b16 %v1566
    %v1916 = vunpack.c.l.b16 %v1567
    %v1917 = vunpack.c.h.b16 %v1567
    %v1918 = vunpack.c.l.b16 %v1568
    %v1919 = vunpack.c.h.b16 %v1568
    %v1920 = vunpack.c.l.b16 %v1569
    %v1921 = vunpack.c.h.b16 %v1569
    %v1922 = vunpack.c.l.b16 %v1570
    %v1923 = vunpack.c.h.b16 %v1570
    %v1924 = vunpack.c.l.b16 %v1571
    %v1925 = vunpack.c.h.b16 %v1571
    %v1926 = vunpack.c.l.b16 %v1572
    %v1927 = vunpack.c.h.b16 %v1572
    %v1928 = vunpack.c.l.b16 %v1573
    %v1929 = vunpack.c.h.b16 %v1573
    %v1930 = vunpack.c.l.b16 %v1574
    %v1931 = vunpack.c.h.b16 %v1574
    %v1932 = vunpack.c.l.b16 %v1575
    %v1933 = vunpack.c.h.b16 %v1575
    %v1934 = vunpack.c.l.b16 %v1576
    %v1935 = vunpack.c.h.b16 %v1576
    %v1936 = vunpack.c.l.b16 %v1577
    %v1937 = vunpack.c.h.b16 %v1577
    %v1938 = vunpack.c.l.b16 %v1578
    %v1939 = vunpack.c.h.b16 %v1578
    %v1940 = vunpack.c.l.b16 %v1579
    %v1941 = vunpack.c.h.b16 %v1579
    %v1942 = vunpack.c.l.b16 %v1580
    %v1943 = vunpack.c.h.b16 %v1580
    %v1944 = vunpack.c.l.b16 %v1581
    %v1945 = vunpack.c.h.b16 %v1581
    %v1946 = vunpack.c.l.b16 %v1582
    %v1947 = vunpack.c.h.b16 %v1582
    %v1948 = vunpack.c.l.b16 %v1583
    %v1949 = vunpack.c.h.b16 %v1583
    %v1950 = vunpack.c.l.b16 %v1584
    %v1951 = vunpack.c.h.b16 %v1584
    %v1952 = vunpack.c.l.b16 %v1585
    %v1953 = vunpack.c.h.b16 %v1585
    %v1954 = vunpack.c.l.b16 %v1586
    %v1955 = vunpack.c.h.b16 %v1586
    %v1956 = vunpack.c.l.b16 %v1587
    %v1957 = vunpack.c.h.b16 %v1587
    %v1958 = vunpack.c.l.b16 %v1588
    %v1959 = vunpack.c.h.b16 %v1588
    %v1960 = vunpack.c.l.b16 %v1589
    %v1961 = vunpack.c.h.b16 %v1589
    %v1962 = vunpack.c.l.b16 %v1590
    %v1963 = vunpack.c.h.b16 %v1590
    %v1964 = vunpack.c.l.b16 %v1591
    %v1965 = vunpack.c.h.b16 %v1591
    %v1966 = vunpack.c.l.b16 %v1592
    %v1967 = vunpack.c.h.b16 %v1592
    %v1968 = vunpack.c.l.b16 %v1593
    %v1969 = vunpack.c.h.b16 %v1593
    %v1970 = vunpack.c.l.b16 %v1594
    %v1971 = vunpack.c.h.b16 %v1594
    %v1972 = vunpack.c.l.b16 %v1595
    %v1973 = vunpack.c.h.b16 %v1595
    %v1974 = vunpack.c.l.b16 %v1596
    %v1975 = vunpack.c.h.b16 %v1596
    %v1976 = vunpack.c.l.b16 %v1597
    %v1977 = vunpack.c.h.b16 %v1597
    %v1978 = vunpack.c.l.b16 %v1598
    %v1979 = vunpack.c.h.b16 %v1598
    %v1980 = vunpack.c.l.b16 %v1599
    %v1981 = vunpack.c.h.b16 %v1599
    %v1982 = vunpack.c.l.b16 %v1600
    %v1983 = vunpack.c.h.b16 %v1600
    %v1984 = vunpack.c.l.b16 %v1601
    %v1985 = vunpack.c.h.b16 %v1601
    %v1986 = vunpack.c.l.b16 %v1602
    %v1987 = vunpack.c.h.b16 %v1602
    %v1988 = vunpack.c.l.b16 %v1603
    %v1989 = vunpack.c.h.b16 %v1603
    %v1990 = vunpack.c.l.b16 %v1604
    %v1991 = vunpack.c.h.b16 %v1604
    %v1992 = vunpack.c.l.b16 %v1605
    %v1993 = vunpack.c.h.b16 %v1605
    %v1994 = vunpack.c.l.b16 %v1606
    %v1995 = vunpack.c.h.b16 %v1606
    %v1996 = vunpack.c.l.b16 %v1607
    %v1997 = vunpack.c.h.b16 %v1607
    %v1998 = vunpack.c.l.b16 %v1608
    %v1999 = vunpack.c.h.b16 %v1608
    %v2000 = vunpack.c.l.b16 %v1609
    %v2001 = vunpack.c.h.b16 %v1609
    %v2002 = vunpack.c.l.b16 %v1610
    %v2003 = vunpack.c.h.b16 %v1610
    %v2004 = vunpack.c.l.b16 %v1611
    %v2005 = vunpack.c.h.b16 %v1611
    %v2006 = vunpack.c.l.b16 %v1612
    %v2007 = vunpack.c.h.b16 %v1612
    %v2008 = vunpack.c.l.b16 %v1613
    %v2009 = vunpack.c.h.b16 %v1613
    %v2010 = vunpack.c.l.b16 %v1614
    %v2011 = vunpack.c.h.b16 %v1614
    %v2012 = vunpack.c.l.b16 %v1615
    %v2013 = vunpack.c.h.b16 %v1615
    %v2014 = vunpack.c.l.b16 %v1616
    %v2015 = vunpack.c.h.b16 %v1616
    %v2016 = vunpack.c.l.b16 %v1617
    %v2017 = vunpack.c.h.b16 %v1617
    %v2018 = vunpack.c.l.b16 %v1618
    %v2019 = vunpack.c.h.b16 %v1618
    %v2020 = vunpack.c.l.b16 %v1619
    %v2021 = vunpack.c.h.b16 %v1619
    %v2022 = vunpack.c.l.b16 %v1620
    %v2023 = vunpack.c.h.b16 %v1620
    %v2024 = vunpack.c.l.b16 %v1621
    %v2025 = vunpack.c.h.b16 %v1621
    %v2026 = vunpack.c.l.b16 %v1622
    %v2027 = vunpack.c.h.b16 %v1622
    %v2028 = vunpack.c.l.b16 %v1623
    %v2029 = vunpack.c.h.b16 %v1623
    %v2030 = vpack.c.b16 %v1778, %v1774
    %v2031 = vpack.c.b16 %v1779, %v1775
    %v2032 = vpack.c.b16 %v1780, %v1776
    %v2033 = vpack.c.b16 %v1781, %v1777
    %v2034 = vpack.c.b16 %v1786, %v1782
    %v2035 = vpack.c.b16 %v1787, %v1783
    %v2036 = vpack.c.b16 %v1788, %v1784
    %v2037 = vpack.c.b16 %v1789, %v1785
    %v2038 = vpack.c.b16 %v1794, %v1790
    %v2039 = vpack.c.b16 %v1795, %v1791
    %v2040 = vpack.c.b16 %v1796, %v1792
    %v2041 = vpack.c.b16 %v1797, %v1793
    %v2042 = vpack.c.b16 %v1802, %v1798
    %v2043 = vpack.c.b16 %v1803, %v1799
    %v2044 = vpack.c.b16 %v1804, %v1800
    %v2045 = vpack.c.b16 %v1805, %v1801
    %v2046 = vpack.c.b16 %v1810, %v1806
    %v2047 = vpack.c.b16 %v1811, %v1807
    %v2048 = vpack.c.b16 %v1812, %v1808
    %v2049 = vpack.c.b16 %v1813, %v1809
    %v2050 = vpack.c.b16 %v1818, %v1814
    %v2051 = vpack.c.b16 %v1819, %v1815
    %v2052 = vpack.c.b16 %v1820, %v1816
    %v2053 = vpack.c.b16 %v1821, %v1817
    %v2054 = vpack.c.b16 %v1826, %v1822
    %v2055 = vpack.c.b16 %v1827, %v1823
    %v2056 = vpack.c.b16 %v1828, %v1824
    %v2057 = vpack.c.b16 %v1829, %v1825
    %v2058 = vpack.c.b16 %v1834, %v1830
    %v2059 = vpack.c.b16 %v1835, %v1831
    %v2060 = vpack.c.b16 %v1836, %v1832
    %v2061 = vpack.c.b16 %v1837, %v1833
    %v2062 = vpack.c.b16 %v1842, %v1838
    %v2063 = vpack.c.b16 %v1843, %v1839
    %v2064 = vpack.c.b16 %v1844, %v1840
    %v2065 = vpack.c.b16 %v1845, %v1841
    %v2066 = vpack.c.b16 %v1850, %v1846
    %v2067 = vpack.c.b16 %v1851, %v1847
    %v2068 = vpack.c.b16 %v1852, %v1848
    %v2069 = vpack.c.b16 %v1853, %v1849
    %v2070 = vpack.c.b16 %v1858, %v1854
    %v2071 = vpack.c.b16 %v1859, %v1855
    %v2072 = vpack.c.b16 %v1860, %v1856
    %v2073 = vpack.c.b16 %v1861, %v1857
    %v2074 = vpack.c.b16 %v1866, %v1862
    %v2075 = vpack.c.b16 %v1867, %v1863
    %v2076 = vpack.c.b16 %v1868, %v1864
    %v2077 = vpack.c.b16 %v1869, %v1865
    %v2078 = vpack.c.b16 %v1874, %v1870
    %v2079 = vpack.c.b16 %v1875, %v1871
    %v2080 = vpack.c.b16 %v1876, %v1872
    %v2081 = vpack.c.b16 %v1877, %v1873
    %v2082 = vpack.c.b16 %v1882, %v1878
    %v2083 = vpack.c.b16 %v1883, %v1879
    %v2084 = vpack.c.b16 %v1884, %v1880
    %v2085 = vpack.c.b16 %v1885, %v1881
    %v2086 = vpack.c.b16 %v1890, %v1886
    %v2087 = vpack.c.b16 %v1891, %v1887
    %v2088 = vpack.c.b16 %v1892, %v1888
    %v2089 = vpack.c.b16 %v1893, %v1889
    %v2090 = vpack.c.b16 %v1898, %v1894
    %v2091 = vpack.c.b16 %v1899, %v1895
    %v2092 = vpack.c.b16 %v1900, %v1896
    %v2093 = vpack.c.b16 %v1901, %v1897
    %v2094 = vpack.c.b16 %v1906, %v1902
    %v2095 = vpack.c.b16 %v1907, %v1903
    %v2096 = vpack.c.b16 %v1908, %v1904
    %v2097 = vpack.c.b16 %v1909, %v1905
    %v2098 = vpack.c.b16 %v1914, %v1910
    %v2099 = vpack.c.b16 %v1915, %v1911
    %v2100 = vpack.c.b16 %v1916, %v1912
    %v2101 = vpack.c.b16 %v1917, %v1913
    %v2102 = vpack.c.b16 %v1922, %v1918
    %v2103 = vpack.c.b16 %v1923, %v1919
    %v2104 = vpack.c.b16 %v1924, %v1920
    %v2105 = vpack.c.b16 %v1925, %v1921
    %v2106 = vpack.c.b16 %v1930, %v1926
    %v2107 = vpack.c.b16 %v1931, %v1927
    %v2108 = vpack.c.b16 %v1932, %v1928
    %v2109 = vpack.c.b16 %v1933, %v1929
    %v2110 = vpack.c.b16 %v1938, %v1934
    %v2111 = vpack.c.b16 %v1939, %v1935
    %v2112 = vpack.c.b16 %v1940, %v1936
    %v2113 = vpack.c.b16 %v1941, %v1937
    %v2114 = vpack.c.b16 %v1946, %v1942
    %v2115 = vpack.c.b16 %v1947, %v1943
    %v2116 = vpack.c.b16 %v1948, %v1944
    %v2117 = vpack.c.b16 %v1949, %v1945
    %v2118 = vpack.c.b16 %v1954, %v1950
    %v2119 = vpack.c.b16 %v1955, %v1951
    %v2120 = vpack.c.b16 %v1956, %v1952
    %v2121 = vpack.c.b16 %v1957, %v1953
    %v2122 = vpack.c.b16 %v1962, %v1958
    %v2123 = vpack.c.b16 %v1963, %v1959
    %v2124 = vpack.c.b16 %v1964, %v1960
    %v2125 = vpack.c.b16 %v1965, %v1961
    %v2126 = vpack.c.b16 %v1970, %v1966
    %v2127 = vpack.c.b16 %v1971, %v1967
    %v2128 = vpack.c.b16 %v1972, %v1968
    %v2129 = vpack.c.b16 %v1973, %v1969
    %v2130 = vpack.c.b16 %v1978, %v1974
    %v2131 = vpack.c.b16 %v1979, %v1975
    %v2132 = vpack.c.b16 %v1980, %v1976
    %v2133 = vpack.c.b16 %v1981, %v1977
    %v2134 = vpack.c.b16 %v1986, %v1982
    %v2135 = vpack.c.b16 %v1987, %v1983
    %v2136 = vpack.c.b16 %v1988, %v1984
    %v2137 = vpack.c.b16 %v1989, %v1985
    %v2138 = vpack.c.b16 %v1994, %v1990
    %v2139 = vpack.c.b16 %v1995, %v1991
    %v2140 = vpack.c.b16 %v1996, %v1992
    %v2141 = vpack.c.b16 %v1997, %v1993
    %v2142 = vpack.c.b16 %v2002, %v1998
    %v2143 = vpack.c.b16 %v2003, %v1999
    %v2144 = vpack.c.b16 %v2004, %v2000
    %v2145 = vpack.c.b16 %v2005, %v2001
    %v2146 = vpack.c.b16 %v2010, %v2006
    %v2147 = vpack.c.b16 %v2011, %v2007
    %v2148 = vpack.c.b16 %v2012, %v2008
    %v2149 = vpack.c.b16 %v2013, %v2009
    %v2150 = vpack.c.b16 %v2018, %v2014
    %v2151 = vpack.c.b16 %v2019, %v2015
    %v2152 = vpack.c.b16 %v2020, %v2016
    %v2153 = vpack.c.b16 %v2021, %v2017
    %v2154 = vpack.c.b16 %v2026, %v2022
    %v2155 = vpack.c.b16 %v2027, %v2023
    %v2156 = vpack.c.b16 %v2028, %v2024
    %v2157 = vpack.c.b16 %v2029, %v2025
    %2286 = vmatprep.subr.bf16.mxu0 %v2031
    %2287 = vmatpush1.bf16.msra.mxu0 %v2030
    %2288 = vmatprep.subr.bf16.mxu0 %v2035
    %2289 = vmatpush1.bf16.msra.mxu0 %v2034
    %2290 = vmatprep.subr.bf16.mxu0 %v2039
    %2291 = vmatpush1.bf16.msra.mxu0 %v2038
    %2292 = vmatprep.subr.bf16.mxu0 %v2043
    %2293 = vmatpush1.bf16.msra.mxu0 %v2042
    %2294 = vmatprep.subr.bf16.mxu0 %v2047
    %2295 = vmatpush1.bf16.msra.mxu0 %v2046
    %2296 = vmatprep.subr.bf16.mxu0 %v2051
    %2297 = vmatpush1.bf16.msra.mxu0 %v2050
    %2298 = vmatprep.subr.bf16.mxu0 %v2055
    %2299 = vmatpush1.bf16.msra.mxu0 %v2054
    %2300 = vmatprep.subr.bf16.mxu0 %v2059
    %2301 = vmatpush1.bf16.msra.mxu0 %v2058
    %2302 = vmatprep.subr.bf16.mxu0 %v2063
    %2303 = vmatpush1.bf16.msra.mxu0 %v2062
    %2304 = vmatprep.subr.bf16.mxu0 %v2067
    %2305 = vmatpush1.bf16.msra.mxu0 %v2066
    %2306 = vmatprep.subr.bf16.mxu0 %v2071
    %2307 = vmatpush1.bf16.msra.mxu0 %v2070
    %2308 = vmatprep.subr.bf16.mxu0 %v2075
    %2309 = vmatpush1.bf16.msra.mxu0 %v2074
    %2310 = vmatprep.subr.bf16.mxu0 %v2079
    %2311 = vmatpush1.bf16.msra.mxu0 %v2078
    %2312 = vmatprep.subr.bf16.mxu0 %v2083
    %2313 = vmatpush1.bf16.msra.mxu0 %v2082
    %2314 = vmatprep.subr.bf16.mxu0 %v2087
    %2315 = vmatpush1.bf16.msra.mxu0 %v2086
    %2316 = vmatprep.subr.bf16.mxu0 %v2091
    %2317 = vmatpush1.bf16.msra.mxu0 %v2090
    %2318 = vmatprep.mubr.bf16.mxu0 %v1493
    %2319 = vmatmul.mubr.bf16.gmra.mrb[0].mxu0 %v1492
    %v2320 = vpop.f32.mrb[0].mxu0
    %v2321 = vadd.f32 %v1629, %v2320
    %v2322 = vpop.f32.mrb[0].mxu0
    %v2323 = vadd.f32 %v1633, %v2322
    %v2324 = vpop.f32.mrb[0].mxu0
    %v2325 = vpop.f32.mrb[0].mxu0
    %2326 = vdwg.mxu0
    %2327 = vmatprep.subr.bf16.mxu0 %v2095
    %2328 = vmatpush1.bf16.msra.mxu0 %v2094
    %2329 = vmatprep.subr.bf16.mxu0 %v2099
    %2330 = vmatpush1.bf16.msra.mxu0 %v2098
    %2331 = vmatprep.subr.bf16.mxu0 %v2103
    %2332 = vmatpush1.bf16.msra.mxu0 %v2102
    %2333 = vmatprep.subr.bf16.mxu0 %v2107
    %2334 = vmatpush1.bf16.msra.mxu0 %v2106
    %2335 = vmatprep.subr.bf16.mxu0 %v2111
    %2336 = vmatpush1.bf16.msra.mxu0 %v2110
    %2337 = vmatprep.subr.bf16.mxu0 %v2115
    %2338 = vmatpush1.bf16.msra.mxu0 %v2114
    %2339 = vmatprep.subr.bf16.mxu0 %v2119
    %2340 = vmatpush1.bf16.msra.mxu0 %v2118
    %2341 = vmatprep.subr.bf16.mxu0 %v2123
    %2342 = vmatpush1.bf16.msra.mxu0 %v2122
    %2343 = vmatprep.subr.bf16.mxu0 %v2127
    %2344 = vmatpush1.bf16.msra.mxu0 %v2126
    %2345 = vmatprep.subr.bf16.mxu0 %v2131
    %2346 = vmatpush1.bf16.msra.mxu0 %v2130
    %2347 = vmatprep.subr.bf16.mxu0 %v2135
    %2348 = vmatpush1.bf16.msra.mxu0 %v2134
    %2349 = vmatprep.subr.bf16.mxu0 %v2139
    %2350 = vmatpush1.bf16.msra.mxu0 %v2138
    %2351 = vmatprep.subr.bf16.mxu0 %v2143
    %2352 = vmatpush1.bf16.msra.mxu0 %v2142
    %2353 = vmatprep.subr.bf16.mxu0 %v2147
    %2354 = vmatpush1.bf16.msra.mxu0 %v2146
    %2355 = vmatprep.subr.bf16.mxu0 %v2151
    %2356 = vmatpush1.bf16.msra.mxu0 %v2150
    %2357 = vmatprep.subr.bf16.mxu0 %v2155
    %2358 = vmatpush1.bf16.msra.mxu0 %v2154
    %2359 = vmatprep.mubr.bf16.mxu0 %v1495
    %2360 = vmatmul.mubr.bf16.gmra.mrb[0].mxu0 %v1494
    %v2361 = vpop.f32.mrb[0].mxu0
    %v2362 = vadd.f32 %v2321, %v2361
    %v2363 = vpop.f32.mrb[0].mxu0
    %v2364 = vadd.f32 %v2323, %v2363
    %v2365 = vpop.f32.mrb[0].mxu0
    %v2366 = vpop.f32.mrb[0].mxu0
    %2367 = vdwg.mxu0
    %2368 = vmatprep.subr.bf16.mxu0 %v2033
    %2369 = vmatpush1.bf16.msra.mxu0 %v2032
    %2370 = vmatprep.subr.bf16.mxu0 %v2037
    %2371 = vmatpush1.bf16.msra.mxu0 %v2036
    %2372 = vmatprep.subr.bf16.mxu0 %v2041
    %2373 = vmatpush1.bf16.msra.mxu0 %v2040
    %2374 = vmatprep.subr.bf16.mxu0 %v2045
    %2375 = vmatpush1.bf16.msra.mxu0 %v2044
    %2376 = vmatprep.subr.bf16.mxu0 %v2049
    %2377 = vmatpush1.bf16.msra.mxu0 %v2048
    %2378 = vmatprep.subr.bf16.mxu0 %v2053
    %2379 = vmatpush1.bf16.msra.mxu0 %v2052
    %2380 = vmatprep.subr.bf16.mxu0 %v2057
    %2381 = vmatpush1.bf16.msra.mxu0 %v2056
    %2382 = vmatprep.subr.bf16.mxu0 %v2061
    %2383 = vmatpush1.bf16.msra.mxu0 %v2060
    %2384 = vmatprep.subr.bf16.mxu0 %v2065
    %2385 = vmatpush1.bf16.msra.mxu0 %v2064
    %2386 = vmatprep.subr.bf16.mxu0 %v2069
    %2387 = vmatpush1.bf16.msra.mxu0 %v2068
    %2388 = vmatprep.subr.bf16.mxu0 %v2073
    %2389 = vmatpush1.bf16.msra.mxu0 %v2072
    %2390 = vmatprep.subr.bf16.mxu0 %v2077
    %2391 = vmatpush1.bf16.msra.mxu0 %v2076
    %2392 = vmatprep.subr.bf16.mxu0 %v2081
    %2393 = vmatpush1.bf16.msra.mxu0 %v2080
    %2394 = vmatprep.subr.bf16.mxu0 %v2085
    %2395 = vmatpush1.bf16.msra.mxu0 %v2084
    %2396 = vmatprep.subr.bf16.mxu0 %v2089
    %2397 = vmatpush1.bf16.msra.mxu0 %v2088
    %2398 = vmatprep.subr.bf16.mxu0 %v2093
    %2399 = vmatpush1.bf16.msra.mxu0 %v2092
    %2400 = vmatprep.mubr.bf16.mxu0 %v1493
    %2401 = vmatmul.mubr.bf16.gmra.mrb[0].mxu0 %v1492
    %v2402 = vpop.f32.mrb[0].mxu0
    %v2403 = vadd.f32 %v1637, %v2402
    %v2404 = vpop.f32.mrb[0].mxu0
    %v2405 = vadd.f32 %v1641, %v2404
    %v2406 = vpop.f32.mrb[0].mxu0
    %v2407 = vpop.f32.mrb[0].mxu0
    %2408 = vdwg.mxu0
    %2409 = vmatprep.subr.bf16.mxu0 %v2097
    %2410 = vmatpush1.bf16.msra.mxu0 %v2096
    %2411 = vmatprep.subr.bf16.mxu0 %v2101
    %2412 = vmatpush1.bf16.msra.mxu0 %v2100
    %2413 = vmatprep.subr.bf16.mxu0 %v2105
    %2414 = vmatpush1.bf16.msra.mxu0 %v2104
    %2415 = vmatprep.subr.bf16.mxu0 %v2109
    %2416 = vmatpush1.bf16.msra.mxu0 %v2108
    %2417 = vmatprep.subr.bf16.mxu0 %v2113
    %2418 = vmatpush1.bf16.msra.mxu0 %v2112
    %2419 = vmatprep.subr.bf16.mxu0 %v2117
    %2420 = vmatpush1.bf16.msra.mxu0 %v2116
    %2421 = vmatprep.subr.bf16.mxu0 %v2121
    %2422 = vmatpush1.bf16.msra.mxu0 %v2120
    %2423 = vmatprep.subr.bf16.mxu0 %v2125
    %2424 = vmatpush1.bf16.msra.mxu0 %v2124
    %2425 = vmatprep.subr.bf16.mxu0 %v2129
    %2426 = vmatpush1.bf16.msra.mxu0 %v2128
    %2427 = vmatprep.subr.bf16.mxu0 %v2133
    %2428 = vmatpush1.bf16.msra.mxu0 %v2132
    %2429 = vmatprep.subr.bf16.mxu0 %v2137
    %2430 = vmatpush1.bf16.msra.mxu0 %v2136
    %2431 = vmatprep.subr.bf16.mxu0 %v2141
    %2432 = vmatpush1.bf16.msra.mxu0 %v2140
    %2433 = vmatprep.subr.bf16.mxu0 %v2145
    %2434 = vmatpush1.bf16.msra.mxu0 %v2144
    %2435 = vmatprep.subr.bf16.mxu0 %v2149
    %2436 = vmatpush1.bf16.msra.mxu0 %v2148
    %2437 = vmatprep.subr.bf16.mxu0 %v2153
    %2438 = vmatpush1.bf16.msra.mxu0 %v2152
    %2439 = vmatprep.subr.bf16.mxu0 %v2157
    %2440 = vmatpush1.bf16.msra.mxu0 %v2156
    %2441 = vmatprep.mubr.bf16.mxu0 %v1495
    %2442 = vmatmul.mubr.bf16.gmra.mrb[0].mxu0 %v1494
    %v2443 = vpop.f32.mrb[0].mxu0
    %v2444 = vadd.f32 %v2403, %v2443
    %v2445 = vpop.f32.mrb[0].mxu0
    %v2446 = vadd.f32 %v2405, %v2445
    %v2447 = vpop.f32.mrb[0].mxu0
    %v2448 = vpop.f32.mrb[0].mxu0
    %2449 = vdwg.mxu0
    %v2450 = vmax.f32 %v2362, 0.0
    %v2451 = vmax.f32 %v2364, 0.0
    %v2452 = vmax.f32 %v2444, 0.0
    %v2453 = vmax.f32 %v2446, 0.0
    %v2454 = vpack.c.bf16 %v2450, %v2450
    %v2455 = vpack.c.bf16 %v2451, %v2451
    %v2456 = vpack.c.bf16 %v2452, %v2452
    %v2457 = vpack.c.bf16 %v2453, %v2453
    %v2458 = vld [vmem:[#allocation8] sm:$0xff]
    %v2459 = vld [vmem:[#allocation8 + $0x8] sm:$0xff]
    %v2460 = vld [vmem:[#allocation8 + $0x10] sm:$0xff]
    %v2461 = vld [vmem:[#allocation8 + $0x18] sm:$0xff]
    %v2462 = vld [vmem:[#allocation8 + $0x20] sm:$0xff]
    %v2463 = vld [vmem:[#allocation8 + $0x28] sm:$0xff]
    %v2464 = vld [vmem:[#allocation8 + $0x30] sm:$0xff]
    %v2465 = vld [vmem:[#allocation8 + $0x38] sm:$0xff]
    %v2466 = vld [vmem:[#allocation8 + $0x40] sm:$0xff]
    %v2467 = vld [vmem:[#allocation8 + $0x48] sm:$0xff]
    %v2468 = vld [vmem:[#allocation8 + $0x50] sm:$0xff]
    %v2469 = vld [vmem:[#allocation8 + $0x58] sm:$0xff]
    %v2470 = vld [vmem:[#allocation8 + $0x60] sm:$0xff]
    %v2471 = vld [vmem:[#allocation8 + $0x68] sm:$0xff]
    %v2472 = vld [vmem:[#allocation8 + $0x70] sm:$0xff]
    %v2473 = vld [vmem:[#allocation8 + $0x78] sm:$0xff]
    %v2474 = vld [vmem:[#allocation8 + $0x80] sm:$0xff]
    %v2475 = vld [vmem:[#allocation8 + $0x88] sm:$0xff]
    %v2476 = vld [vmem:[#allocation8 + $0x90] sm:$0xff]
    %v2477 = vld [vmem:[#allocation8 + $0x98] sm:$0xff]
    %v2478 = vld [vmem:[#allocation8 + $0xa0] sm:$0xff]
    %v2479 = vld [vmem:[#allocation8 + $0xa8] sm:$0xff]
    %v2480 = vld [vmem:[#allocation8 + $0xb0] sm:$0xff]
    %v2481 = vld [vmem:[#allocation8 + $0xb8] sm:$0xff]
    %v2482 = vld [vmem:[#allocation8 + $0xc0] sm:$0xff]
    %v2483 = vld [vmem:[#allocation8 + $0xc8] sm:$0xff]
    %v2484 = vld [vmem:[#allocation8 + $0xd0] sm:$0xff]
    %v2485 = vld [vmem:[#allocation8 + $0xd8] sm:$0xff]
    %v2486 = vld [vmem:[#allocation8 + $0xe0] sm:$0xff]
    %v2487 = vld [vmem:[#allocation8 + $0xe8] sm:$0xff]
    %v2488 = vld [vmem:[#allocation8 + $0xf0] sm:$0xff]
    %v2489 = vld [vmem:[#allocation8 + $0xf8] sm:$0xff]
    %v2490 = vld [vmem:[#allocation8 + $0x100] sm:$0xff]
    %v2491 = vld [vmem:[#allocation8 + $0x108] sm:$0xff]
    %v2492 = vld [vmem:[#allocation8 + $0x110] sm:$0xff]
    %v2493 = vld [vmem:[#allocation8 + $0x118] sm:$0xff]
    %v2494 = vld [vmem:[#allocation8 + $0x120] sm:$0xff]
    %v2495 = vld [vmem:[#allocation8 + $0x128] sm:$0xff]
    %v2496 = vld [vmem:[#allocation8 + $0x130] sm:$0xff]
    %v2497 = vld [vmem:[#allocation8 + $0x138] sm:$0xff]
    %v2498 = vld [vmem:[#allocation8 + $0x140] sm:$0xff]
    %v2499 = vld [vmem:[#allocation8 + $0x148] sm:$0xff]
    %v2500 = vld [vmem:[#allocation8 + $0x150] sm:$0xff]
    %v2501 = vld [vmem:[#allocation8 + $0x158] sm:$0xff]
    %v2502 = vld [vmem:[#allocation8 + $0x160] sm:$0xff]
    %v2503 = vld [vmem:[#allocation8 + $0x168] sm:$0xff]
    %v2504 = vld [vmem:[#allocation8 + $0x170] sm:$0xff]
    %v2505 = vld [vmem:[#allocation8 + $0x178] sm:$0xff]
    %v2506 = vld [vmem:[#allocation8 + $0x180] sm:$0xff]
    %v2507 = vld [vmem:[#allocation8 + $0x188] sm:$0xff]
    %v2508 = vld [vmem:[#allocation8 + $0x190] sm:$0xff]
    %v2509 = vld [vmem:[#allocation8 + $0x198] sm:$0xff]
    %v2510 = vld [vmem:[#allocation8 + $0x1a0] sm:$0xff]
    %v2511 = vld [vmem:[#allocation8 + $0x1a8] sm:$0xff]
    %v2512 = vld [vmem:[#allocation8 + $0x1b0] sm:$0xff]
    %v2513 = vld [vmem:[#allocation8 + $0x1b8] sm:$0xff]
    %v2514 = vld [vmem:[#allocation8 + $0x1c0] sm:$0xff]
    %v2515 = vld [vmem:[#allocation8 + $0x1c8] sm:$0xff]
    %v2516 = vld [vmem:[#allocation8 + $0x1d0] sm:$0xff]
    %v2517 = vld [vmem:[#allocation8 + $0x1d8] sm:$0xff]
    %v2518 = vld [vmem:[#allocation8 + $0x1e0] sm:$0xff]
    %v2519 = vld [vmem:[#allocation8 + $0x1e8] sm:$0xff]
    %v2520 = vld [vmem:[#allocation8 + $0x1f0] sm:$0xff]
    %v2521 = vld [vmem:[#allocation8 + $0x1f8] sm:$0xff]
    %v2522 = vld [vmem:[%s10] sm:$0x3]
    %v2524 = vlaneseq
    %v2525 = vshrl.u32 %v2524, 7
    %v2526 = vsub.s32 0, %v2525
    %v2527 = vrot.slane %v2522, %v2526
    %v2528 = vlaneseq
    %v2529 = vshrl.u32 %v2528, 7
    %v2530 = vsub.s32 1, %v2529
    %v2531 = vrot.slane %v2522, %v2530
    %v2598 = vunpack.c.l.b16 %v2458
    %v2599 = vunpack.c.h.b16 %v2458
    %v2600 = vunpack.c.l.b16 %v2459
    %v2601 = vunpack.c.h.b16 %v2459
    %v2602 = vunpack.c.l.b16 %v2460
    %v2603 = vunpack.c.h.b16 %v2460
    %v2604 = vunpack.c.l.b16 %v2461
    %v2605 = vunpack.c.h.b16 %v2461
    %v2606 = vunpack.c.l.b16 %v2462
    %v2607 = vunpack.c.h.b16 %v2462
    %v2608 = vunpack.c.l.b16 %v2463
    %v2609 = vunpack.c.h.b16 %v2463
    %v2610 = vunpack.c.l.b16 %v2464
    %v2611 = vunpack.c.h.b16 %v2464
    %v2612 = vunpack.c.l.b16 %v2465
    %v2613 = vunpack.c.h.b16 %v2465
    %v2614 = vunpack.c.l.b16 %v2466
    %v2615 = vunpack.c.h.b16 %v2466
    %v2616 = vunpack.c.l.b16 %v2467
    %v2617 = vunpack.c.h.b16 %v2467
    %v2618 = vunpack.c.l.b16 %v2468
    %v2619 = vunpack.c.h.b16 %v2468
    %v2620 = vunpack.c.l.b16 %v2469
    %v2621 = vunpack.c.h.b16 %v2469
    %v2622 = vunpack.c.l.b16 %v2470
    %v2623 = vunpack.c.h.b16 %v2470
    %v2624 = vunpack.c.l.b16 %v2471
    %v2625 = vunpack.c.h.b16 %v2471
    %v2626 = vunpack.c.l.b16 %v2472
    %v2627 = vunpack.c.h.b16 %v2472
    %v2628 = vunpack.c.l.b16 %v2473
    %v2629 = vunpack.c.h.b16 %v2473
    %v2630 = vunpack.c.l.b16 %v2474
    %v2631 = vunpack.c.h.b16 %v2474
    %v2632 = vunpack.c.l.b16 %v2475
    %v2633 = vunpack.c.h.b16 %v2475
    %v2634 = vunpack.c.l.b16 %v2476
    %v2635 = vunpack.c.h.b16 %v2476
    %v2636 = vunpack.c.l.b16 %v2477
    %v2637 = vunpack.c.h.b16 %v2477
    %v2638 = vunpack.c.l.b16 %v2478
    %v2639 = vunpack.c.h.b16 %v2478
    %v2640 = vunpack.c.l.b16 %v2479
    %v2641 = vunpack.c.h.b16 %v2479
    %v2642 = vunpack.c.l.b16 %v2480
    %v2643 = vunpack.c.h.b16 %v2480
    %v2644 = vunpack.c.l.b16 %v2481
    %v2645 = vunpack.c.h.b16 %v2481
    %v2646 = vunpack.c.l.b16 %v2482
    %v2647 = vunpack.c.h.b16 %v2482
    %v2648 = vunpack.c.l.b16 %v2483
    %v2649 = vunpack.c.h.b16 %v2483
    %v2650 = vunpack.c.l.b16 %v2484
    %v2651 = vunpack.c.h.b16 %v2484
    %v2652 = vunpack.c.l.b16 %v2485
    %v2653 = vunpack.c.h.b16 %v2485
    %v2654 = vunpack.c.l.b16 %v2486
    %v2655 = vunpack.c.h.b16 %v2486
    %v2656 = vunpack.c.l.b16 %v2487
    %v2657 = vunpack.c.h.b16 %v2487
    %v2658 = vunpack.c.l.b16 %v2488
    %v2659 = vunpack.c.h.b16 %v2488
    %v2660 = vunpack.c.l.b16 %v2489
    %v2661 = vunpack.c.h.b16 %v2489
    %v2662 = vunpack.c.l.b16 %v2490
    %v2663 = vunpack.c.h.b16 %v2490
    %v2664 = vunpack.c.l.b16 %v2491
    %v2665 = vunpack.c.h.b16 %v2491
    %v2666 = vunpack.c.l.b16 %v2492
    %v2667 = vunpack.c.h.b16 %v2492
    %v2668 = vunpack.c.l.b16 %v2493
    %v2669 = vunpack.c.h.b16 %v2493
    %v2670 = vunpack.c.l.b16 %v2494
    %v2671 = vunpack.c.h.b16 %v2494
    %v2672 = vunpack.c.l.b16 %v2495
    %v2673 = vunpack.c.h.b16 %v2495
    %v2674 = vunpack.c.l.b16 %v2496
    %v2675 = vunpack.c.h.b16 %v2496
    %v2676 = vunpack.c.l.b16 %v2497
    %v2677 = vunpack.c.h.b16 %v2497
    %v2678 = vunpack.c.l.b16 %v2498
    %v2679 = vunpack.c.h.b16 %v2498
    %v2680 = vunpack.c.l.b16 %v2499
    %v2681 = vunpack.c.h.b16 %v2499
    %v2682 = vunpack.c.l.b16 %v2500
    %v2683 = vunpack.c.h.b16 %v2500
    %v2684 = vunpack.c.l.b16 %v2501
    %v2685 = vunpack.c.h.b16 %v2501
    %v2686 = vunpack.c.l.b16 %v2502
    %v2687 = vunpack.c.h.b16 %v2502
    %v2688 = vunpack.c.l.b16 %v2503
    %v2689 = vunpack.c.h.b16 %v2503
    %v2690 = vunpack.c.l.b16 %v2504
    %v2691 = vunpack.c.h.b16 %v2504
    %v2692 = vunpack.c.l.b16 %v2505
    %v2693 = vunpack.c.h.b16 %v2505
    %v2694 = vunpack.c.l.b16 %v2506
    %v2695 = vunpack.c.h.b16 %v2506
    %v2696 = vunpack.c.l.b16 %v2507
    %v2697 = vunpack.c.h.b16 %v2507
    %v2698 = vunpack.c.l.b16 %v2508
    %v2699 = vunpack.c.h.b16 %v2508
    %v2700 = vunpack.c.l.b16 %v2509
    %v2701 = vunpack.c.h.b16 %v2509
    %v2702 = vunpack.c.l.b16 %v2510
    %v2703 = vunpack.c.h.b16 %v2510
    %v2704 = vunpack.c.l.b16 %v2511
    %v2705 = vunpack.c.h.b16 %v2511
    %v2706 = vunpack.c.l.b16 %v2512
    %v2707 = vunpack.c.h.b16 %v2512
    %v2708 = vunpack.c.l.b16 %v2513
    %v2709 = vunpack.c.h.b16 %v2513
    %v2710 = vunpack.c.l.b16 %v2514
    %v2711 = vunpack.c.h.b16 %v2514
    %v2712 = vunpack.c.l.b16 %v2515
    %v2713 = vunpack.c.h.b16 %v2515
    %v2714 = vunpack.c.l.b16 %v2516
    %v2715 = vunpack.c.h.b16 %v2516
    %v2716 = vunpack.c.l.b16 %v2517
    %v2717 = vunpack.c.h.b16 %v2517
    %v2718 = vunpack.c.l.b16 %v2518
    %v2719 = vunpack.c.h.b16 %v2518
    %v2720 = vunpack.c.l.b16 %v2519
    %v2721 = vunpack.c.h.b16 %v2519
    %v2722 = vunpack.c.l.b16 %v2520
    %v2723 = vunpack.c.h.b16 %v2520
    %v2724 = vunpack.c.l.b16 %v2521
    %v2725 = vunpack.c.h.b16 %v2521
    %v2726 = vpack.c.b16 %v2600, %v2598
    %v2727 = vpack.c.b16 %v2601, %v2599
    %v2728 = vpack.c.b16 %v2604, %v2602
    %v2729 = vpack.c.b16 %v2605, %v2603
    %v2730 = vpack.c.b16 %v2608, %v2606
    %v2731 = vpack.c.b16 %v2609, %v2607
    %v2732 = vpack.c.b16 %v2612, %v2610
    %v2733 = vpack.c.b16 %v2613, %v2611
    %v2734 = vpack.c.b16 %v2616, %v2614
    %v2735 = vpack.c.b16 %v2617, %v2615
    %v2736 = vpack.c.b16 %v2620, %v2618
    %v2737 = vpack.c.b16 %v2621, %v2619
    %v2738 = vpack.c.b16 %v2624, %v2622
    %v2739 = vpack.c.b16 %v2625, %v2623
    %v2740 = vpack.c.b16 %v2628, %v2626
    %v2741 = vpack.c.b16 %v2629, %v2627
    %v2742 = vpack.c.b16 %v2632, %v2630
    %v2743 = vpack.c.b16 %v2633, %v2631
    %v2744 = vpack.c.b16 %v2636, %v2634
    %v2745 = vpack.c.b16 %v2637, %v2635
    %v2746 = vpack.c.b16 %v2640, %v2638
    %v2747 = vpack.c.b16 %v2641, %v2639
    %v2748 = vpack.c.b16 %v2644, %v2642
    %v2749 = vpack.c.b16 %v2645, %v2643
    %v2750 = vpack.c.b16 %v2648, %v2646
    %v2751 = vpack.c.b16 %v2649, %v2647
    %v2752 = vpack.c.b16 %v2652, %v2650
    %v2753 = vpack.c.b16 %v2653, %v2651
    %v2754 = vpack.c.b16 %v2656, %v2654
    %v2755 = vpack.c.b16 %v2657, %v2655
    %v2756 = vpack.c.b16 %v2660, %v2658
    %v2757 = vpack.c.b16 %v2661, %v2659
    %v2758 = vpack.c.b16 %v2664, %v2662
    %v2759 = vpack.c.b16 %v2665, %v2663
    %v2760 = vpack.c.b16 %v2668, %v2666
    %v2761 = vpack.c.b16 %v2669, %v2667
    %v2762 = vpack.c.b16 %v2672, %v2670
    %v2763 = vpack.c.b16 %v2673, %v2671
    %v2764 = vpack.c.b16 %v2676, %v2674
    %v2765 = vpack.c.b16 %v2677, %v2675
    %v2766 = vpack.c.b16 %v2680, %v2678
    %v2767 = vpack.c.b16 %v2681, %v2679
    %v2768 = vpack.c.b16 %v2684, %v2682
    %v2769 = vpack.c.b16 %v2685, %v2683
    %v2770 = vpack.c.b16 %v2688, %v2686
    %v2771 = vpack.c.b16 %v2689, %v2687
    %v2772 = vpack.c.b16 %v2692, %v2690
    %v2773 = vpack.c.b16 %v2693, %v2691
    %v2774 = vpack.c.b16 %v2696, %v2694
    %v2775 = vpack.c.b16 %v2697, %v2695
    %v2776 = vpack.c.b16 %v2700, %v2698
    %v2777 = vpack.c.b16 %v2701, %v2699
    %v2778 = vpack.c.b16 %v2704, %v2702
    %v2779 = vpack.c.b16 %v2705, %v2703
    %v2780 = vpack.c.b16 %v2708, %v2706
    %v2781 = vpack.c.b16 %v2709, %v2707
    %v2782 = vpack.c.b16 %v2712, %v2710
    %v2783 = vpack.c.b16 %v2713, %v2711
    %v2784 = vpack.c.b16 %v2716, %v2714
    %v2785 = vpack.c.b16 %v2717, %v2715
    %v2786 = vpack.c.b16 %v2720, %v2718
    %v2787 = vpack.c.b16 %v2721, %v2719
    %v2788 = vpack.c.b16 %v2724, %v2722
    %v2789 = vpack.c.b16 %v2725, %v2723
    %2854 = vmatprep.subr.bf16.mxu0 %v2727
    %2855 = vmatpush1.bf16.msra.mxu0 %v2726
    %2856 = vmatprep.subr.bf16.mxu0 %v2729
    %2857 = vmatpush1.bf16.msra.mxu0 %v2728
    %2858 = vmatprep.subr.bf16.mxu0 %v2731
    %2859 = vmatpush1.bf16.msra.mxu0 %v2730
    %2860 = vmatprep.subr.bf16.mxu0 %v2733
    %2861 = vmatpush1.bf16.msra.mxu0 %v2732
    %2862 = vmatprep.subr.bf16.mxu0 %v2735
    %2863 = vmatpush1.bf16.msra.mxu0 %v2734
    %2864 = vmatprep.subr.bf16.mxu0 %v2737
    %2865 = vmatpush1.bf16.msra.mxu0 %v2736
    %2866 = vmatprep.subr.bf16.mxu0 %v2739
    %2867 = vmatpush1.bf16.msra.mxu0 %v2738
    %2868 = vmatprep.subr.bf16.mxu0 %v2741
    %2869 = vmatpush1.bf16.msra.mxu0 %v2740
    %2870 = vmatprep.subr.bf16.mxu0 %v2743
    %2871 = vmatpush1.bf16.msra.mxu0 %v2742
    %2872 = vmatprep.subr.bf16.mxu0 %v2745
    %2873 = vmatpush1.bf16.msra.mxu0 %v2744
    %2874 = vmatprep.subr.bf16.mxu0 %v2747
    %2875 = vmatpush1.bf16.msra.mxu0 %v2746
    %2876 = vmatprep.subr.bf16.mxu0 %v2749
    %2877 = vmatpush1.bf16.msra.mxu0 %v2748
    %2878 = vmatprep.subr.bf16.mxu0 %v2751
    %2879 = vmatpush1.bf16.msra.mxu0 %v2750
    %2880 = vmatprep.subr.bf16.mxu0 %v2753
    %2881 = vmatpush1.bf16.msra.mxu0 %v2752
    %2882 = vmatprep.subr.bf16.mxu0 %v2755
    %2883 = vmatpush1.bf16.msra.mxu0 %v2754
    %2884 = vmatprep.subr.bf16.mxu0 %v2757
    %2885 = vmatpush1.bf16.msra.mxu0 %v2756
    %2886 = vmatprep.mubr.bf16.mxu0 %v2455
    %2887 = vmatmul.mubr.bf16.gmra.mrb[0].mxu0 %v2454
    %v2888 = vpop.f32.mrb[0].mxu0
    %v2889 = vadd.f32 %v2527, %v2888
    %v2890 = vpop.f32.mrb[0].mxu0
    %v2891 = vadd.f32 %v2531, %v2890
    %v2892 = vpop.f32.mrb[0].mxu0
    %v2893 = vpop.f32.mrb[0].mxu0
    %2894 = vdwg.mxu0
    %2895 = vmatprep.subr.bf16.mxu0 %v2759
    %2896 = vmatpush1.bf16.msra.mxu0 %v2758
    %2897 = vmatprep.subr.bf16.mxu0 %v2761
    %2898 = vmatpush1.bf16.msra.mxu0 %v2760
    %2899 = vmatprep.subr.bf16.mxu0 %v2763
    %2900 = vmatpush1.bf16.msra.mxu0 %v2762
    %2901 = vmatprep.subr.bf16.mxu0 %v2765
    %2902 = vmatpush1.bf16.msra.mxu0 %v2764
    %2903 = vmatprep.subr.bf16.mxu0 %v2767
    %2904 = vmatpush1.bf16.msra.mxu0 %v2766
    %2905 = vmatprep.subr.bf16.mxu0 %v2769
    %2906 = vmatpush1.bf16.msra.mxu0 %v2768
    %2907 = vmatprep.subr.bf16.mxu0 %v2771
    %2908 = vmatpush1.bf16.msra.mxu0 %v2770
    %2909 = vmatprep.subr.bf16.mxu0 %v2773
    %2910 = vmatpush1.bf16.msra.mxu0 %v2772
    %2911 = vmatprep.subr.bf16.mxu0 %v2775
    %2912 = vmatpush1.bf16.msra.mxu0 %v2774
    %2913 = vmatprep.subr.bf16.mxu0 %v2777
    %2914 = vmatpush1.bf16.msra.mxu0 %v2776
    %2915 = vmatprep.subr.bf16.mxu0 %v2779
    %2916 = vmatpush1.bf16.msra.mxu0 %v2778
    %2917 = vmatprep.subr.bf16.mxu0 %v2781
    %2918 = vmatpush1.bf16.msra.mxu0 %v2780
    %2919 = vmatprep.subr.bf16.mxu0 %v2783
    %2920 = vmatpush1.bf16.msra.mxu0 %v2782
    %2921 = vmatprep.subr.bf16.mxu0 %v2785
    %2922 = vmatpush1.bf16.msra.mxu0 %v2784
    %2923 = vmatprep.subr.bf16.mxu0 %v2787
    %2924 = vmatpush1.bf16.msra.mxu0 %v2786
    %2925 = vmatprep.subr.bf16.mxu0 %v2789
    %2926 = vmatpush1.bf16.msra.mxu0 %v2788
    %2927 = vmatprep.mubr.bf16.mxu0 %v2457
    %2928 = vmatmul.mubr.bf16.gmra.mrb[0].mxu0 %v2456
    %v2929 = vpop.f32.mrb[0].mxu0
    %v2930 = vadd.f32 %v2889, %v2929
    %v2931 = vpop.f32.mrb[0].mxu0
    %v2932 = vadd.f32 %v2891, %v2931
    %v2933 = vpop.f32.mrb[0].mxu0
    %v2934 = vpop.f32.mrb[0].mxu0
    %2935 = vdwg.mxu0
    %2936 = vst [vmem:[#allocation15] sm:$0xff] %v2930
    %2937 = vst [vmem:[#allocation17] sm:$0xff] %v2932
    %v2938 = vld [vmem:[%s3] sm:$0xff]
    %v2939 = vmul.f32 %v2932, 0.5
    %v2940 = vmul.f32 %v2939, 1.442695
    %v2941 = vpow.pop %v2940
    %v2942 = vmul.f32 %v2938, %v2941
    %v2943 = vadd.f32 %v2930, %v2942
    %v2944 = vpack.c.bf16 %v2943, %v2943
    %v2945 = vld [vmem:[#allocation10] sm:$0xff]
    %v2946 = vld [vmem:[#allocation10 + $0x8] sm:$0xff]
    %v2947 = vld [vmem:[#allocation10 + $0x10] sm:$0xff]
    %v2948 = vld [vmem:[#allocation10 + $0x18] sm:$0xff]
    %v2949 = vld [vmem:[#allocation10 + $0x20] sm:$0xff]
    %v2950 = vld [vmem:[#allocation10 + $0x28] sm:$0xff]
    %v2951 = vld [vmem:[#allocation10 + $0x30] sm:$0xff]
    %v2952 = vld [vmem:[#allocation10 + $0x38] sm:$0xff]
    %v2953 = vld [vmem:[#allocation10 + $0x40] sm:$0xff]
    %v2954 = vld [vmem:[#allocation10 + $0x48] sm:$0xff]
    %v2955 = vld [vmem:[#allocation10 + $0x50] sm:$0xff]
    %v2956 = vld [vmem:[#allocation10 + $0x58] sm:$0xff]
    %v2957 = vld [vmem:[#allocation10 + $0x60] sm:$0xff]
    %v2958 = vld [vmem:[#allocation10 + $0x68] sm:$0xff]
    %v2959 = vld [vmem:[#allocation10 + $0x70] sm:$0xff]
    %v2960 = vld [vmem:[#allocation10 + $0x78] sm:$0xff]
    %v2961 = vld [vmem:[#allocation10 + $0x80] sm:$0xff]
    %v2962 = vld [vmem:[#allocation10 + $0x88] sm:$0xff]
    %v2963 = vld [vmem:[#allocation10 + $0x90] sm:$0xff]
    %v2964 = vld [vmem:[#allocation10 + $0x98] sm:$0xff]
    %v2965 = vld [vmem:[#allocation10 + $0xa0] sm:$0xff]
    %v2966 = vld [vmem:[#allocation10 + $0xa8] sm:$0xff]
    %v2967 = vld [vmem:[#allocation10 + $0xb0] sm:$0xff]
    %v2968 = vld [vmem:[#allocation10 + $0xb8] sm:$0xff]
    %v2969 = vld [vmem:[#allocation10 + $0xc0] sm:$0xff]
    %v2970 = vld [vmem:[#allocation10 + $0xc8] sm:$0xff]
    %v2971 = vld [vmem:[#allocation10 + $0xd0] sm:$0xff]
    %v2972 = vld [vmem:[#allocation10 + $0xd8] sm:$0xff]
    %v2973 = vld [vmem:[#allocation10 + $0xe0] sm:$0xff]
    %v2974 = vld [vmem:[#allocation10 + $0xe8] sm:$0xff]
    %v2975 = vld [vmem:[#allocation10 + $0xf0] sm:$0xff]
    %v2976 = vld [vmem:[#allocation10 + $0xf8] sm:$0xff]
    %v2977 = vld [vmem:[#allocation11] sm:$0xff]
    %v2978 = vld [vmem:[#allocation11 + $0x8] sm:$0xff]
    %v2979 = vld [vmem:[#allocation11 + $0x10] sm:$0xff]
    %v2980 = vld [vmem:[#allocation11 + $0x18] sm:$0xff]
    %v2981 = vld [vmem:[#allocation11 + $0x20] sm:$0xff]
    %v2982 = vld [vmem:[#allocation11 + $0x28] sm:$0xff]
    %v2983 = vld [vmem:[#allocation11 + $0x30] sm:$0xff]
    %v2984 = vld [vmem:[#allocation11 + $0x38] sm:$0xff]
    %v2985 = vld [vmem:[#allocation11 + $0x40] sm:$0xff]
    %v2986 = vld [vmem:[#allocation11 + $0x48] sm:$0xff]
    %v2987 = vld [vmem:[#allocation11 + $0x50] sm:$0xff]
    %v2988 = vld [vmem:[#allocation11 + $0x58] sm:$0xff]
    %v2989 = vld [vmem:[#allocation11 + $0x60] sm:$0xff]
    %v2990 = vld [vmem:[#allocation11 + $0x68] sm:$0xff]
    %v2991 = vld [vmem:[#allocation11 + $0x70] sm:$0xff]
    %v2992 = vld [vmem:[#allocation11 + $0x78] sm:$0xff]
    %v2993 = vld [vmem:[#allocation11 + $0x80] sm:$0xff]
    %v2994 = vld [vmem:[#allocation11 + $0x88] sm:$0xff]
    %v2995 = vld [vmem:[#allocation11 + $0x90] sm:$0xff]
    %v2996 = vld [vmem:[#allocation11 + $0x98] sm:$0xff]
    %v2997 = vld [vmem:[#allocation11 + $0xa0] sm:$0xff]
    %v2998 = vld [vmem:[#allocation11 + $0xa8] sm:$0xff]
    %v2999 = vld [vmem:[#allocation11 + $0xb0] sm:$0xff]
    %v3000 = vld [vmem:[#allocation11 + $0xb8] sm:$0xff]
    %v3001 = vld [vmem:[#allocation11 + $0xc0] sm:$0xff]
    %v3002 = vld [vmem:[#allocation11 + $0xc8] sm:$0xff]
    %v3003 = vld [vmem:[#allocation11 + $0xd0] sm:$0xff]
    %v3004 = vld [vmem:[#allocation11 + $0xd8] sm:$0xff]
    %v3005 = vld [vmem:[#allocation11 + $0xe0] sm:$0xff]
    %v3006 = vld [vmem:[#allocation11 + $0xe8] sm:$0xff]
    %v3007 = vld [vmem:[#allocation11 + $0xf0] sm:$0xff]
    %v3008 = vld [vmem:[#allocation11 + $0xf8] sm:$0xff]
    %v3041 = vunpack.c.l.b16 %v2977
    %v3042 = vunpack.c.h.b16 %v2977
    %v3043 = vunpack.c.l.b16 %v2978
    %v3044 = vunpack.c.h.b16 %v2978
    %v3045 = vunpack.c.l.b16 %v2979
    %v3046 = vunpack.c.h.b16 %v2979
    %v3047 = vunpack.c.l.b16 %v2980
    %v3048 = vunpack.c.h.b16 %v2980
    %v3049 = vunpack.c.l.b16 %v2981
    %v3050 = vunpack.c.h.b16 %v2981
    %v3051 = vunpack.c.l.b16 %v2982
    %v3052 = vunpack.c.h.b16 %v2982
    %v3053 = vunpack.c.l.b16 %v2983
    %v3054 = vunpack.c.h.b16 %v2983
    %v3055 = vunpack.c.l.b16 %v2984
    %v3056 = vunpack.c.h.b16 %v2984
    %v3057 = vunpack.c.l.b16 %v2985
    %v3058 = vunpack.c.h.b16 %v2985
    %v3059 = vunpack.c.l.b16 %v2986
    %v3060 = vunpack.c.h.b16 %v2986
    %v3061 = vunpack.c.l.b16 %v2987
    %v3062 = vunpack.c.h.b16 %v2987
    %v3063 = vunpack.c.l.b16 %v2988
    %v3064 = vunpack.c.h.b16 %v2988
    %v3065 = vunpack.c.l.b16 %v2989
    %v3066 = vunpack.c.h.b16 %v2989
    %v3067 = vunpack.c.l.b16 %v2990
    %v3068 = vunpack.c.h.b16 %v2990
    %v3069 = vunpack.c.l.b16 %v2991
    %v3070 = vunpack.c.h.b16 %v2991
    %v3071 = vunpack.c.l.b16 %v2992
    %v3072 = vunpack.c.h.b16 %v2992
    %v3073 = vunpack.c.l.b16 %v2993
    %v3074 = vunpack.c.h.b16 %v2993
    %v3075 = vunpack.c.l.b16 %v2994
    %v3076 = vunpack.c.h.b16 %v2994
    %v3077 = vunpack.c.l.b16 %v2995
    %v3078 = vunpack.c.h.b16 %v2995
    %v3079 = vunpack.c.l.b16 %v2996
    %v3080 = vunpack.c.h.b16 %v2996
    %v3081 = vunpack.c.l.b16 %v2997
    %v3082 = vunpack.c.h.b16 %v2997
    %v3083 = vunpack.c.l.b16 %v2998
    %v3084 = vunpack.c.h.b16 %v2998
    %v3085 = vunpack.c.l.b16 %v2999
    %v3086 = vunpack.c.h.b16 %v2999
    %v3087 = vunpack.c.l.b16 %v3000
    %v3088 = vunpack.c.h.b16 %v3000
    %v3089 = vunpack.c.l.b16 %v3001
    %v3090 = vunpack.c.h.b16 %v3001
    %v3091 = vunpack.c.l.b16 %v3002
    %v3092 = vunpack.c.h.b16 %v3002
    %v3093 = vunpack.c.l.b16 %v3003
    %v3094 = vunpack.c.h.b16 %v3003
    %v3095 = vunpack.c.l.b16 %v3004
    %v3096 = vunpack.c.h.b16 %v3004
    %v3097 = vunpack.c.l.b16 %v3005
    %v3098 = vunpack.c.h.b16 %v3005
    %v3099 = vunpack.c.l.b16 %v3006
    %v3100 = vunpack.c.h.b16 %v3006
    %v3101 = vunpack.c.l.b16 %v3007
    %v3102 = vunpack.c.h.b16 %v3007
    %v3103 = vunpack.c.l.b16 %v3008
    %v3104 = vunpack.c.h.b16 %v3008
    %v3105 = vpack.c.b16 %v3045, %v3041
    %v3106 = vpack.c.b16 %v3046, %v3042
    %v3107 = vpack.c.b16 %v3047, %v3043
    %v3108 = vpack.c.b16 %v3048, %v3044
    %v3109 = vpack.c.b16 %v3053, %v3049
    %v3110 = vpack.c.b16 %v3054, %v3050
    %v3111 = vpack.c.b16 %v3055, %v3051
    %v3112 = vpack.c.b16 %v3056, %v3052
    %v3113 = vpack.c.b16 %v3061, %v3057
    %v3114 = vpack.c.b16 %v3062, %v3058
    %v3115 = vpack.c.b16 %v3063, %v3059
    %v3116 = vpack.c.b16 %v3064, %v3060
    %v3117 = vpack.c.b16 %v3069, %v3065
    %v3118 = vpack.c.b16 %v3070, %v3066
    %v3119 = vpack.c.b16 %v3071, %v3067
    %v3120 = vpack.c.b16 %v3072, %v3068
    %v3121 = vpack.c.b16 %v3077, %v3073
    %v3122 = vpack.c.b16 %v3078, %v3074
    %v3123 = vpack.c.b16 %v3079, %v3075
    %v3124 = vpack.c.b16 %v3080, %v3076
    %v3125 = vpack.c.b16 %v3085, %v3081
    %v3126 = vpack.c.b16 %v3086, %v3082
    %v3127 = vpack.c.b16 %v3087, %v3083
    %v3128 = vpack.c.b16 %v3088, %v3084
    %v3129 = vpack.c.b16 %v3093, %v3089
    %v3130 = vpack.c.b16 %v3094, %v3090
    %v3131 = vpack.c.b16 %v3095, %v3091
    %v3132 = vpack.c.b16 %v3096, %v3092
    %v3133 = vpack.c.b16 %v3101, %v3097
    %v3134 = vpack.c.b16 %v3102, %v3098
    %v3135 = vpack.c.b16 %v3103, %v3099
    %v3136 = vpack.c.b16 %v3104, %v3100
    %3169 = vmatprep.subr.bf16.mxu0 %v3106
    %3170 = vmatpush1.bf16.msra.mxu0 %v3105
    %3171 = vmatprep.subr.bf16.mxu0 %v3110
    %3172 = vmatpush1.bf16.msra.mxu0 %v3109
    %3173 = vmatprep.subr.bf16.mxu0 %v3114
    %3174 = vmatpush1.bf16.msra.mxu0 %v3113
    %3175 = vmatprep.subr.bf16.mxu0 %v3118
    %3176 = vmatpush1.bf16.msra.mxu0 %v3117
    %3177 = vmatprep.subr.bf16.mxu0 %v3122
    %3178 = vmatpush1.bf16.msra.mxu0 %v3121
    %3179 = vmatprep.subr.bf16.mxu0 %v3126
    %3180 = vmatpush1.bf16.msra.mxu0 %v3125
    %3181 = vmatprep.subr.bf16.mxu0 %v3130
    %3182 = vmatpush1.bf16.msra.mxu0 %v3129
    %3183 = vmatprep.subr.bf16.mxu0 %v3134
    %3184 = vmatpush1.bf16.msra.mxu0 %v3133
    %3185 = vmatprep.subr.bf16.mxu0 0
    %3186 = vmatpush1.bf16.msra.mxu0 0
    %3187 = vmatprep.subr.bf16.mxu0 0
    %3188 = vmatpush1.bf16.msra.mxu0 0
    %3189 = vmatprep.subr.bf16.mxu0 0
    %3190 = vmatpush1.bf16.msra.mxu0 0
    %3191 = vmatprep.subr.bf16.mxu0 0
    %3192 = vmatpush1.bf16.msra.mxu0 0
    %3193 = vmatprep.subr.bf16.mxu0 0
    %3194 = vmatpush1.bf16.msra.mxu0 0
    %3195 = vmatprep.subr.bf16.mxu0 0
    %3196 = vmatpush1.bf16.msra.mxu0 0
    %3197 = vmatprep.subr.bf16.mxu0 0
    %3198 = vmatpush1.bf16.msra.mxu0 0
    %3199 = vmatprep.subr.bf16.mxu0 0
    %3200 = vmatpush1.bf16.msra.mxu0 0
    %3201 = vmatprep.mubr.bf16.mxu0 0
    %3202 = vmatmul.mubr.bf16.gmra.mrb[0].mxu0 %v231
    %v3203 = vpop.f32.mrb[0].mxu0
    %v3204 = vadd.f32 0.0, %v3203
    %v3205 = vpop.f32.mrb[0].mxu0
    %v3206 = vadd.f32 0.0, %v3205
    %v3207 = vpop.f32.mrb[0].mxu0
    %v3208 = vpop.f32.mrb[0].mxu0
    %3209 = vdwg.mxu0
    %3210 = vmatprep.subr.bf16.mxu0 %v3108
    %3211 = vmatpush1.bf16.msra.mxu0 %v3107
    %3212 = vmatprep.subr.bf16.mxu0 %v3112
    %3213 = vmatpush1.bf16.msra.mxu0 %v3111
    %3214 = vmatprep.subr.bf16.mxu0 %v3116
    %3215 = vmatpush1.bf16.msra.mxu0 %v3115
    %3216 = vmatprep.subr.bf16.mxu0 %v3120
    %3217 = vmatpush1.bf16.msra.mxu0 %v3119
    %3218 = vmatprep.subr.bf16.mxu0 %v3124
    %3219 = vmatpush1.bf16.msra.mxu0 %v3123
    %3220 = vmatprep.subr.bf16.mxu0 %v3128
    %3221 = vmatpush1.bf16.msra.mxu0 %v3127
    %3222 = vmatprep.subr.bf16.mxu0 %v3132
    %3223 = vmatpush1.bf16.msra.mxu0 %v3131
    %3224 = vmatprep.subr.bf16.mxu0 %v3136
    %3225 = vmatpush1.bf16.msra.mxu0 %v3135
    %3226 = vmatprep.subr.bf16.mxu0 0
    %3227 = vmatpush1.bf16.msra.mxu0 0
    %3228 = vmatprep.subr.bf16.mxu0 0
    %3229 = vmatpush1.bf16.msra.mxu0 0
    %3230 = vmatprep.subr.bf16.mxu0 0
    %3231 = vmatpush1.bf16.msra.mxu0 0
    %3232 = vmatprep.subr.bf16.mxu0 0
    %3233 = vmatpush1.bf16.msra.mxu0 0
    %3234 = vmatprep.subr.bf16.mxu0 0
    %3235 = vmatpush1.bf16.msra.mxu0 0
    %3236 = vmatprep.subr.bf16.mxu0 0
    %3237 = vmatpush1.bf16.msra.mxu0 0
    %3238 = vmatprep.subr.bf16.mxu0 0
    %3239 = vmatpush1.bf16.msra.mxu0 0
    %3240 = vmatprep.subr.bf16.mxu0 0
    %3241 = vmatpush1.bf16.msra.mxu0 0
    %3242 = vmatprep.mubr.bf16.mxu0 0
    %3243 = vmatmul.mubr.bf16.gmra.mrb[0].mxu0 %v231
    %v3244 = vpop.f32.mrb[0].mxu0
    %v3245 = vadd.f32 0.0, %v3244
    %v3246 = vpop.f32.mrb[0].mxu0
    %v3247 = vadd.f32 0.0, %v3246
    %v3248 = vpop.f32.mrb[0].mxu0
    %v3249 = vpop.f32.mrb[0].mxu0
    %3250 = vdwg.mxu0
    %v3283 = vunpack.c.l.b16 %v2945
    %v3284 = vunpack.c.h.b16 %v2945
    %v3285 = vunpack.c.l.b16 %v2946
    %v3286 = vunpack.c.h.b16 %v2946
    %v3287 = vunpack.c.l.b16 %v2947
    %v3288 = vunpack.c.h.b16 %v2947
    %v3289 = vunpack.c.l.b16 %v2948
    %v3290 = vunpack.c.h.b16 %v2948
    %v3291 = vunpack.c.l.b16 %v2949
    %v3292 = vunpack.c.h.b16 %v2949
    %v3293 = vunpack.c.l.b16 %v2950
    %v3294 = vunpack.c.h.b16 %v2950
    %v3295 = vunpack.c.l.b16 %v2951
    %v3296 = vunpack.c.h.b16 %v2951
    %v3297 = vunpack.c.l.b16 %v2952
    %v3298 = vunpack.c.h.b16 %v2952
    %v3299 = vunpack.c.l.b16 %v2953
    %v3300 = vunpack.c.h.b16 %v2953
    %v3301 = vunpack.c.l.b16 %v2954
    %v3302 = vunpack.c.h.b16 %v2954
    %v3303 = vunpack.c.l.b16 %v2955
    %v3304 = vunpack.c.h.b16 %v2955
    %v3305 = vunpack.c.l.b16 %v2956
    %v3306 = vunpack.c.h.b16 %v2956
    %v3307 = vunpack.c.l.b16 %v2957
    %v3308 = vunpack.c.h.b16 %v2957
    %v3309 = vunpack.c.l.b16 %v2958
    %v3310 = vunpack.c.h.b16 %v2958
    %v3311 = vunpack.c.l.b16 %v2959
    %v3312 = vunpack.c.h.b16 %v2959
    %v3313 = vunpack.c.l.b16 %v2960
    %v3314 = vunpack.c.h.b16 %v2960
    %v3315 = vunpack.c.l.b16 %v2961
    %v3316 = vunpack.c.h.b16 %v2961
    %v3317 = vunpack.c.l.b16 %v2962
    %v3318 = vunpack.c.h.b16 %v2962
    %v3319 = vunpack.c.l.b16 %v2963
    %v3320 = vunpack.c.h.b16 %v2963
    %v3321 = vunpack.c.l.b16 %v2964
    %v3322 = vunpack.c.h.b16 %v2964
    %v3323 = vunpack.c.l.b16 %v2965
    %v3324 = vunpack.c.h.b16 %v2965
    %v3325 = vunpack.c.l.b16 %v2966
    %v3326 = vunpack.c.h.b16 %v2966
    %v3327 = vunpack.c.l.b16 %v2967
    %v3328 = vunpack.c.h.b16 %v2967
    %v3329 = vunpack.c.l.b16 %v2968
    %v3330 = vunpack.c.h.b16 %v2968
    %v3331 = vunpack.c.l.b16 %v2969
    %v3332 = vunpack.c.h.b16 %v2969
    %v3333 = vunpack.c.l.b16 %v2970
    %v3334 = vunpack.c.h.b16 %v2970
    %v3335 = vunpack.c.l.b16 %v2971
    %v3336 = vunpack.c.h.b16 %v2971
    %v3337 = vunpack.c.l.b16 %v2972
    %v3338 = vunpack.c.h.b16 %v2972
    %v3339 = vunpack.c.l.b16 %v2973
    %v3340 = vunpack.c.h.b16 %v2973
    %v3341 = vunpack.c.l.b16 %v2974
    %v3342 = vunpack.c.h.b16 %v2974
    %v3343 = vunpack.c.l.b16 %v2975
    %v3344 = vunpack.c.h.b16 %v2975
    %v3345 = vunpack.c.l.b16 %v2976
    %v3346 = vunpack.c.h.b16 %v2976
    %v3347 = vpack.c.b16 %v3287, %v3283
    %v3348 = vpack.c.b16 %v3288, %v3284
    %v3349 = vpack.c.b16 %v3289, %v3285
    %v3350 = vpack.c.b16 %v3290, %v3286
    %v3351 = vpack.c.b16 %v3295, %v3291
    %v3352 = vpack.c.b16 %v3296, %v3292
    %v3353 = vpack.c.b16 %v3297, %v3293
    %v3354 = vpack.c.b16 %v3298, %v3294
    %v3355 = vpack.c.b16 %v3303, %v3299
    %v3356 = vpack.c.b16 %v3304, %v3300
    %v3357 = vpack.c.b16 %v3305, %v3301
    %v3358 = vpack.c.b16 %v3306, %v3302
    %v3359 = vpack.c.b16 %v3311, %v3307
    %v3360 = vpack.c.b16 %v3312, %v3308
    %v3361 = vpack.c.b16 %v3313, %v3309
    %v3362 = vpack.c.b16 %v3314, %v3310
    %v3363 = vpack.c.b16 %v3319, %v3315
    %v3364 = vpack.c.b16 %v3320, %v3316
    %v3365 = vpack.c.b16 %v3321, %v3317
    %v3366 = vpack.c.b16 %v3322, %v3318
    %v3367 = vpack.c.b16 %v3327, %v3323
    %v3368 = vpack.c.b16 %v3328, %v3324
    %v3369 = vpack.c.b16 %v3329, %v3325
    %v3370 = vpack.c.b16 %v3330, %v3326
    %v3371 = vpack.c.b16 %v3335, %v3331
    %v3372 = vpack.c.b16 %v3336, %v3332
    %v3373 = vpack.c.b16 %v3337, %v3333
    %v3374 = vpack.c.b16 %v3338, %v3334
    %v3375 = vpack.c.b16 %v3343, %v3339
    %v3376 = vpack.c.b16 %v3344, %v3340
    %v3377 = vpack.c.b16 %v3345, %v3341
    %v3378 = vpack.c.b16 %v3346, %v3342
    %3411 = vmatprep.subr.bf16.mxu0 %v3348
    %3412 = vmatpush1.bf16.msra.mxu0 %v3347
    %3413 = vmatprep.subr.bf16.mxu0 %v3352
    %3414 = vmatpush1.bf16.msra.mxu0 %v3351
    %3415 = vmatprep.subr.bf16.mxu0 %v3356
    %3416 = vmatpush1.bf16.msra.mxu0 %v3355
    %3417 = vmatprep.subr.bf16.mxu0 %v3360
    %3418 = vmatpush1.bf16.msra.mxu0 %v3359
    %3419 = vmatprep.subr.bf16.mxu0 %v3364
    %3420 = vmatpush1.bf16.msra.mxu0 %v3363
    %3421 = vmatprep.subr.bf16.mxu0 %v3368
    %3422 = vmatpush1.bf16.msra.mxu0 %v3367
    %3423 = vmatprep.subr.bf16.mxu0 %v3372
    %3424 = vmatpush1.bf16.msra.mxu0 %v3371
    %3425 = vmatprep.subr.bf16.mxu0 %v3376
    %3426 = vmatpush1.bf16.msra.mxu0 %v3375
    %3427 = vmatprep.subr.bf16.mxu0 0
    %3428 = vmatpush1.bf16.msra.mxu0 0
    %3429 = vmatprep.subr.bf16.mxu0 0
    %3430 = vmatpush1.bf16.msra.mxu0 0
    %3431 = vmatprep.subr.bf16.mxu0 0
    %3432 = vmatpush1.bf16.msra.mxu0 0
    %3433 = vmatprep.subr.bf16.mxu0 0
    %3434 = vmatpush1.bf16.msra.mxu0 0
    %3435 = vmatprep.subr.bf16.mxu0 0
    %3436 = vmatpush1.bf16.msra.mxu0 0
    %3437 = vmatprep.subr.bf16.mxu0 0
    %3438 = vmatpush1.bf16.msra.mxu0 0
    %3439 = vmatprep.subr.bf16.mxu0 0
    %3440 = vmatpush1.bf16.msra.mxu0 0
    %3441 = vmatprep.subr.bf16.mxu0 0
    %3442 = vmatpush1.bf16.msra.mxu0 0
    %3443 = vmatprep.mubr.bf16.mxu0 0
    %3444 = vmatmul.mubr.bf16.gmra.mrb[0].mxu0 %v2944
    %v3445 = vpop.f32.mrb[0].mxu0
    %v3446 = vadd.f32 %v3204, %v3445
    %v3447 = vpop.f32.mrb[0].mxu0
    %v3448 = vadd.f32 %v3206, %v3447
    %v3449 = vpop.f32.mrb[0].mxu0
    %v3450 = vpop.f32.mrb[0].mxu0
    %3451 = vdwg.mxu0
    %3452 = vmatprep.subr.bf16.mxu0 %v3350
    %3453 = vmatpush1.bf16.msra.mxu0 %v3349
    %3454 = vmatprep.subr.bf16.mxu0 %v3354
    %3455 = vmatpush1.bf16.msra.mxu0 %v3353
    %3456 = vmatprep.subr.bf16.mxu0 %v3358
    %3457 = vmatpush1.bf16.msra.mxu0 %v3357
    %3458 = vmatprep.subr.bf16.mxu0 %v3362
    %3459 = vmatpush1.bf16.msra.mxu0 %v3361
    %3460 = vmatprep.subr.bf16.mxu0 %v3366
    %3461 = vmatpush1.bf16.msra.mxu0 %v3365
    %3462 = vmatprep.subr.bf16.mxu0 %v3370
    %3463 = vmatpush1.bf16.msra.mxu0 %v3369
    %3464 = vmatprep.subr.bf16.mxu0 %v3374
    %3465 = vmatpush1.bf16.msra.mxu0 %v3373
    %3466 = vmatprep.subr.bf16.mxu0 %v3378
    %3467 = vmatpush1.bf16.msra.mxu0 %v3377
    %3468 = vmatprep.subr.bf16.mxu0 0
    %3469 = vmatpush1.bf16.msra.mxu0 0
    %3470 = vmatprep.subr.bf16.mxu0 0
    %3471 = vmatpush1.bf16.msra.mxu0 0
    %3472 = vmatprep.subr.bf16.mxu0 0
    %3473 = vmatpush1.bf16.msra.mxu0 0
    %3474 = vmatprep.subr.bf16.mxu0 0
    %3475 = vmatpush1.bf16.msra.mxu0 0
    %3476 = vmatprep.subr.bf16.mxu0 0
    %3477 = vmatpush1.bf16.msra.mxu0 0
    %3478 = vmatprep.subr.bf16.mxu0 0
    %3479 = vmatpush1.bf16.msra.mxu0 0
    %3480 = vmatprep.subr.bf16.mxu0 0
    %3481 = vmatpush1.bf16.msra.mxu0 0
    %3482 = vmatprep.subr.bf16.mxu0 0
    %3483 = vmatpush1.bf16.msra.mxu0 0
    %3484 = vmatprep.mubr.bf16.mxu0 0
    %3485 = vmatmul.mubr.bf16.gmra.mrb[0].mxu0 %v2944
    %v3486 = vpop.f32.mrb[0].mxu0
    %v3487 = vadd.f32 %v3245, %v3486
    %v3488 = vpop.f32.mrb[0].mxu0
    %v3489 = vadd.f32 %v3247, %v3488
    %v3490 = vpop.f32.mrb[0].mxu0
    %v3491 = vpop.f32.mrb[0].mxu0
    %3492 = vdwg.mxu0
    %v3493 = vld [vmem:[%s13] sm:$0xf]
    %v3495 = vlaneseq
    %v3496 = vshrl.u32 %v3495, 7
    %v3497 = vsub.s32 0, %v3496
    %v3498 = vrot.slane %v3493, %v3497
    %v3499 = vlaneseq
    %v3500 = vshrl.u32 %v3499, 7
    %v3501 = vsub.s32 1, %v3500
    %v3502 = vrot.slane %v3493, %v3501
    %v3503 = vlaneseq
    %v3504 = vshrl.u32 %v3503, 7
    %v3505 = vsub.s32 2, %v3504
    %v3506 = vrot.slane %v3493, %v3505
    %v3507 = vlaneseq
    %v3508 = vshrl.u32 %v3507, 7
    %v3509 = vsub.s32 3, %v3508
    %v3510 = vrot.slane %v3493, %v3509
    %v3515 = vadd.f32 %v3446, %v3498
    %v3516 = vadd.f32 %v3448, %v3502
    %v3517 = vadd.f32 %v3487, %v3506
    %v3518 = vadd.f32 %v3489, %v3510
    %vm3519 = vcmp.ge.f32.partialorder %v3515, 0.0
    %vm3520 = vcmp.ge.f32.partialorder %v3516, 0.0
    %vm3521 = vcmp.ge.f32.partialorder %v3517, 0.0
    %vm3522 = vcmp.ge.f32.partialorder %v3518, 0.0
    %v3523 = vmul.f32 %v3515, 0.01
    %v3524 = vmul.f32 %v3516, 0.01
    %v3525 = vmul.f32 %v3517, 0.01
    %v3526 = vmul.f32 %v3518, 0.01
    %v3527 = vsel %vm3519, %v3515, %v3523
    %v3528 = vsel %vm3520, %v3516, %v3524
    %v3529 = vsel %vm3521, %v3517, %v3525
    %v3530 = vsel %vm3522, %v3518, %v3526
    %v3531 = vpack.c.bf16 %v3527, %v3527
    %v3532 = vpack.c.bf16 %v3528, %v3528
    %v3533 = vpack.c.bf16 %v3529, %v3529
    %v3534 = vpack.c.bf16 %v3530, %v3530
    %v3535 = vld [vmem:[#allocation13] sm:$0xff]
    %v3536 = vld [vmem:[#allocation13 + $0x8] sm:$0xff]
    %v3537 = vld [vmem:[#allocation13 + $0x10] sm:$0xff]
    %v3538 = vld [vmem:[#allocation13 + $0x18] sm:$0xff]
    %v3539 = vld [vmem:[#allocation13 + $0x20] sm:$0xff]
    %v3540 = vld [vmem:[#allocation13 + $0x28] sm:$0xff]
    %v3541 = vld [vmem:[#allocation13 + $0x30] sm:$0xff]
    %v3542 = vld [vmem:[#allocation13 + $0x38] sm:$0xff]
    %v3543 = vld [vmem:[#allocation13 + $0x40] sm:$0xff]
    %v3544 = vld [vmem:[#allocation13 + $0x48] sm:$0xff]
    %v3545 = vld [vmem:[#allocation13 + $0x50] sm:$0xff]
    %v3546 = vld [vmem:[#allocation13 + $0x58] sm:$0xff]
    %v3547 = vld [vmem:[#allocation13 + $0x60] sm:$0xff]
    %v3548 = vld [vmem:[#allocation13 + $0x68] sm:$0xff]
    %v3549 = vld [vmem:[#allocation13 + $0x70] sm:$0xff]
    %v3550 = vld [vmem:[#allocation13 + $0x78] sm:$0xff]
    %v3551 = vld [vmem:[#allocation13 + $0x80] sm:$0xff]
    %v3552 = vld [vmem:[#allocation13 + $0x88] sm:$0xff]
    %v3553 = vld [vmem:[#allocation13 + $0x90] sm:$0xff]
    %v3554 = vld [vmem:[#allocation13 + $0x98] sm:$0xff]
    %v3555 = vld [vmem:[#allocation13 + $0xa0] sm:$0xff]
    %v3556 = vld [vmem:[#allocation13 + $0xa8] sm:$0xff]
    %v3557 = vld [vmem:[#allocation13 + $0xb0] sm:$0xff]
    %v3558 = vld [vmem:[#allocation13 + $0xb8] sm:$0xff]
    %v3559 = vld [vmem:[#allocation13 + $0xc0] sm:$0xff]
    %v3560 = vld [vmem:[#allocation13 + $0xc8] sm:$0xff]
    %v3561 = vld [vmem:[#allocation13 + $0xd0] sm:$0xff]
    %v3562 = vld [vmem:[#allocation13 + $0xd8] sm:$0xff]
    %v3563 = vld [vmem:[#allocation13 + $0xe0] sm:$0xff]
    %v3564 = vld [vmem:[#allocation13 + $0xe8] sm:$0xff]
    %v3565 = vld [vmem:[#allocation13 + $0xf0] sm:$0xff]
    %v3566 = vld [vmem:[#allocation13 + $0xf8] sm:$0xff]
    %v3567 = vld [vmem:[#allocation13 + $0x100] sm:$0xff]
    %v3568 = vld [vmem:[#allocation13 + $0x108] sm:$0xff]
    %v3569 = vld [vmem:[#allocation13 + $0x110] sm:$0xff]
    %v3570 = vld [vmem:[#allocation13 + $0x118] sm:$0xff]
    %v3571 = vld [vmem:[#allocation13 + $0x120] sm:$0xff]
    %v3572 = vld [vmem:[#allocation13 + $0x128] sm:$0xff]
    %v3573 = vld [vmem:[#allocation13 + $0x130] sm:$0xff]
    %v3574 = vld [vmem:[#allocation13 + $0x138] sm:$0xff]
    %v3575 = vld [vmem:[#allocation13 + $0x140] sm:$0xff]
    %v3576 = vld [vmem:[#allocation13 + $0x148] sm:$0xff]
    %v3577 = vld [vmem:[#allocation13 + $0x150] sm:$0xff]
    %v3578 = vld [vmem:[#allocation13 + $0x158] sm:$0xff]
    %v3579 = vld [vmem:[#allocation13 + $0x160] sm:$0xff]
    %v3580 = vld [vmem:[#allocation13 + $0x168] sm:$0xff]
    %v3581 = vld [vmem:[#allocation13 + $0x170] sm:$0xff]
    %v3582 = vld [vmem:[#allocation13 + $0x178] sm:$0xff]
    %v3583 = vld [vmem:[#allocation13 + $0x180] sm:$0xff]
    %v3584 = vld [vmem:[#allocation13 + $0x188] sm:$0xff]
    %v3585 = vld [vmem:[#allocation13 + $0x190] sm:$0xff]
    %v3586 = vld [vmem:[#allocation13 + $0x198] sm:$0xff]
    %v3587 = vld [vmem:[#allocation13 + $0x1a0] sm:$0xff]
    %v3588 = vld [vmem:[#allocation13 + $0x1a8] sm:$0xff]
    %v3589 = vld [vmem:[#allocation13 + $0x1b0] sm:$0xff]
    %v3590 = vld [vmem:[#allocation13 + $0x1b8] sm:$0xff]
    %v3591 = vld [vmem:[#allocation13 + $0x1c0] sm:$0xff]
    %v3592 = vld [vmem:[#allocation13 + $0x1c8] sm:$0xff]
    %v3593 = vld [vmem:[#allocation13 + $0x1d0] sm:$0xff]
    %v3594 = vld [vmem:[#allocation13 + $0x1d8] sm:$0xff]
    %v3595 = vld [vmem:[#allocation13 + $0x1e0] sm:$0xff]
    %v3596 = vld [vmem:[#allocation13 + $0x1e8] sm:$0xff]
    %v3597 = vld [vmem:[#allocation13 + $0x1f0] sm:$0xff]
    %v3598 = vld [vmem:[#allocation13 + $0x1f8] sm:$0xff]
    %v3599 = vld [vmem:[#allocation13 + $0x200] sm:$0xff]
    %v3600 = vld [vmem:[#allocation13 + $0x208] sm:$0xff]
    %v3601 = vld [vmem:[#allocation13 + $0x210] sm:$0xff]
    %v3602 = vld [vmem:[#allocation13 + $0x218] sm:$0xff]
    %v3603 = vld [vmem:[#allocation13 + $0x220] sm:$0xff]
    %v3604 = vld [vmem:[#allocation13 + $0x228] sm:$0xff]
    %v3605 = vld [vmem:[#allocation13 + $0x230] sm:$0xff]
    %v3606 = vld [vmem:[#allocation13 + $0x238] sm:$0xff]
    %v3607 = vld [vmem:[#allocation13 + $0x240] sm:$0xff]
    %v3608 = vld [vmem:[#allocation13 + $0x248] sm:$0xff]
    %v3609 = vld [vmem:[#allocation13 + $0x250] sm:$0xff]
    %v3610 = vld [vmem:[#allocation13 + $0x258] sm:$0xff]
    %v3611 = vld [vmem:[#allocation13 + $0x260] sm:$0xff]
    %v3612 = vld [vmem:[#allocation13 + $0x268] sm:$0xff]
    %v3613 = vld [vmem:[#allocation13 + $0x270] sm:$0xff]
    %v3614 = vld [vmem:[#allocation13 + $0x278] sm:$0xff]
    %v3615 = vld [vmem:[#allocation13 + $0x280] sm:$0xff]
    %v3616 = vld [vmem:[#allocation13 + $0x288] sm:$0xff]
    %v3617 = vld [vmem:[#allocation13 + $0x290] sm:$0xff]
    %v3618 = vld [vmem:[#allocation13 + $0x298] sm:$0xff]
    %v3619 = vld [vmem:[#allocation13 + $0x2a0] sm:$0xff]
    %v3620 = vld [vmem:[#allocation13 + $0x2a8] sm:$0xff]
    %v3621 = vld [vmem:[#allocation13 + $0x2b0] sm:$0xff]
    %v3622 = vld [vmem:[#allocation13 + $0x2b8] sm:$0xff]
    %v3623 = vld [vmem:[#allocation13 + $0x2c0] sm:$0xff]
    %v3624 = vld [vmem:[#allocation13 + $0x2c8] sm:$0xff]
    %v3625 = vld [vmem:[#allocation13 + $0x2d0] sm:$0xff]
    %v3626 = vld [vmem:[#allocation13 + $0x2d8] sm:$0xff]
    %v3627 = vld [vmem:[#allocation13 + $0x2e0] sm:$0xff]
    %v3628 = vld [vmem:[#allocation13 + $0x2e8] sm:$0xff]
    %v3629 = vld [vmem:[#allocation13 + $0x2f0] sm:$0xff]
    %v3630 = vld [vmem:[#allocation13 + $0x2f8] sm:$0xff]
    %v3631 = vld [vmem:[#allocation13 + $0x300] sm:$0xff]
    %v3632 = vld [vmem:[#allocation13 + $0x308] sm:$0xff]
    %v3633 = vld [vmem:[#allocation13 + $0x310] sm:$0xff]
    %v3634 = vld [vmem:[#allocation13 + $0x318] sm:$0xff]
    %v3635 = vld [vmem:[#allocation13 + $0x320] sm:$0xff]
    %v3636 = vld [vmem:[#allocation13 + $0x328] sm:$0xff]
    %v3637 = vld [vmem:[#allocation13 + $0x330] sm:$0xff]
    %v3638 = vld [vmem:[#allocation13 + $0x338] sm:$0xff]
    %v3639 = vld [vmem:[#allocation13 + $0x340] sm:$0xff]
    %v3640 = vld [vmem:[#allocation13 + $0x348] sm:$0xff]
    %v3641 = vld [vmem:[#allocation13 + $0x350] sm:$0xff]
    %v3642 = vld [vmem:[#allocation13 + $0x358] sm:$0xff]
    %v3643 = vld [vmem:[#allocation13 + $0x360] sm:$0xff]
    %v3644 = vld [vmem:[#allocation13 + $0x368] sm:$0xff]
    %v3645 = vld [vmem:[#allocation13 + $0x370] sm:$0xff]
    %v3646 = vld [vmem:[#allocation13 + $0x378] sm:$0xff]
    %v3647 = vld [vmem:[#allocation13 + $0x380] sm:$0xff]
    %v3648 = vld [vmem:[#allocation13 + $0x388] sm:$0xff]
    %v3649 = vld [vmem:[#allocation13 + $0x390] sm:$0xff]
    %v3650 = vld [vmem:[#allocation13 + $0x398] sm:$0xff]
    %v3651 = vld [vmem:[#allocation13 + $0x3a0] sm:$0xff]
    %v3652 = vld [vmem:[#allocation13 + $0x3a8] sm:$0xff]
    %v3653 = vld [vmem:[#allocation13 + $0x3b0] sm:$0xff]
    %v3654 = vld [vmem:[#allocation13 + $0x3b8] sm:$0xff]
    %v3655 = vld [vmem:[#allocation13 + $0x3c0] sm:$0xff]
    %v3656 = vld [vmem:[#allocation13 + $0x3c8] sm:$0xff]
    %v3657 = vld [vmem:[#allocation13 + $0x3d0] sm:$0xff]
    %v3658 = vld [vmem:[#allocation13 + $0x3d8] sm:$0xff]
    %v3659 = vld [vmem:[#allocation13 + $0x3e0] sm:$0xff]
    %v3660 = vld [vmem:[#allocation13 + $0x3e8] sm:$0xff]
    %v3661 = vld [vmem:[#allocation13 + $0x3f0] sm:$0xff]
    %v3662 = vld [vmem:[#allocation13 + $0x3f8] sm:$0xff]
    %v3663 = vld [vmem:[%s15] sm:$0xf]
    %v3665 = vlaneseq
    %v3666 = vshrl.u32 %v3665, 7
    %v3667 = vsub.s32 0, %v3666
    %v3668 = vrot.slane %v3663, %v3667
    %v3669 = vlaneseq
    %v3670 = vshrl.u32 %v3669, 7
    %v3671 = vsub.s32 1, %v3670
    %v3672 = vrot.slane %v3663, %v3671
    %v3673 = vlaneseq
    %v3674 = vshrl.u32 %v3673, 7
    %v3675 = vsub.s32 2, %v3674
    %v3676 = vrot.slane %v3663, %v3675
    %v3677 = vlaneseq
    %v3678 = vshrl.u32 %v3677, 7
    %v3679 = vsub.s32 3, %v3678
    %v3680 = vrot.slane %v3663, %v3679
    %v3813 = vunpack.c.l.b16 %v3535
    %v3814 = vunpack.c.h.b16 %v3535
    %v3815 = vunpack.c.l.b16 %v3536
    %v3816 = vunpack.c.h.b16 %v3536
    %v3817 = vunpack.c.l.b16 %v3537
    %v3818 = vunpack.c.h.b16 %v3537
    %v3819 = vunpack.c.l.b16 %v3538
    %v3820 = vunpack.c.h.b16 %v3538
    %v3821 = vunpack.c.l.b16 %v3539
    %v3822 = vunpack.c.h.b16 %v3539
    %v3823 = vunpack.c.l.b16 %v3540
    %v3824 = vunpack.c.h.b16 %v3540
    %v3825 = vunpack.c.l.b16 %v3541
    %v3826 = vunpack.c.h.b16 %v3541
    %v3827 = vunpack.c.l.b16 %v3542
    %v3828 = vunpack.c.h.b16 %v3542
    %v3829 = vunpack.c.l.b16 %v3543
    %v3830 = vunpack.c.h.b16 %v3543
    %v3831 = vunpack.c.l.b16 %v3544
    %v3832 = vunpack.c.h.b16 %v3544
    %v3833 = vunpack.c.l.b16 %v3545
    %v3834 = vunpack.c.h.b16 %v3545
    %v3835 = vunpack.c.l.b16 %v3546
    %v3836 = vunpack.c.h.b16 %v3546
    %v3837 = vunpack.c.l.b16 %v3547
    %v3838 = vunpack.c.h.b16 %v3547
    %v3839 = vunpack.c.l.b16 %v3548
    %v3840 = vunpack.c.h.b16 %v3548
    %v3841 = vunpack.c.l.b16 %v3549
    %v3842 = vunpack.c.h.b16 %v3549
    %v3843 = vunpack.c.l.b16 %v3550
    %v3844 = vunpack.c.h.b16 %v3550
    %v3845 = vunpack.c.l.b16 %v3551
    %v3846 = vunpack.c.h.b16 %v3551
    %v3847 = vunpack.c.l.b16 %v3552
    %v3848 = vunpack.c.h.b16 %v3552
    %v3849 = vunpack.c.l.b16 %v3553
    %v3850 = vunpack.c.h.b16 %v3553
    %v3851 = vunpack.c.l.b16 %v3554
    %v3852 = vunpack.c.h.b16 %v3554
    %v3853 = vunpack.c.l.b16 %v3555
    %v3854 = vunpack.c.h.b16 %v3555
    %v3855 = vunpack.c.l.b16 %v3556
    %v3856 = vunpack.c.h.b16 %v3556
    %v3857 = vunpack.c.l.b16 %v3557
    %v3858 = vunpack.c.h.b16 %v3557
    %v3859 = vunpack.c.l.b16 %v3558
    %v3860 = vunpack.c.h.b16 %v3558
    %v3861 = vunpack.c.l.b16 %v3559
    %v3862 = vunpack.c.h.b16 %v3559
    %v3863 = vunpack.c.l.b16 %v3560
    %v3864 = vunpack.c.h.b16 %v3560
    %v3865 = vunpack.c.l.b16 %v3561
    %v3866 = vunpack.c.h.b16 %v3561
    %v3867 = vunpack.c.l.b16 %v3562
    %v3868 = vunpack.c.h.b16 %v3562
    %v3869 = vunpack.c.l.b16 %v3563
    %v3870 = vunpack.c.h.b16 %v3563
    %v3871 = vunpack.c.l.b16 %v3564
    %v3872 = vunpack.c.h.b16 %v3564
    %v3873 = vunpack.c.l.b16 %v3565
    %v3874 = vunpack.c.h.b16 %v3565
    %v3875 = vunpack.c.l.b16 %v3566
    %v3876 = vunpack.c.h.b16 %v3566
    %v3877 = vunpack.c.l.b16 %v3567
    %v3878 = vunpack.c.h.b16 %v3567
    %v3879 = vunpack.c.l.b16 %v3568
    %v3880 = vunpack.c.h.b16 %v3568
    %v3881 = vunpack.c.l.b16 %v3569
    %v3882 = vunpack.c.h.b16 %v3569
    %v3883 = vunpack.c.l.b16 %v3570
    %v3884 = vunpack.c.h.b16 %v3570
    %v3885 = vunpack.c.l.b16 %v3571
    %v3886 = vunpack.c.h.b16 %v3571
    %v3887 = vunpack.c.l.b16 %v3572
    %v3888 = vunpack.c.h.b16 %v3572
    %v3889 = vunpack.c.l.b16 %v3573
    %v3890 = vunpack.c.h.b16 %v3573
    %v3891 = vunpack.c.l.b16 %v3574
    %v3892 = vunpack.c.h.b16 %v3574
    %v3893 = vunpack.c.l.b16 %v3575
    %v3894 = vunpack.c.h.b16 %v3575
    %v3895 = vunpack.c.l.b16 %v3576
    %v3896 = vunpack.c.h.b16 %v3576
    %v3897 = vunpack.c.l.b16 %v3577
    %v3898 = vunpack.c.h.b16 %v3577
    %v3899 = vunpack.c.l.b16 %v3578
    %v3900 = vunpack.c.h.b16 %v3578
    %v3901 = vunpack.c.l.b16 %v3579
    %v3902 = vunpack.c.h.b16 %v3579
    %v3903 = vunpack.c.l.b16 %v3580
    %v3904 = vunpack.c.h.b16 %v3580
    %v3905 = vunpack.c.l.b16 %v3581
    %v3906 = vunpack.c.h.b16 %v3581
    %v3907 = vunpack.c.l.b16 %v3582
    %v3908 = vunpack.c.h.b16 %v3582
    %v3909 = vunpack.c.l.b16 %v3583
    %v3910 = vunpack.c.h.b16 %v3583
    %v3911 = vunpack.c.l.b16 %v3584
    %v3912 = vunpack.c.h.b16 %v3584
    %v3913 = vunpack.c.l.b16 %v3585
    %v3914 = vunpack.c.h.b16 %v3585
    %v3915 = vunpack.c.l.b16 %v3586
    %v3916 = vunpack.c.h.b16 %v3586
    %v3917 = vunpack.c.l.b16 %v3587
    %v3918 = vunpack.c.h.b16 %v3587
    %v3919 = vunpack.c.l.b16 %v3588
    %v3920 = vunpack.c.h.b16 %v3588
    %v3921 = vunpack.c.l.b16 %v3589
    %v3922 = vunpack.c.h.b16 %v3589
    %v3923 = vunpack.c.l.b16 %v3590
    %v3924 = vunpack.c.h.b16 %v3590
    %v3925 = vunpack.c.l.b16 %v3591
    %v3926 = vunpack.c.h.b16 %v3591
    %v3927 = vunpack.c.l.b16 %v3592
    %v3928 = vunpack.c.h.b16 %v3592
    %v3929 = vunpack.c.l.b16 %v3593
    %v3930 = vunpack.c.h.b16 %v3593
    %v3931 = vunpack.c.l.b16 %v3594
    %v3932 = vunpack.c.h.b16 %v3594
    %v3933 = vunpack.c.l.b16 %v3595
    %v3934 = vunpack.c.h.b16 %v3595
    %v3935 = vunpack.c.l.b16 %v3596
    %v3936 = vunpack.c.h.b16 %v3596
    %v3937 = vunpack.c.l.b16 %v3597
    %v3938 = vunpack.c.h.b16 %v3597
    %v3939 = vunpack.c.l.b16 %v3598
    %v3940 = vunpack.c.h.b16 %v3598
    %v3941 = vunpack.c.l.b16 %v3599
    %v3942 = vunpack.c.h.b16 %v3599
    %v3943 = vunpack.c.l.b16 %v3600
    %v3944 = vunpack.c.h.b16 %v3600
    %v3945 = vunpack.c.l.b16 %v3601
    %v3946 = vunpack.c.h.b16 %v3601
    %v3947 = vunpack.c.l.b16 %v3602
    %v3948 = vunpack.c.h.b16 %v3602
    %v3949 = vunpack.c.l.b16 %v3603
    %v3950 = vunpack.c.h.b16 %v3603
    %v3951 = vunpack.c.l.b16 %v3604
    %v3952 = vunpack.c.h.b16 %v3604
    %v3953 = vunpack.c.l.b16 %v3605
    %v3954 = vunpack.c.h.b16 %v3605
    %v3955 = vunpack.c.l.b16 %v3606
    %v3956 = vunpack.c.h.b16 %v3606
    %v3957 = vunpack.c.l.b16 %v3607
    %v3958 = vunpack.c.h.b16 %v3607
    %v3959 = vunpack.c.l.b16 %v3608
    %v3960 = vunpack.c.h.b16 %v3608
    %v3961 = vunpack.c.l.b16 %v3609
    %v3962 = vunpack.c.h.b16 %v3609
    %v3963 = vunpack.c.l.b16 %v3610
    %v3964 = vunpack.c.h.b16 %v3610
    %v3965 = vunpack.c.l.b16 %v3611
    %v3966 = vunpack.c.h.b16 %v3611
    %v3967 = vunpack.c.l.b16 %v3612
    %v3968 = vunpack.c.h.b16 %v3612
    %v3969 = vunpack.c.l.b16 %v3613
    %v3970 = vunpack.c.h.b16 %v3613
    %v3971 = vunpack.c.l.b16 %v3614
    %v3972 = vunpack.c.h.b16 %v3614
    %v3973 = vunpack.c.l.b16 %v3615
    %v3974 = vunpack.c.h.b16 %v3615
    %v3975 = vunpack.c.l.b16 %v3616
    %v3976 = vunpack.c.h.b16 %v3616
    %v3977 = vunpack.c.l.b16 %v3617
    %v3978 = vunpack.c.h.b16 %v3617
    %v3979 = vunpack.c.l.b16 %v3618
    %v3980 = vunpack.c.h.b16 %v3618
    %v3981 = vunpack.c.l.b16 %v3619
    %v3982 = vunpack.c.h.b16 %v3619
    %v3983 = vunpack.c.l.b16 %v3620
    %v3984 = vunpack.c.h.b16 %v3620
    %v3985 = vunpack.c.l.b16 %v3621
    %v3986 = vunpack.c.h.b16 %v3621
    %v3987 = vunpack.c.l.b16 %v3622
    %v3988 = vunpack.c.h.b16 %v3622
    %v3989 = vunpack.c.l.b16 %v3623
    %v3990 = vunpack.c.h.b16 %v3623
    %v3991 = vunpack.c.l.b16 %v3624
    %v3992 = vunpack.c.h.b16 %v3624
    %v3993 = vunpack.c.l.b16 %v3625
    %v3994 = vunpack.c.h.b16 %v3625
    %v3995 = vunpack.c.l.b16 %v3626
    %v3996 = vunpack.c.h.b16 %v3626
    %v3997 = vunpack.c.l.b16 %v3627
    %v3998 = vunpack.c.h.b16 %v3627
    %v3999 = vunpack.c.l.b16 %v3628
    %v4000 = vunpack.c.h.b16 %v3628
    %v4001 = vunpack.c.l.b16 %v3629
    %v4002 = vunpack.c.h.b16 %v3629
    %v4003 = vunpack.c.l.b16 %v3630
    %v4004 = vunpack.c.h.b16 %v3630
    %v4005 = vunpack.c.l.b16 %v3631
    %v4006 = vunpack.c.h.b16 %v3631
    %v4007 = vunpack.c.l.b16 %v3632
    %v4008 = vunpack.c.h.b16 %v3632
    %v4009 = vunpack.c.l.b16 %v3633
    %v4010 = vunpack.c.h.b16 %v3633
    %v4011 = vunpack.c.l.b16 %v3634
    %v4012 = vunpack.c.h.b16 %v3634
    %v4013 = vunpack.c.l.b16 %v3635
    %v4014 = vunpack.c.h.b16 %v3635
    %v4015 = vunpack.c.l.b16 %v3636
    %v4016 = vunpack.c.h.b16 %v3636
    %v4017 = vunpack.c.l.b16 %v3637
    %v4018 = vunpack.c.h.b16 %v3637
    %v4019 = vunpack.c.l.b16 %v3638
    %v4020 = vunpack.c.h.b16 %v3638
    %v4021 = vunpack.c.l.b16 %v3639
    %v4022 = vunpack.c.h.b16 %v3639
    %v4023 = vunpack.c.l.b16 %v3640
    %v4024 = vunpack.c.h.b16 %v3640
    %v4025 = vunpack.c.l.b16 %v3641
    %v4026 = vunpack.c.h.b16 %v3641
    %v4027 = vunpack.c.l.b16 %v3642
    %v4028 = vunpack.c.h.b16 %v3642
    %v4029 = vunpack.c.l.b16 %v3643
    %v4030 = vunpack.c.h.b16 %v3643
    %v4031 = vunpack.c.l.b16 %v3644
    %v4032 = vunpack.c.h.b16 %v3644
    %v4033 = vunpack.c.l.b16 %v3645
    %v4034 = vunpack.c.h.b16 %v3645
    %v4035 = vunpack.c.l.b16 %v3646
    %v4036 = vunpack.c.h.b16 %v3646
    %v4037 = vunpack.c.l.b16 %v3647
    %v4038 = vunpack.c.h.b16 %v3647
    %v4039 = vunpack.c.l.b16 %v3648
    %v4040 = vunpack.c.h.b16 %v3648
    %v4041 = vunpack.c.l.b16 %v3649
    %v4042 = vunpack.c.h.b16 %v3649
    %v4043 = vunpack.c.l.b16 %v3650
    %v4044 = vunpack.c.h.b16 %v3650
    %v4045 = vunpack.c.l.b16 %v3651
    %v4046 = vunpack.c.h.b16 %v3651
    %v4047 = vunpack.c.l.b16 %v3652
    %v4048 = vunpack.c.h.b16 %v3652
    %v4049 = vunpack.c.l.b16 %v3653
    %v4050 = vunpack.c.h.b16 %v3653
    %v4051 = vunpack.c.l.b16 %v3654
    %v4052 = vunpack.c.h.b16 %v3654
    %v4053 = vunpack.c.l.b16 %v3655
    %v4054 = vunpack.c.h.b16 %v3655
    %v4055 = vunpack.c.l.b16 %v3656
    %v4056 = vunpack.c.h.b16 %v3656
    %v4057 = vunpack.c.l.b16 %v3657
    %v4058 = vunpack.c.h.b16 %v3657
    %v4059 = vunpack.c.l.b16 %v3658
    %v4060 = vunpack.c.h.b16 %v3658
    %v4061 = vunpack.c.l.b16 %v3659
    %v4062 = vunpack.c.h.b16 %v3659
    %v4063 = vunpack.c.l.b16 %v3660
    %v4064 = vunpack.c.h.b16 %v3660
    %v4065 = vunpack.c.l.b16 %v3661
    %v4066 = vunpack.c.h.b16 %v3661
    %v4067 = vunpack.c.l.b16 %v3662
    %v4068 = vunpack.c.h.b16 %v3662
    %v4069 = vpack.c.b16 %v3817, %v3813
    %v4070 = vpack.c.b16 %v3818, %v3814
    %v4071 = vpack.c.b16 %v3819, %v3815
    %v4072 = vpack.c.b16 %v3820, %v3816
    %v4073 = vpack.c.b16 %v3825, %v3821
    %v4074 = vpack.c.b16 %v3826, %v3822
    %v4075 = vpack.c.b16 %v3827, %v3823
    %v4076 = vpack.c.b16 %v3828, %v3824
    %v4077 = vpack.c.b16 %v3833, %v3829
    %v4078 = vpack.c.b16 %v3834, %v3830
    %v4079 = vpack.c.b16 %v3835, %v3831
    %v4080 = vpack.c.b16 %v3836, %v3832
    %v4081 = vpack.c.b16 %v3841, %v3837
    %v4082 = vpack.c.b16 %v3842, %v3838
    %v4083 = vpack.c.b16 %v3843, %v3839
    %v4084 = vpack.c.b16 %v3844, %v3840
    %v4085 = vpack.c.b16 %v3849, %v3845
    %v4086 = vpack.c.b16 %v3850, %v3846
    %v4087 = vpack.c.b16 %v3851, %v3847
    %v4088 = vpack.c.b16 %v3852, %v3848
    %v4089 = vpack.c.b16 %v3857, %v3853
    %v4090 = vpack.c.b16 %v3858, %v3854
    %v4091 = vpack.c.b16 %v3859, %v3855
    %v4092 = vpack.c.b16 %v3860, %v3856
    %v4093 = vpack.c.b16 %v3865, %v3861
    %v4094 = vpack.c.b16 %v3866, %v3862
    %v4095 = vpack.c.b16 %v3867, %v3863
    %v4096 = vpack.c.b16 %v3868, %v3864
    %v4097 = vpack.c.b16 %v3873, %v3869
    %v4098 = vpack.c.b16 %v3874, %v3870
    %v4099 = vpack.c.b16 %v3875, %v3871
    %v4100 = vpack.c.b16 %v3876, %v3872
    %v4101 = vpack.c.b16 %v3881, %v3877
    %v4102 = vpack.c.b16 %v3882, %v3878
    %v4103 = vpack.c.b16 %v3883, %v3879
    %v4104 = vpack.c.b16 %v3884, %v3880
    %v4105 = vpack.c.b16 %v3889, %v3885
    %v4106 = vpack.c.b16 %v3890, %v3886
    %v4107 = vpack.c.b16 %v3891, %v3887
    %v4108 = vpack.c.b16 %v3892, %v3888
    %v4109 = vpack.c.b16 %v3897, %v3893
    %v4110 = vpack.c.b16 %v3898, %v3894
    %v4111 = vpack.c.b16 %v3899, %v3895
    %v4112 = vpack.c.b16 %v3900, %v3896
    %v4113 = vpack.c.b16 %v3905, %v3901
    %v4114 = vpack.c.b16 %v3906, %v3902
    %v4115 = vpack.c.b16 %v3907, %v3903
    %v4116 = vpack.c.b16 %v3908, %v3904
    %v4117 = vpack.c.b16 %v3913, %v3909
    %v4118 = vpack.c.b16 %v3914, %v3910
    %v4119 = vpack.c.b16 %v3915, %v3911
    %v4120 = vpack.c.b16 %v3916, %v3912
    %v4121 = vpack.c.b16 %v3921, %v3917
    %v4122 = vpack.c.b16 %v3922, %v3918
    %v4123 = vpack.c.b16 %v3923, %v3919
    %v4124 = vpack.c.b16 %v3924, %v3920
    %v4125 = vpack.c.b16 %v3929, %v3925
    %v4126 = vpack.c.b16 %v3930, %v3926
    %v4127 = vpack.c.b16 %v3931, %v3927
    %v4128 = vpack.c.b16 %v3932, %v3928
    %v4129 = vpack.c.b16 %v3937, %v3933
    %v4130 = vpack.c.b16 %v3938, %v3934
    %v4131 = vpack.c.b16 %v3939, %v3935
    %v4132 = vpack.c.b16 %v3940, %v3936
    %v4133 = vpack.c.b16 %v3945, %v3941
    %v4134 = vpack.c.b16 %v3946, %v3942
    %v4135 = vpack.c.b16 %v3947, %v3943
    %v4136 = vpack.c.b16 %v3948, %v3944
    %v4137 = vpack.c.b16 %v3953, %v3949
    %v4138 = vpack.c.b16 %v3954, %v3950
    %v4139 = vpack.c.b16 %v3955, %v3951
    %v4140 = vpack.c.b16 %v3956, %v3952
    %v4141 = vpack.c.b16 %v3961, %v3957
    %v4142 = vpack.c.b16 %v3962, %v3958
    %v4143 = vpack.c.b16 %v3963, %v3959
    %v4144 = vpack.c.b16 %v3964, %v3960
    %v4145 = vpack.c.b16 %v3969, %v3965
    %v4146 = vpack.c.b16 %v3970, %v3966
    %v4147 = vpack.c.b16 %v3971, %v3967
    %v4148 = vpack.c.b16 %v3972, %v3968
    %v4149 = vpack.c.b16 %v3977, %v3973
    %v4150 = vpack.c.b16 %v3978, %v3974
    %v4151 = vpack.c.b16 %v3979, %v3975
    %v4152 = vpack.c.b16 %v3980, %v3976
    %v4153 = vpack.c.b16 %v3985, %v3981
    %v4154 = vpack.c.b16 %v3986, %v3982
    %v4155 = vpack.c.b16 %v3987, %v3983
    %v4156 = vpack.c.b16 %v3988, %v3984
    %v4157 = vpack.c.b16 %v3993, %v3989
    %v4158 = vpack.c.b16 %v3994, %v3990
    %v4159 = vpack.c.b16 %v3995, %v3991
    %v4160 = vpack.c.b16 %v3996, %v3992
    %v4161 = vpack.c.b16 %v4001, %v3997
    %v4162 = vpack.c.b16 %v4002, %v3998
    %v4163 = vpack.c.b16 %v4003, %v3999
    %v4164 = vpack.c.b16 %v4004, %v4000
    %v4165 = vpack.c.b16 %v4009, %v4005
    %v4166 = vpack.c.b16 %v4010, %v4006
    %v4167 = vpack.c.b16 %v4011, %v4007
    %v4168 = vpack.c.b16 %v4012, %v4008
    %v4169 = vpack.c.b16 %v4017, %v4013
    %v4170 = vpack.c.b16 %v4018, %v4014
    %v4171 = vpack.c.b16 %v4019, %v4015
    %v4172 = vpack.c.b16 %v4020, %v4016
    %v4173 = vpack.c.b16 %v4025, %v4021
    %v4174 = vpack.c.b16 %v4026, %v4022
    %v4175 = vpack.c.b16 %v4027, %v4023
    %v4176 = vpack.c.b16 %v4028, %v4024
    %v4177 = vpack.c.b16 %v4033, %v4029
    %v4178 = vpack.c.b16 %v4034, %v4030
    %v4179 = vpack.c.b16 %v4035, %v4031
    %v4180 = vpack.c.b16 %v4036, %v4032
    %v4181 = vpack.c.b16 %v4041, %v4037
    %v4182 = vpack.c.b16 %v4042, %v4038
    %v4183 = vpack.c.b16 %v4043, %v4039
    %v4184 = vpack.c.b16 %v4044, %v4040
    %v4185 = vpack.c.b16 %v4049, %v4045
    %v4186 = vpack.c.b16 %v4050, %v4046
    %v4187 = vpack.c.b16 %v4051, %v4047
    %v4188 = vpack.c.b16 %v4052, %v4048
    %v4189 = vpack.c.b16 %v4057, %v4053
    %v4190 = vpack.c.b16 %v4058, %v4054
    %v4191 = vpack.c.b16 %v4059, %v4055
    %v4192 = vpack.c.b16 %v4060, %v4056
    %v4193 = vpack.c.b16 %v4065, %v4061
    %v4194 = vpack.c.b16 %v4066, %v4062
    %v4195 = vpack.c.b16 %v4067, %v4063
    %v4196 = vpack.c.b16 %v4068, %v4064
    %4325 = vmatprep.subr.bf16.mxu0 %v4070
    %4326 = vmatpush1.bf16.msra.mxu0 %v4069
    %4327 = vmatprep.subr.bf16.mxu0 %v4074
    %4328 = vmatpush1.bf16.msra.mxu0 %v4073
    %4329 = vmatprep.subr.bf16.mxu0 %v4078
    %4330 = vmatpush1.bf16.msra.mxu0 %v4077
    %4331 = vmatprep.subr.bf16.mxu0 %v4082
    %4332 = vmatpush1.bf16.msra.mxu0 %v4081
    %4333 = vmatprep.subr.bf16.mxu0 %v4086
    %4334 = vmatpush1.bf16.msra.mxu0 %v4085
    %4335 = vmatprep.subr.bf16.mxu0 %v4090
    %4336 = vmatpush1.bf16.msra.mxu0 %v4089
    %4337 = vmatprep.subr.bf16.mxu0 %v4094
    %4338 = vmatpush1.bf16.msra.mxu0 %v4093
    %4339 = vmatprep.subr.bf16.mxu0 %v4098
    %4340 = vmatpush1.bf16.msra.mxu0 %v4097
    %4341 = vmatprep.subr.bf16.mxu0 %v4102
    %4342 = vmatpush1.bf16.msra.mxu0 %v4101
    %4343 = vmatprep.subr.bf16.mxu0 %v4106
    %4344 = vmatpush1.bf16.msra.mxu0 %v4105
    %4345 = vmatprep.subr.bf16.mxu0 %v4110
    %4346 = vmatpush1.bf16.msra.mxu0 %v4109
    %4347 = vmatprep.subr.bf16.mxu0 %v4114
    %4348 = vmatpush1.bf16.msra.mxu0 %v4113
    %4349 = vmatprep.subr.bf16.mxu0 %v4118
    %4350 = vmatpush1.bf16.msra.mxu0 %v4117
    %4351 = vmatprep.subr.bf16.mxu0 %v4122
    %4352 = vmatpush1.bf16.msra.mxu0 %v4121
    %4353 = vmatprep.subr.bf16.mxu0 %v4126
    %4354 = vmatpush1.bf16.msra.mxu0 %v4125
    %4355 = vmatprep.subr.bf16.mxu0 %v4130
    %4356 = vmatpush1.bf16.msra.mxu0 %v4129
    %4357 = vmatprep.mubr.bf16.mxu0 %v3532
    %4358 = vmatmul.mubr.bf16.gmra.mrb[0].mxu0 %v3531
    %v4359 = vpop.f32.mrb[0].mxu0
    %v4360 = vadd.f32 %v3668, %v4359
    %v4361 = vpop.f32.mrb[0].mxu0
    %v4362 = vadd.f32 %v3672, %v4361
    %v4363 = vpop.f32.mrb[0].mxu0
    %v4364 = vpop.f32.mrb[0].mxu0
    %4365 = vdwg.mxu0
    %4366 = vmatprep.subr.bf16.mxu0 %v4134
    %4367 = vmatpush1.bf16.msra.mxu0 %v4133
    %4368 = vmatprep.subr.bf16.mxu0 %v4138
    %4369 = vmatpush1.bf16.msra.mxu0 %v4137
    %4370 = vmatprep.subr.bf16.mxu0 %v4142
    %4371 = vmatpush1.bf16.msra.mxu0 %v4141
    %4372 = vmatprep.subr.bf16.mxu0 %v4146
    %4373 = vmatpush1.bf16.msra.mxu0 %v4145
    %4374 = vmatprep.subr.bf16.mxu0 %v4150
    %4375 = vmatpush1.bf16.msra.mxu0 %v4149
    %4376 = vmatprep.subr.bf16.mxu0 %v4154
    %4377 = vmatpush1.bf16.msra.mxu0 %v4153
    %4378 = vmatprep.subr.bf16.mxu0 %v4158
    %4379 = vmatpush1.bf16.msra.mxu0 %v4157
    %4380 = vmatprep.subr.bf16.mxu0 %v4162
    %4381 = vmatpush1.bf16.msra.mxu0 %v4161
    %4382 = vmatprep.subr.bf16.mxu0 %v4166
    %4383 = vmatpush1.bf16.msra.mxu0 %v4165
    %4384 = vmatprep.subr.bf16.mxu0 %v4170
    %4385 = vmatpush1.bf16.msra.mxu0 %v4169
    %4386 = vmatprep.subr.bf16.mxu0 %v4174
    %4387 = vmatpush1.bf16.msra.mxu0 %v4173
    %4388 = vmatprep.subr.bf16.mxu0 %v4178
    %4389 = vmatpush1.bf16.msra.mxu0 %v4177
    %4390 = vmatprep.subr.bf16.mxu0 %v4182
    %4391 = vmatpush1.bf16.msra.mxu0 %v4181
    %4392 = vmatprep.subr.bf16.mxu0 %v4186
    %4393 = vmatpush1.bf16.msra.mxu0 %v4185
    %4394 = vmatprep.subr.bf16.mxu0 %v4190
    %4395 = vmatpush1.bf16.msra.mxu0 %v4189
    %4396 = vmatprep.subr.bf16.mxu0 %v4194
    %4397 = vmatpush1.bf16.msra.mxu0 %v4193
    %4398 = vmatprep.mubr.bf16.mxu0 %v3534
    %4399 = vmatmul.mubr.bf16.gmra.mrb[0].mxu0 %v3533
    %v4400 = vpop.f32.mrb[0].mxu0
    %v4401 = vadd.f32 %v4360, %v4400
    %v4402 = vpop.f32.mrb[0].mxu0
    %v4403 = vadd.f32 %v4362, %v4402
    %v4404 = vpop.f32.mrb[0].mxu0
    %v4405 = vpop.f32.mrb[0].mxu0
    %4406 = vdwg.mxu0
    %4407 = vmatprep.subr.bf16.mxu0 %v4072
    %4408 = vmatpush1.bf16.msra.mxu0 %v4071
    %4409 = vmatprep.subr.bf16.mxu0 %v4076
    %4410 = vmatpush1.bf16.msra.mxu0 %v4075
    %4411 = vmatprep.subr.bf16.mxu0 %v4080
    %4412 = vmatpush1.bf16.msra.mxu0 %v4079
    %4413 = vmatprep.subr.bf16.mxu0 %v4084
    %4414 = vmatpush1.bf16.msra.mxu0 %v4083
    %4415 = vmatprep.subr.bf16.mxu0 %v4088
    %4416 = vmatpush1.bf16.msra.mxu0 %v4087
    %4417 = vmatprep.subr.bf16.mxu0 %v4092
    %4418 = vmatpush1.bf16.msra.mxu0 %v4091
    %4419 = vmatprep.subr.bf16.mxu0 %v4096
    %4420 = vmatpush1.bf16.msra.mxu0 %v4095
    %4421 = vmatprep.subr.bf16.mxu0 %v4100
    %4422 = vmatpush1.bf16.msra.mxu0 %v4099
    %4423 = vmatprep.subr.bf16.mxu0 %v4104
    %4424 = vmatpush1.bf16.msra.mxu0 %v4103
    %4425 = vmatprep.subr.bf16.mxu0 %v4108
    %4426 = vmatpush1.bf16.msra.mxu0 %v4107
    %4427 = vmatprep.subr.bf16.mxu0 %v4112
    %4428 = vmatpush1.bf16.msra.mxu0 %v4111
    %4429 = vmatprep.subr.bf16.mxu0 %v4116
    %4430 = vmatpush1.bf16.msra.mxu0 %v4115
    %4431 = vmatprep.subr.bf16.mxu0 %v4120
    %4432 = vmatpush1.bf16.msra.mxu0 %v4119
    %4433 = vmatprep.subr.bf16.mxu0 %v4124
    %4434 = vmatpush1.bf16.msra.mxu0 %v4123
    %4435 = vmatprep.subr.bf16.mxu0 %v4128
    %4436 = vmatpush1.bf16.msra.mxu0 %v4127
    %4437 = vmatprep.subr.bf16.mxu0 %v4132
    %4438 = vmatpush1.bf16.msra.mxu0 %v4131
    %4439 = vmatprep.mubr.bf16.mxu0 %v3532
    %4440 = vmatmul.mubr.bf16.gmra.mrb[0].mxu0 %v3531
    %v4441 = vpop.f32.mrb[0].mxu0
    %v4442 = vadd.f32 %v3676, %v4441
    %v4443 = vpop.f32.mrb[0].mxu0
    %v4444 = vadd.f32 %v3680, %v4443
    %v4445 = vpop.f32.mrb[0].mxu0
    %v4446 = vpop.f32.mrb[0].mxu0
    %4447 = vdwg.mxu0
    %4448 = vmatprep.subr.bf16.mxu0 %v4136
    %4449 = vmatpush1.bf16.msra.mxu0 %v4135
    %4450 = vmatprep.subr.bf16.mxu0 %v4140
    %4451 = vmatpush1.bf16.msra.mxu0 %v4139
    %4452 = vmatprep.subr.bf16.mxu0 %v4144
    %4453 = vmatpush1.bf16.msra.mxu0 %v4143
    %4454 = vmatprep.subr.bf16.mxu0 %v4148
    %4455 = vmatpush1.bf16.msra.mxu0 %v4147
    %4456 = vmatprep.subr.bf16.mxu0 %v4152
    %4457 = vmatpush1.bf16.msra.mxu0 %v4151
    %4458 = vmatprep.subr.bf16.mxu0 %v4156
    %4459 = vmatpush1.bf16.msra.mxu0 %v4155
    %4460 = vmatprep.subr.bf16.mxu0 %v4160
    %4461 = vmatpush1.bf16.msra.mxu0 %v4159
    %4462 = vmatprep.subr.bf16.mxu0 %v4164
    %4463 = vmatpush1.bf16.msra.mxu0 %v4163
    %4464 = vmatprep.subr.bf16.mxu0 %v4168
    %4465 = vmatpush1.bf16.msra.mxu0 %v4167
    %4466 = vmatprep.subr.bf16.mxu0 %v4172
    %4467 = vmatpush1.bf16.msra.mxu0 %v4171
    %4468 = vmatprep.subr.bf16.mxu0 %v4176
    %4469 = vmatpush1.bf16.msra.mxu0 %v4175
    %4470 = vmatprep.subr.bf16.mxu0 %v4180
    %4471 = vmatpush1.bf16.msra.mxu0 %v4179
    %4472 = vmatprep.subr.bf16.mxu0 %v4184
    %4473 = vmatpush1.bf16.msra.mxu0 %v4183
    %4474 = vmatprep.subr.bf16.mxu0 %v4188
    %4475 = vmatpush1.bf16.msra.mxu0 %v4187
    %4476 = vmatprep.subr.bf16.mxu0 %v4192
    %4477 = vmatpush1.bf16.msra.mxu0 %v4191
    %4478 = vmatprep.subr.bf16.mxu0 %v4196
    %4479 = vmatpush1.bf16.msra.mxu0 %v4195
    %4480 = vmatprep.mubr.bf16.mxu0 %v3534
    %4481 = vmatmul.mubr.bf16.gmra.mrb[0].mxu0 %v3533
    %v4482 = vpop.f32.mrb[0].mxu0
    %v4483 = vadd.f32 %v4442, %v4482
    %v4484 = vpop.f32.mrb[0].mxu0
    %v4485 = vadd.f32 %v4444, %v4484
    %v4486 = vpop.f32.mrb[0].mxu0
    %v4487 = vpop.f32.mrb[0].mxu0
    %4488 = vdwg.mxu0
    %v4489 = vmax.f32 %v4401, 0.0
    %v4490 = vmax.f32 %v4403, 0.0
    %v4491 = vmax.f32 %v4483, 0.0
    %v4492 = vmax.f32 %v4485, 0.0
    %4493 = vst [vmem:[#allocation14] sm:$0xff] %v4489
    %4494 = vst [vmem:[#allocation14 + $0x8] sm:$0xff] %v4490
    %4495 = vst [vmem:[#allocation14 + $0x10] sm:$0xff] %v4491
    %4496 = vst [vmem:[#allocation14 + $0x18] sm:$0xff] %v4492
    // Predicated region
    $region94: #{generator_forward.1} parent=1 // pred_check
      _
    $region95: #{generator_forward.1} parent=1 // pred_check_branch
      %4498 = sbr.rel (0) target = $region97
    $region96: #{generator_forward.1} parent=1 // pred_region
      %s4500 = ssub.s32 512, 512
      %4501 = vsyncadd [#allocation4], %s4500
      %s4503 = sshll.u32 [#allocation14], 4
      %s4504 = int_to_ptr.vmem [resolvable:$true] %s4503
      %4506 = dma.vmem_to_hbm [thread:$0]  %s4504, 512, %s16, [#allocation4]
    $region97: #{generator_forward.1} parent=1 // pred_fallthru
      _
    // Predicated region
    $region98: #{generator_forward.1} parent=1 // pred_check
      _
    $region99: #{generator_forward.1} parent=1 // pred_check_branch
      %4508 = sbr.rel (0) target = $region101
    $region100: #{generator_forward.1} parent=1 // pred_region
      %s4510 = ssub.s32 128, 128
      %4511 = vsyncadd [#allocation16], %s4510
      %s4513 = sshll.u32 [#allocation15], 4
      %s4514 = int_to_ptr.vmem [resolvable:$true] %s4513
      %4516 = dma.vmem_to_hbm [thread:$0]  %s4514, 128, %s17, [#allocation16]
    $region101: #{generator_forward.1} parent=1 // pred_fallthru
      _
    // Predicated region
    $region102: #{generator_forward.1} parent=1 // pred_check
      _
    $region103: #{generator_forward.1} parent=1 // pred_check_branch
      %4518 = sbr.rel (0) target = $region105
    $region104: #{generator_forward.1} parent=1 // pred_region
      %s4520 = ssub.s32 128, 128
      %4521 = vsyncadd [#allocation16], %s4520
      %s4523 = sshll.u32 [#allocation17], 4
      %s4524 = int_to_ptr.vmem [resolvable:$true] %s4523
      %4526 = dma.vmem_to_hbm [thread:$0]  %s4524, 128, %s18, [#allocation16]
    $region105: #{generator_forward.1} parent=1 // pred_fallthru
      _
    // Predicated region
    $region106: #{generator_forward.1} parent=1 // pred_check
      _
    $region107: #{generator_forward.1} parent=1 // pred_check_branch
      %4528 = sbr.rel (0) target = $region109
    $region108: #{generator_forward.1} parent=1 // pred_region
      %4529 = dma.done [#allocation4], 512
    $region109: #{generator_forward.1} parent=1 // pred_fallthru
      _
    // Predicated region
    $region110: #{generator_forward.1} parent=1 // pred_check
      _
    $region111: #{generator_forward.1} parent=1 // pred_check_branch
      %4531 = sbr.rel (0) target = $region113
    $region112: #{generator_forward.1} parent=1 // pred_region
      %4532 = dma.done [#allocation16], 128
    $region113: #{generator_forward.1} parent=1 // pred_fallthru
      _
    // Predicated region
    $region114: #{generator_forward.1} parent=1 // pred_check
      _
    $region115: #{generator_forward.1} parent=1 // pred_check_branch
      %4534 = sbr.rel (0) target = $region117
    $region116: #{generator_forward.1} parent=1 // pred_region
      %4535 = dma.done [#allocation16], 128
    $region117: #{generator_forward.1} parent=1 // pred_fallthru
      _
    %4536 = vsyncpa [#allocation3], 1
    %4537 = vsyncpa [#allocation6], 1
    %4538 = vsyncpa [#allocation9], 1
    %4539 = vsyncpa [#allocation12], 1
    %4540 = vsyncpa [#allocation4], 1
    %4541 = vsyncpa [#allocation16], 1

</llo_original>
